<compile_context>
chip_gen: v7x
topology: tpu7x:2x2x1
jax: 0.10.0
libtpu: 0.0.40
codegen_flags: <defaults>
</compile_context>

<pallas_src>
import math
import numpy as np
import jax
import jax.numpy as jnp
from jax import lax
from jax.experimental import pallas as pl
from jax.experimental.pallas import tpu as pltpu

# ---------------- static configuration (small synthetic sizes) ----------------
D_MODEL  = 32            # d_model
D_FFN    = 64            # d_ffn
N_HEADS  = 8             # n_heads
N_LEVELS = 4             # n_levels
N_POINTS = 4             # n_points
HEAD_DIM = D_MODEL // N_HEADS                     # 4
LP       = N_LEVELS * N_POINTS                    # 16 (level, point) per head
HLP      = N_HEADS * LP                           # 128 deformable columns
SPATIAL_SHAPES = ((8, 8), (4, 4), (2, 2), (1, 1)) # (H_l, W_l) per level
S_TOTAL  = sum(h * w for h, w in SPATIAL_SHAPES)  # 85 flattened memory tokens
S_PAD    = 128                                    # per-batch memory padded to lane width
NQ       = 8             # queries per batch element
BS       = 2             # batch
R_TOT    = BS * NQ       # 16 query rows total
SA_KEYS  = N_HEADS * NQ                           # 64 stacked self-attn key rows
LN_EPS   = 1e-5
ATTN_SCALE = 1.0 / math.sqrt(HEAD_DIM)
FAR = 2.0e4              # coordinate sentinel that zeroes the tent weight

# column c of the (head, level, point)-flattened axis belongs to level:
LEVEL_OF_COL = np.array([(c // N_POINTS) % N_LEVELS for c in range(HLP)],
                        dtype=np.int32)


def _pick_gather_dtype():
    """bf16 tent-weight build on bf16-native VPUs (v6e / v7x); f32 build with a
    single cast before the MXU matmul elsewhere (v5e and older)."""
    try:
        kind = jax.devices()[0].device_kind.lower()
    except Exception:
        return jnp.float32
    if any(t in kind for t in ("v6", "v7", "tpu7", "trillium", "ironwood")):
        return jnp.bfloat16
    return jnp.float32


GATHER_DTYPE = _pick_gather_dtype()

# ------------------------ parameters (PyTorch layout) -------------------------
PARAM_NAMES = [
    # MSDeformAttn (weights stored as (in, out); offsets split into x / y banks)
    "wv", "bv", "wsox", "bsox", "wsoy", "bsoy", "waw", "baw", "wo", "bo",
    "ln1g", "ln1b",
    # nn.MultiheadAttention
    "wq", "bq", "wk", "bk", "wvs", "bvs", "wos", "bos",
    "ln2g", "ln2b",
    # FFN
    "w1", "b1", "w2", "b2",
    "ln3g", "ln3b",
]

PARAM_SHAPES = {
    "wv": (D_MODEL, D_MODEL), "bv": (1, D_MODEL),
    "wsox": (D_MODEL, HLP), "bsox": (1, HLP),
    "wsoy": (D_MODEL, HLP), "bsoy": (1, HLP),
    "waw": (D_MODEL, HLP), "baw": (1, HLP),
    "wo": (D_MODEL, D_MODEL), "bo": (1, D_MODEL),
    "ln1g": (1, D_MODEL), "ln1b": (1, D_MODEL),
    "wq": (D_MODEL, D_MODEL), "bq": (1, D_MODEL),
    "wk": (D_MODEL, D_MODEL), "bk": (1, D_MODEL),
    "wvs": (D_MODEL, D_MODEL), "bvs": (1, D_MODEL),
    "wos": (D_MODEL, D_MODEL), "bos": (1, D_MODEL),
    "ln2g": (1, D_MODEL), "ln2b": (1, D_MODEL),
    "w1": (D_MODEL, D_FFN), "b1": (1, D_FFN),
    "w2": (D_FFN, D_MODEL), "b2": (1, D_MODEL),
    "ln3g": (1, D_MODEL), "ln3b": (1, D_MODEL),
}

# --------------------- packed-slab layouts (host <-> kernel) ------------------
# pslab: every small param, 8-row aligned, lane-padded to 128 (f32)
PSLAB_LAYOUT = {           # name -> (row0, n_rows, n_cols)
    "wv":   (0,   D_MODEL, D_MODEL),
    "wo":   (32,  D_MODEL, D_MODEL),
    "wsa":  (64,  2 * D_MODEL, 3 * D_MODEL),   # fused [wq|wk|wvs] on [x|pos]
    "wos":  (128, D_MODEL, D_MODEL),
    "w1":   (160, D_MODEL, D_FFN),
    "w2":   (192, D_FFN,   D_MODEL),
    "bv":   (256, 1, D_MODEL),
    "bo":   (264, 1, D_MODEL),
    "ln1g": (272, 1, D_MODEL),
    "ln1b": (280, 1, D_MODEL),
    "bsa":  (288, 1, 3 * D_MODEL),
    "bos":  (296, 1, D_MODEL),
    "ln2g": (304, 1, D_MODEL),
    "ln2b": (312, 1, D_MODEL),
    "b1":   (320, 1, D_FFN),
    "b2":   (328, 1, D_MODEL),
    "ln3g": (336, 1, D_MODEL),
    "ln3b": (344, 1, D_MODEL),
}
PSLAB_ROWS = 352

# cslab: structural constants (f32, width 128)
CS_ONES_LP  = 0                       # (HLP, HLP) per-head softmax segment sums
CS_HM_DEF   = HLP                     # (HLP, D) deformable column -> head slice
CS_KV_SEL   = 2 * HLP                 # (SA_KEYS, D) stacked key row -> head slice
CS_ONES_KEY = 2 * HLP + SA_KEYS       # (SA_KEYS, SA_KEYS) self-attn segment sums
CSLAB_ROWS  = 2 * HLP + 2 * SA_KEYS   # 384

WDSLAB_ROWS = 40                      # rows 0:32 = wdef (32,384), row 32 = bdef


def _layer_norm(x, g, b):
    mu = jnp.mean(x, axis=-1, keepdims=True)
    var = jnp.mean((x - mu) ** 2, axis=-1, keepdims=True)
    return (x - mu) * lax.rsqrt(var + LN_EPS) * g + b


def _unpack_pslab(pslab):
    # works on a Pallas Ref (sub-block loads) or a jnp array (value slices)
    return {k: pslab[r0:r0 + nr, 0:nc]
            for k, (r0, nr, nc) in PSLAB_LAYOUT.items()}


def _forward_one_batch(qrows, pxy, mem, sxy, cslab, wdslab, pslab):
    """Whole decoder layer for ONE batch element.

    Arguments may be Pallas Refs (inside the kernel) or jnp arrays (XLA
    reference): only `[...]` reads and static slicing are used on them."""
    f32 = jnp.float32

    def dot(a, b):
        return jnp.dot(a, b, preferred_element_type=f32)

    def dot_t(a, b):  # a @ b.T without materialising a transpose
        return lax.dot_general(a, b, (((1,), (1,)), ((), ())),
                               preferred_element_type=f32)

    p = _unpack_pslab(pslab)
    tgt = qrows[:, 0:D_MODEL]                 # (NQ, D)
    pos = qrows[:, D_MODEL:2 * D_MODEL]       # (NQ, D)
    pxr = pxy[:, 0:HLP]                       # (NQ, HLP) ref_x*W - 0.5
    pyr = pxy[:, HLP:2 * HLP]
    sx = sxy[0:HLP, :]                        # (HLP, S_PAD) sample x of token s
    sy = sxy[HLP:2 * HLP, :]                  #   (FAR where level/pad mismatch)
    ones_lp  = cslab[CS_ONES_LP:CS_ONES_LP + HLP, :]
    hm_def   = cslab[CS_HM_DEF:CS_HM_DEF + HLP, 0:D_MODEL]
    kv_sel   = cslab[CS_KV_SEL:CS_KV_SEL + SA_KEYS, 0:D_MODEL]
    ones_key = cslab[CS_ONES_KEY:CS_ONES_KEY + SA_KEYS, 0:SA_KEYS]
    wdef = wdslab[0:D_MODEL, :]               # (D, 3*HLP) fused offx|offy|aw
    bdef = wdslab[D_MODEL:D_MODEL + 1, :]

    # ===================== MSDeformAttn cross-attention =====================
    q = tgt + pos                                        # with_pos_embed
    value = (dot(mem[...], p["wv"]) + p["bv"]).astype(jnp.bfloat16)  # (S_PAD, D)

    proj = dot(q, wdef) + bdef                           # (NQ, 3*HLP)
    off_x = proj[:, 0:HLP]
    off_y = proj[:, HLP:2 * HLP]
    awl   = proj[:, 2 * HLP:3 * HLP]

    # per-head softmax over (level, point): global row-max shift (shift-invariant
    # per segment) + block-diagonal-ones matmul for the segment sums.
    e = jnp.exp(awl - jnp.max(awl, axis=-1, keepdims=True))
    aw = e / dot(e, ones_lp)                             # (NQ, HLP)

    # single-pass bilinear "tent" gather weights:
    #   w[q,c,s] = aw[q,c] * relu(1-|px-sx|) * relu(1-|py-sy|)
    # level mask / zero padding / padded tokens are folded into sx/sy as FAR.
    gdt = sxy.dtype
    px = (pxr + off_x).astype(gdt)                       # px = ref*W - 0.5 + off
    py = (pyr + off_y).astype(gdt)
    awg = aw.astype(gdt)
    tx = jnp.maximum(1.0 - jnp.abs(px[:, :, None] - sx[None, :, :]), 0.0)
    ty = jnp.maximum(1.0 - jnp.abs(py[:, :, None] - sy[None, :, :]), 0.0)
    w = awg[:, :, None] * tx * ty                        # (NQ, HLP, S_PAD)

    # deformable read-out on the MXU (bf16 operands, f32 accumulation)
    sampled = dot(w.reshape(NQ * HLP, S_PAD).astype(jnp.bfloat16), value)
    sampled = sampled.reshape(NQ, HLP, D_MODEL)
    cross = jnp.sum(sampled * hm_def[None, :, :], axis=1)  # own head's columns
    cross = dot(cross, p["wo"]) + p["bo"]                # output_proj

    x = _layer_norm(tgt + cross, p["ln1g"], p["ln1b"])   # dropout1(id) + norm1

    # ================= self-attention: all heads in one pass =================
    # q = k = x + pos, v = x  ->  fused single matmul on [x | pos]
    xp = jnp.concatenate([x, pos], axis=1)               # (NQ, 2D)
    qkv = dot(xp, p["wsa"]) + p["bsa"]                   # (NQ, 3D)
    qh = qkv[:, 0:D_MODEL] * ATTN_SCALE
    kh = qkv[:, D_MODEL:2 * D_MODEL]
    vh = qkv[:, 2 * D_MODEL:3 * D_MODEL]

    # block-diagonal key/value: stacked row block h exposes only head h's slice
    k_cat = jnp.concatenate([kh] * N_HEADS, axis=0) * kv_sel   # (SA_KEYS, D)
    v_cat = jnp.concatenate([vh] * N_HEADS, axis=0) * kv_sel

    scores = dot_t(qh, k_cat)                            # (NQ, SA_KEYS)
    es = jnp.exp(scores - jnp.max(scores, axis=-1, keepdims=True))
    prob = es / dot(es, ones_key)                        # per-(query, head) softmax
    sa = dot(prob, v_cat)                                # (NQ, D)
    sa = dot(sa, p["wos"]) + p["bos"]

    x = _layer_norm(x + sa, p["ln2g"], p["ln2b"])        # dropout2 + norm2

    # ================================= FFN =================================
    h = jnp.maximum(dot(x, p["w1"]) + p["b1"], 0.0)      # relu
    ff = dot(h, p["w2"]) + p["b2"]
    return _layer_norm(x + ff, p["ln3g"], p["ln3b"])     # dropout4 + norm3


# ------------------------------ Pallas wrapper --------------------------------
def _kernel(qrows_ref, pxy_ref, mem_ref, sxy_ref, cslab_ref, wdslab_ref,
            pslab_ref, out_ref):
    out_ref[...] = _forward_one_batch(qrows_ref, pxy_ref, mem_ref, sxy_ref,
                                      cslab_ref, wdslab_ref, pslab_ref)


def pallas_forward(qrows, pxy, mem, sxy, cslab, wdslab, pslab):
    out = pl.pallas_call(
        _kernel,
        out_shape=jax.ShapeDtypeStruct((R_TOT, D_MODEL), jnp.float32),
        grid=(BS,),
        in_specs=[
            pl.BlockSpec((NQ, 2 * D_MODEL), lambda b: (b, 0)),     # [tgt | pos]
            pl.BlockSpec((NQ, 2 * HLP), lambda b: (b, 0)),         # [pxr | pyr]
            pl.BlockSpec((S_PAD, D_MODEL), lambda b: (b, 0)),      # padded memory
            pl.BlockSpec(sxy.shape, lambda b: (0, 0)),             # sample coords
            pl.BlockSpec(cslab.shape, lambda b: (0, 0)),           # structural consts
            pl.BlockSpec(wdslab.shape, lambda b: (0, 0)),          # fused offset/aw proj
            pl.BlockSpec(pslab.shape, lambda b: (0, 0)),           # packed params
        ],
        out_specs=pl.BlockSpec((NQ, D_MODEL), lambda b: (b, 0)),
        compiler_params=pltpu.CompilerParams(
            dimension_semantics=("parallel",)),
    )(qrows, pxy, mem, sxy, cslab, wdslab, pslab)
    return out.reshape(BS, NQ, D_MODEL)


# ------------------------- host-side constant / data prep ---------------------
def build_constants():
    # per flattened token s (within one batch's PADDED memory): level, x, y
    sx_tok = np.zeros(S_PAD, np.float32)
    sy_tok = np.zeros(S_PAD, np.float32)
    lvl_tok = np.full(S_PAD, -1, np.int32)          # -1 marks padded tokens
    s = 0
    for lvl, (h, w) in enumerate(SPATIAL_SHAPES):
        ys, xs = np.meshgrid(np.arange(h), np.arange(w), indexing="ij")
        n = h * w
        sx_tok[s:s + n] = xs.reshape(-1)
        sy_tok[s:s + n] = ys.reshape(-1)
        lvl_tok[s:s + n] = lvl
        s += n

    # (HLP, S_PAD) sample coordinates with level + padding mask folded in as FAR
    match = LEVEL_OF_COL[:, None] == lvl_tok[None, :]
    sx_cs = np.where(match, sx_tok[None, :], FAR).astype(np.float32)
    sy_cs = np.where(match, sy_tok[None, :], FAR).astype(np.float32)
    sxy = jnp.asarray(np.concatenate([sx_cs, sy_cs], axis=0), GATHER_DTYPE)

    col_head = np.arange(HLP) // LP                 # head of deformable column
    d_head = np.arange(D_MODEL) // HEAD_DIM         # head of feature dim
    key_head = np.arange(SA_KEYS) // NQ             # head of stacked key row

    cslab = np.zeros((CSLAB_ROWS, 128), np.float32)
    cslab[CS_ONES_LP:CS_ONES_LP + HLP, 0:HLP] = \
        (col_head[:, None] == col_head[None, :])
    cslab[CS_HM_DEF:CS_HM_DEF + HLP, 0:D_MODEL] = \
        (col_head[:, None] == d_head[None, :])
    cslab[CS_KV_SEL:CS_KV_SEL + SA_KEYS, 0:D_MODEL] = \
        (key_head[:, None] == d_head[None, :])
    cslab[CS_ONES_KEY:CS_ONES_KEY + SA_KEYS, 0:SA_KEYS] = \
        (key_head[:, None] == key_head[None, :])
    return sxy, jnp.asarray(cslab)


def pack_params(params):
    np_p = {k: np.asarray(v) for k, v in params.items()}

    # fused deformable projection: [off_x | off_y | attn_weight] + its bias row
    wdslab = np.zeros((WDSLAB_ROWS, 3 * HLP), np.float32)
    wdslab[0:D_MODEL, :] = np.concatenate(
        [np_p["wsox"], np_p["wsoy"], np_p["waw"]], axis=1)
    wdslab[D_MODEL:D_MODEL + 1, :] = np.concatenate(
        [np_p["bsox"], np_p["bsoy"], np_p["baw"]], axis=1)

    # fused self-attn q/k/v projection acting on [x | pos]
    wsa = np.concatenate([
        np.concatenate([np_p["wq"], np_p["wk"], np_p["wvs"]], axis=1),
        np.concatenate([np_p["wq"], np_p["wk"], np.zeros_like(np_p["wvs"])],
                       axis=1)], axis=0)                       # (2D, 3D)
    bsa = np.concatenate([np_p["bq"], np_p["bk"], np_p["bvs"]], axis=1)

    fused = {
        "wv": np_p["wv"], "wo": np_p["wo"], "wsa": wsa, "wos": np_p["wos"],
        "w1": np_p["w1"], "w2": np_p["w2"],
        "bv": np_p["bv"], "bo": np_p["bo"],
        "ln1g": np_p["ln1g"], "ln1b": np_p["ln1b"],
        "bsa": bsa, "bos": np_p["bos"],
        "ln2g": np_p["ln2g"], "ln2b": np_p["ln2b"],
        "b1": np_p["b1"], "b2": np_p["b2"],
        "ln3g": np_p["ln3g"], "ln3b": np_p["ln3b"],
    }
    pslab = np.zeros((PSLAB_ROWS, 128), np.float32)
    for k, (r0, nr, nc) in PSLAB_LAYOUT.items():
        pslab[r0:r0 + nr, 0:nc] = fused[k]
    return jnp.asarray(wdslab), jnp.asarray(pslab)


def prepare_inputs(tgt, pos, memory, ref_points):
    qrows = jnp.concatenate([tgt.reshape(R_TOT, D_MODEL),
                             pos.reshape(R_TOT, D_MODEL)], axis=1)      # (16, 64)
    # zero-pad each batch's memory to 128 tokens, keep batches as row blocks
    mem_pad = jnp.concatenate(
        [memory, jnp.zeros((BS, S_PAD - S_TOTAL, D_MODEL), jnp.float32)], axis=1)
    mem = mem_pad.reshape(BS * S_PAD, D_MODEL)                          # (256, 32)
    # reference points broadcast to one column per (head, level, point), in pixel
    # space with the grid_sample(-0.5) shift folded in (div/mul cancelled)
    col_wf = np.array([w for (_h, w) in SPATIAL_SHAPES],
                      np.float32)[LEVEL_OF_COL][None, :]
    col_hf = np.array([h for (h, _w) in SPATIAL_SHAPES],
                      np.float32)[LEVEL_OF_COL][None, :]
    refx = ref_points[:, :, LEVEL_OF_COL, 0].reshape(R_TOT, HLP)
    refy = ref_points[:, :, LEVEL_OF_COL, 1].reshape(R_TOT, HLP)
    pxy = jnp.concatenate([refx * col_wf - 0.5, refy * col_hf - 0.5],
                          axis=1)                                       # (16, 256)
    return qrows, pxy, mem


def init_params(key):
    params = {}
    keys = jax.random.split(key, len(PARAM_NAMES))
    for k, name in zip(keys, PARAM_NAMES):
        shape = PARAM_SHAPES[name]
        if name.startswith("ln"):
            params[name] = (jnp.ones(shape, jnp.float32) if name.endswith("g")
                            else jnp.zeros(shape, jnp.float32))
        elif name.startswith("w"):
            fan_in = shape[0]
            params[name] = (jax.random.normal(k, shape, jnp.float32)
                            / np.sqrt(float(fan_in)))
        else:  # bias
            params[name] = 0.02 * jax.random.normal(k, shape, jnp.float32)
    return params


if __name__ == "__main__":
    key = jax.random.PRNGKey(0)
    k_tgt, k_pos, k_mem, k_ref, k_par = jax.random.split(key, 5)

    tgt = jax.random.normal(k_tgt, (BS, NQ, D_MODEL), jnp.float32)
    pos = jax.random.normal(k_pos, (BS, NQ, D_MODEL), jnp.float32)
    memory = jax.random.normal(k_mem, (BS, S_TOTAL, D_MODEL), jnp.float32)
    ref_points = jax.random.uniform(k_ref, (BS, NQ, N_LEVELS, 2), jnp.float32,
                                    0.1, 0.9)
    params = init_params(k_par)

    sxy, cslab = build_constants()
    wdslab, pslab = pack_params(params)
    qrows, pxy, mem = prepare_inputs(tgt, pos, memory, ref_points)

    out = pallas_forward(qrows, pxy, mem, sxy, cslab, wdslab, pslab)
    out = jax.block_until_ready(out)

    # Reference: identical math lowered through plain XLA, batch by batch.
    # Force full-f32 matmul precision so the comparison against the Pallas
    # lowering is tight (the bf16 gather matmul is mirrored on both sides).
    with jax.default_matmul_precision("float32"):
        ref = jnp.stack([
            _forward_one_batch(qrows[b * NQ:(b + 1) * NQ],
                               pxy[b * NQ:(b + 1) * NQ],
                               mem[b * S_PAD:(b + 1) * S_PAD],
                               sxy, cslab, wdslab, pslab)
            for b in range(BS)], axis=0)
    ref = jax.block_until_ready(ref)

    np.testing.assert_allclose(np.asarray(out), np.asarray(ref),
                               rtol=2e-3, atol=2e-3)

    print("KERNEL_OK")
</pallas_src>

<mosaic_0001>
module attributes {stable_mosaic.version = 11 : i64} {
  func.func @_kernel(%arg0: i32, %arg1: memref<8x64xf32, #tpu.memory_space<vmem>>, %arg2: memref<8x256xf32, #tpu.memory_space<vmem>>, %arg3: memref<128x32xf32, #tpu.memory_space<vmem>>, %arg4: memref<256x128xf32, #tpu.memory_space<vmem>>, %arg5: memref<384x128xf32, #tpu.memory_space<vmem>>, %arg6: memref<40x384xf32, #tpu.memory_space<vmem>>, %arg7: memref<352x128xf32, #tpu.memory_space<vmem>>, %arg8: memref<8x32xf32, #tpu.memory_space<vmem>>) attributes {dimension_semantics = [#tpu.dimension_semantics<parallel>], iteration_bounds = array<i64: 2>, scalar_prefetch = 0 : i64, scratch_operands = 0 : i64, tpu.core_type = #tpu.core_type<tc>, window_params = [{transform_indices = @transform_0, window_bounds = array<i64: 8, 64>}, {transform_indices = @transform_1, window_bounds = array<i64: 8, 256>}, {transform_indices = @transform_2, window_bounds = array<i64: 128, 32>}, {pipeline_mode = #tpu.pipeline_mode<synchronous>, transform_indices = @transform_3, window_bounds = array<i64: 256, 128>}, {pipeline_mode = #tpu.pipeline_mode<synchronous>, transform_indices = @transform_4, window_bounds = array<i64: 384, 128>}, {pipeline_mode = #tpu.pipeline_mode<synchronous>, transform_indices = @transform_5, window_bounds = array<i64: 40, 384>}, {pipeline_mode = #tpu.pipeline_mode<synchronous>, transform_indices = @transform_6, window_bounds = array<i64: 352, 128>}, {transform_indices = @transform_7, window_bounds = array<i64: 8, 32>}]} {
    %c0 = arith.constant 0 : index
    %c0_0 = arith.constant 0 : index
    %0 = vector.load %arg7[%c0, %c0_0] : memref<352x128xf32, #tpu.memory_space<vmem>>, vector<32x32xf32>
    %c32 = arith.constant 32 : index
    %c0_1 = arith.constant 0 : index
    %1 = vector.load %arg7[%c32, %c0_1] : memref<352x128xf32, #tpu.memory_space<vmem>>, vector<32x32xf32>
    %c64 = arith.constant 64 : index
    %c0_2 = arith.constant 0 : index
    %2 = vector.load %arg7[%c64, %c0_2] : memref<352x128xf32, #tpu.memory_space<vmem>>, vector<64x96xf32>
    %c128 = arith.constant 128 : index
    %c0_3 = arith.constant 0 : index
    %3 = vector.load %arg7[%c128, %c0_3] : memref<352x128xf32, #tpu.memory_space<vmem>>, vector<32x32xf32>
    %c160 = arith.constant 160 : index
    %c0_4 = arith.constant 0 : index
    %4 = vector.load %arg7[%c160, %c0_4] : memref<352x128xf32, #tpu.memory_space<vmem>>, vector<32x64xf32>
    %c192 = arith.constant 192 : index
    %c0_5 = arith.constant 0 : index
    %5 = vector.load %arg7[%c192, %c0_5] : memref<352x128xf32, #tpu.memory_space<vmem>>, vector<64x32xf32>
    %c256 = arith.constant 256 : index
    %c0_6 = arith.constant 0 : index
    %6 = vector.load %arg7[%c256, %c0_6] : memref<352x128xf32, #tpu.memory_space<vmem>>, vector<1x32xf32>
    %c264 = arith.constant 264 : index
    %c0_7 = arith.constant 0 : index
    %7 = vector.load %arg7[%c264, %c0_7] : memref<352x128xf32, #tpu.memory_space<vmem>>, vector<1x32xf32>
    %c272 = arith.constant 272 : index
    %c0_8 = arith.constant 0 : index
    %8 = vector.load %arg7[%c272, %c0_8] : memref<352x128xf32, #tpu.memory_space<vmem>>, vector<1x32xf32>
    %c280 = arith.constant 280 : index
    %c0_9 = arith.constant 0 : index
    %9 = vector.load %arg7[%c280, %c0_9] : memref<352x128xf32, #tpu.memory_space<vmem>>, vector<1x32xf32>
    %c288 = arith.constant 288 : index
    %c0_10 = arith.constant 0 : index
    %10 = vector.load %arg7[%c288, %c0_10] : memref<352x128xf32, #tpu.memory_space<vmem>>, vector<1x96xf32>
    %c296 = arith.constant 296 : index
    %c0_11 = arith.constant 0 : index
    %11 = vector.load %arg7[%c296, %c0_11] : memref<352x128xf32, #tpu.memory_space<vmem>>, vector<1x32xf32>
    %c304 = arith.constant 304 : index
    %c0_12 = arith.constant 0 : index
    %12 = vector.load %arg7[%c304, %c0_12] : memref<352x128xf32, #tpu.memory_space<vmem>>, vector<1x32xf32>
    %c312 = arith.constant 312 : index
    %c0_13 = arith.constant 0 : index
    %13 = vector.load %arg7[%c312, %c0_13] : memref<352x128xf32, #tpu.memory_space<vmem>>, vector<1x32xf32>
    %c320 = arith.constant 320 : index
    %c0_14 = arith.constant 0 : index
    %14 = vector.load %arg7[%c320, %c0_14] : memref<352x128xf32, #tpu.memory_space<vmem>>, vector<1x64xf32>
    %c328 = arith.constant 328 : index
    %c0_15 = arith.constant 0 : index
    %15 = vector.load %arg7[%c328, %c0_15] : memref<352x128xf32, #tpu.memory_space<vmem>>, vector<1x32xf32>
    %c336 = arith.constant 336 : index
    %c0_16 = arith.constant 0 : index
    %16 = vector.load %arg7[%c336, %c0_16] : memref<352x128xf32, #tpu.memory_space<vmem>>, vector<1x32xf32>
    %c344 = arith.constant 344 : index
    %c0_17 = arith.constant 0 : index
    %17 = vector.load %arg7[%c344, %c0_17] : memref<352x128xf32, #tpu.memory_space<vmem>>, vector<1x32xf32>
    %c0_18 = arith.constant 0 : index
    %c0_19 = arith.constant 0 : index
    %18 = vector.load %arg1[%c0_18, %c0_19] : memref<8x64xf32, #tpu.memory_space<vmem>>, vector<8x32xf32>
    %c0_20 = arith.constant 0 : index
    %c32_21 = arith.constant 32 : index
    %19 = vector.load %arg1[%c0_20, %c32_21] : memref<8x64xf32, #tpu.memory_space<vmem>>, vector<8x32xf32>
    %c0_22 = arith.constant 0 : index
    %c0_23 = arith.constant 0 : index
    %20 = vector.load %arg2[%c0_22, %c0_23] : memref<8x256xf32, #tpu.memory_space<vmem>>, vector<8x128xf32>
    %c0_24 = arith.constant 0 : index
    %c128_25 = arith.constant 128 : index
    %21 = vector.load %arg2[%c0_24, %c128_25] : memref<8x256xf32, #tpu.memory_space<vmem>>, vector<8x128xf32>
    %c0_26 = arith.constant 0 : index
    %c0_27 = arith.constant 0 : index
    %22 = vector.load %arg4[%c0_26, %c0_27] : memref<256x128xf32, #tpu.memory_space<vmem>>, vector<128x128xf32>
    %c128_28 = arith.constant 128 : index
    %c0_29 = arith.constant 0 : index
    %23 = vector.load %arg4[%c128_28, %c0_29] : memref<256x128xf32, #tpu.memory_space<vmem>>, vector<128x128xf32>
    %c0_30 = arith.constant 0 : index
    %c0_31 = arith.constant 0 : index
    %24 = vector.load %arg5[%c0_30, %c0_31] : memref<384x128xf32, #tpu.memory_space<vmem>>, vector<128x128xf32>
    %c128_32 = arith.constant 128 : index
    %c0_33 = arith.constant 0 : index
    %25 = vector.load %arg5[%c128_32, %c0_33] : memref<384x128xf32, #tpu.memory_space<vmem>>, vector<128x32xf32>
    %c256_34 = arith.constant 256 : index
    %c0_35 = arith.constant 0 : index
    %26 = vector.load %arg5[%c256_34, %c0_35] : memref<384x128xf32, #tpu.memory_space<vmem>>, vector<64x32xf32>
    %c320_36 = arith.constant 320 : index
    %c0_37 = arith.constant 0 : index
    %27 = vector.load %arg5[%c320_36, %c0_37] : memref<384x128xf32, #tpu.memory_space<vmem>>, vector<64x64xf32>
    %c0_38 = arith.constant 0 : index
    %c0_39 = arith.constant 0 : index
    %28 = vector.load %arg6[%c0_38, %c0_39] : memref<40x384xf32, #tpu.memory_space<vmem>>, vector<32x384xf32>
    %c32_40 = arith.constant 32 : index
    %c0_41 = arith.constant 0 : index
    %29 = vector.load %arg6[%c32_40, %c0_41] : memref<40x384xf32, #tpu.memory_space<vmem>>, vector<1x384xf32>
    %30 = arith.addf %18, %19 : vector<8x32xf32>
    %c0_42 = arith.constant 0 : index
    %c0_43 = arith.constant 0 : index
    %31 = vector.load %arg3[%c0_42, %c0_43] : memref<128x32xf32, #tpu.memory_space<vmem>>, vector<128x32xf32>
    %cst = arith.constant dense<0.000000e+00> : vector<128x32xf32>
    %32 = tpu.matmul %31, %0, %cst {dimension_numbers = #tpu.dot_dimension_numbers<[1], [0], [0], [1], [0, 0, 1, 1], [], []>} : vector<128x32xf32>, vector<32x32xf32>, vector<128x32xf32> -> vector<128x32xf32>
    %33 = vector.broadcast %6 : vector<1x32xf32> to vector<128x32xf32>
    %34 = arith.addf %32, %33 : vector<128x32xf32>
    %35 = arith.truncf %34 : vector<128x32xf32> to vector<128x32xbf16>
    %cst_44 = arith.constant dense<0.000000e+00> : vector<8x384xf32>
    %36 = tpu.matmul %30, %28, %cst_44 {dimension_numbers = #tpu.dot_dimension_numbers<[1], [0], [0], [1], [0, 0, 1, 1], [], []>} : vector<8x32xf32>, vector<32x384xf32>, vector<8x384xf32> -> vector<8x384xf32>
    %37 = vector.broadcast %29 : vector<1x384xf32> to vector<8x384xf32>
    %38 = arith.addf %36, %37 : vector<8x384xf32>
    %39 = vector.extract_strided_slice %38 {offsets = [0, 0], sizes = [8, 128], strides = [1, 1]} : vector<8x384xf32> to vector<8x128xf32>
    %40 = vector.extract_strided_slice %38 {offsets = [0, 128], sizes = [8, 128], strides = [1, 1]} : vector<8x384xf32> to vector<8x128xf32>
    %41 = vector.extract_strided_slice %38 {offsets = [0, 256], sizes = [8, 128], strides = [1, 1]} : vector<8x384xf32> to vector<8x128xf32>
    %cst_45 = arith.constant dense<0xFF800000> : vector<8xf32>
    %42 = vector.multi_reduction <maximumf>, %41, %cst_45 [1] : vector<8x128xf32> to vector<8xf32>
    %43 = vector.shape_cast %42 : vector<8xf32> to vector<8x1xf32>
    %44 = vector.broadcast %43 : vector<8x1xf32> to vector<8x128xf32>
    %45 = arith.subf %41, %44 : vector<8x128xf32>
    %46 = math.exp %45 : vector<8x128xf32>
    %cst_46 = arith.constant dense<0.000000e+00> : vector<8x128xf32>
    %47 = tpu.matmul %46, %24, %cst_46 {dimension_numbers = #tpu.dot_dimension_numbers<[1], [0], [0], [1], [0, 0, 1, 1], [], []>} : vector<8x128xf32>, vector<128x128xf32>, vector<8x128xf32> -> vector<8x128xf32>
    %48 = arith.divf %46, %47 : vector<8x128xf32>
    %49 = arith.addf %20, %39 : vector<8x128xf32>
    %50 = arith.addf %21, %40 : vector<8x128xf32>
    %51 = vector.shape_cast %49 : vector<8x128xf32> to vector<8x128x1xf32>
    %52 = vector.shape_cast %22 : vector<128x128xf32> to vector<1x128x128xf32>
    %53 = vector.broadcast %51 : vector<8x128x1xf32> to vector<8x128x128xf32>
    %54 = vector.broadcast %52 : vector<1x128x128xf32> to vector<8x128x128xf32>
    %55 = arith.subf %53, %54 : vector<8x128x128xf32>
    %56 = math.absf %55 : vector<8x128x128xf32>
    %cst_47 = arith.constant 1.000000e+00 : f32
    %57 = vector.broadcast %cst_47 : f32 to vector<8x128x128xf32>
    %58 = arith.subf %57, %56 : vector<8x128x128xf32>
    %cst_48 = arith.constant 0.000000e+00 : f32
    %59 = vector.broadcast %cst_48 : f32 to vector<8x128x128xf32>
    %60 = arith.maximumf %58, %59 : vector<8x128x128xf32>
    %61 = vector.shape_cast %50 : vector<8x128xf32> to vector<8x128x1xf32>
    %62 = vector.shape_cast %23 : vector<128x128xf32> to vector<1x128x128xf32>
    %63 = vector.broadcast %61 : vector<8x128x1xf32> to vector<8x128x128xf32>
    %64 = vector.broadcast %62 : vector<1x128x128xf32> to vector<8x128x128xf32>
    %65 = arith.subf %63, %64 : vector<8x128x128xf32>
    %66 = math.absf %65 : vector<8x128x128xf32>
    %cst_49 = arith.constant 1.000000e+00 : f32
    %67 = vector.broadcast %cst_49 : f32 to vector<8x128x128xf32>
    %68 = arith.subf %67, %66 : vector<8x128x128xf32>
    %cst_50 = arith.constant 0.000000e+00 : f32
    %69 = vector.broadcast %cst_50 : f32 to vector<8x128x128xf32>
    %70 = arith.maximumf %68, %69 : vector<8x128x128xf32>
    %71 = vector.shape_cast %48 : vector<8x128xf32> to vector<8x128x1xf32>
    %72 = vector.broadcast %71 : vector<8x128x1xf32> to vector<8x128x128xf32>
    %73 = arith.mulf %72, %60 : vector<8x128x128xf32>
    %74 = arith.mulf %73, %70 : vector<8x128x128xf32>
    %75 = vector.shape_cast %74 : vector<8x128x128xf32> to vector<1024x128xf32>
    %76 = arith.truncf %75 : vector<1024x128xf32> to vector<1024x128xbf16>
    %cst_51 = arith.constant dense<0.000000e+00> : vector<1024x32xf32>
    %77 = tpu.matmul %76, %35, %cst_51 {dimension_numbers = #tpu.dot_dimension_numbers<[1], [0], [0], [1], [0, 0, 1, 1], [], []>} : vector<1024x128xbf16>, vector<128x32xbf16>, vector<1024x32xf32> -> vector<1024x32xf32>
    %78 = vector.shape_cast %77 : vector<1024x32xf32> to vector<8x128x32xf32>
    %79 = vector.shape_cast %25 : vector<128x32xf32> to vector<1x128x32xf32>
    %80 = vector.broadcast %79 : vector<1x128x32xf32> to vector<8x128x32xf32>
    %81 = arith.mulf %78, %80 : vector<8x128x32xf32>
    %cst_52 = arith.constant dense<0.000000e+00> : vector<8x32xf32>
    %82 = vector.multi_reduction <add>, %81, %cst_52 [1] : vector<8x128x32xf32> to vector<8x32xf32>
    %cst_53 = arith.constant dense<0.000000e+00> : vector<8x32xf32>
    %83 = tpu.matmul %82, %1, %cst_53 {dimension_numbers = #tpu.dot_dimension_numbers<[1], [0], [0], [1], [0, 0, 1, 1], [], []>} : vector<8x32xf32>, vector<32x32xf32>, vector<8x32xf32> -> vector<8x32xf32>
    %84 = vector.broadcast %7 : vector<1x32xf32> to vector<8x32xf32>
    %85 = arith.addf %83, %84 : vector<8x32xf32>
    %86 = arith.addf %18, %85 : vector<8x32xf32>
    %cst_54 = arith.constant dense<0.000000e+00> : vector<8xf32>
    %87 = vector.multi_reduction <add>, %86, %cst_54 [1] : vector<8x32xf32> to vector<8xf32>
    %88 = vector.shape_cast %87 : vector<8xf32> to vector<8x1xf32>
    %cst_55 = arith.constant 3.200000e+01 : f32
    %89 = vector.broadcast %cst_55 : f32 to vector<8x1xf32>
    %90 = arith.divf %88, %89 : vector<8x1xf32>
    %91 = vector.broadcast %90 : vector<8x1xf32> to vector<8x32xf32>
    %92 = arith.subf %86, %91 : vector<8x32xf32>
    %93 = arith.mulf %92, %92 : vector<8x32xf32>
    %cst_56 = arith.constant dense<0.000000e+00> : vector<8xf32>
    %94 = vector.multi_reduction <add>, %93, %cst_56 [1] : vector<8x32xf32> to vector<8xf32>
    %95 = vector.shape_cast %94 : vector<8xf32> to vector<8x1xf32>
    %cst_57 = arith.constant 3.200000e+01 : f32
    %96 = vector.broadcast %cst_57 : f32 to vector<8x1xf32>
    %97 = arith.divf %95, %96 : vector<8x1xf32>
    %98 = vector.broadcast %90 : vector<8x1xf32> to vector<8x32xf32>
    %99 = arith.subf %86, %98 : vector<8x32xf32>
    %cst_58 = arith.constant 9.99999974E-6 : f32
    %100 = vector.broadcast %cst_58 : f32 to vector<8x1xf32>
    %101 = arith.addf %97, %100 : vector<8x1xf32>
    %102 = math.rsqrt %101 : vector<8x1xf32>
    %103 = vector.broadcast %102 : vector<8x1xf32> to vector<8x32xf32>
    %104 = arith.mulf %99, %103 : vector<8x32xf32>
    %105 = vector.broadcast %8 : vector<1x32xf32> to vector<8x32xf32>
    %106 = arith.mulf %104, %105 : vector<8x32xf32>
    %107 = vector.broadcast %9 : vector<1x32xf32> to vector<8x32xf32>
    %108 = arith.addf %106, %107 : vector<8x32xf32>
    %109 = tpu.concatenate %108, %19 in 1 : vector<8x32xf32>, vector<8x32xf32> -> vector<8x64xf32>
    %cst_59 = arith.constant dense<0.000000e+00> : vector<8x96xf32>
    %110 = tpu.matmul %109, %2, %cst_59 {dimension_numbers = #tpu.dot_dimension_numbers<[1], [0], [0], [1], [0, 0, 1, 1], [], []>} : vector<8x64xf32>, vector<64x96xf32>, vector<8x96xf32> -> vector<8x96xf32>
    %111 = vector.broadcast %10 : vector<1x96xf32> to vector<8x96xf32>
    %112 = arith.addf %110, %111 : vector<8x96xf32>
    %113 = vector.extract_strided_slice %112 {offsets = [0, 0], sizes = [8, 32], strides = [1, 1]} : vector<8x96xf32> to vector<8x32xf32>
    %cst_60 = arith.constant 5.000000e-01 : f32
    %114 = vector.broadcast %cst_60 : f32 to vector<8x32xf32>
    %115 = arith.mulf %113, %114 : vector<8x32xf32>
    %116 = vector.extract_strided_slice %112 {offsets = [0, 32], sizes = [8, 32], strides = [1, 1]} : vector<8x96xf32> to vector<8x32xf32>
    %117 = vector.extract_strided_slice %112 {offsets = [0, 64], sizes = [8, 32], strides = [1, 1]} : vector<8x96xf32> to vector<8x32xf32>
    %118 = tpu.concatenate %116, %116, %116, %116, %116, %116, %116, %116 in 0 : vector<8x32xf32>, vector<8x32xf32>, vector<8x32xf32>, vector<8x32xf32>, vector<8x32xf32>, vector<8x32xf32>, vector<8x32xf32>, vector<8x32xf32> -> vector<64x32xf32>
    %119 = arith.mulf %118, %26 : vector<64x32xf32>
    %120 = tpu.concatenate %117, %117, %117, %117, %117, %117, %117, %117 in 0 : vector<8x32xf32>, vector<8x32xf32>, vector<8x32xf32>, vector<8x32xf32>, vector<8x32xf32>, vector<8x32xf32>, vector<8x32xf32>, vector<8x32xf32> -> vector<64x32xf32>
    %121 = arith.mulf %120, %26 : vector<64x32xf32>
    %cst_61 = arith.constant dense<0.000000e+00> : vector<8x64xf32>
    %122 = tpu.matmul %115, %119, %cst_61 {dimension_numbers = #tpu.dot_dimension_numbers<[1], [1], [0], [0], [0, 0, 1, 0], [], []>} : vector<8x32xf32>, vector<64x32xf32>, vector<8x64xf32> -> vector<8x64xf32>
    %cst_62 = arith.constant dense<0xFF800000> : vector<8xf32>
    %123 = vector.multi_reduction <maximumf>, %122, %cst_62 [1] : vector<8x64xf32> to vector<8xf32>
    %124 = vector.shape_cast %123 : vector<8xf32> to vector<8x1xf32>
    %125 = vector.broadcast %124 : vector<8x1xf32> to vector<8x64xf32>
    %126 = arith.subf %122, %125 : vector<8x64xf32>
    %127 = math.exp %126 : vector<8x64xf32>
    %cst_63 = arith.constant dense<0.000000e+00> : vector<8x64xf32>
    %128 = tpu.matmul %127, %27, %cst_63 {dimension_numbers = #tpu.dot_dimension_numbers<[1], [0], [0], [1], [0, 0, 1, 1], [], []>} : vector<8x64xf32>, vector<64x64xf32>, vector<8x64xf32> -> vector<8x64xf32>
    %129 = arith.divf %127, %128 : vector<8x64xf32>
    %cst_64 = arith.constant dense<0.000000e+00> : vector<8x32xf32>
    %130 = tpu.matmul %129, %121, %cst_64 {dimension_numbers = #tpu.dot_dimension_numbers<[1], [0], [0], [1], [0, 0, 1, 1], [], []>} : vector<8x64xf32>, vector<64x32xf32>, vector<8x32xf32> -> vector<8x32xf32>
    %cst_65 = arith.constant dense<0.000000e+00> : vector<8x32xf32>
    %131 = tpu.matmul %130, %3, %cst_65 {dimension_numbers = #tpu.dot_dimension_numbers<[1], [0], [0], [1], [0, 0, 1, 1], [], []>} : vector<8x32xf32>, vector<32x32xf32>, vector<8x32xf32> -> vector<8x32xf32>
    %132 = vector.broadcast %11 : vector<1x32xf32> to vector<8x32xf32>
    %133 = arith.addf %131, %132 : vector<8x32xf32>
    %134 = arith.addf %108, %133 : vector<8x32xf32>
    %cst_66 = arith.constant dense<0.000000e+00> : vector<8xf32>
    %135 = vector.multi_reduction <add>, %134, %cst_66 [1] : vector<8x32xf32> to vector<8xf32>
    %136 = vector.shape_cast %135 : vector<8xf32> to vector<8x1xf32>
    %cst_67 = arith.constant 3.200000e+01 : f32
    %137 = vector.broadcast %cst_67 : f32 to vector<8x1xf32>
    %138 = arith.divf %136, %137 : vector<8x1xf32>
    %139 = vector.broadcast %138 : vector<8x1xf32> to vector<8x32xf32>
    %140 = arith.subf %134, %139 : vector<8x32xf32>
    %141 = arith.mulf %140, %140 : vector<8x32xf32>
    %cst_68 = arith.constant dense<0.000000e+00> : vector<8xf32>
    %142 = vector.multi_reduction <add>, %141, %cst_68 [1] : vector<8x32xf32> to vector<8xf32>
    %143 = vector.shape_cast %142 : vector<8xf32> to vector<8x1xf32>
    %cst_69 = arith.constant 3.200000e+01 : f32
    %144 = vector.broadcast %cst_69 : f32 to vector<8x1xf32>
    %145 = arith.divf %143, %144 : vector<8x1xf32>
    %146 = vector.broadcast %138 : vector<8x1xf32> to vector<8x32xf32>
    %147 = arith.subf %134, %146 : vector<8x32xf32>
    %cst_70 = arith.constant 9.99999974E-6 : f32
    %148 = vector.broadcast %cst_70 : f32 to vector<8x1xf32>
    %149 = arith.addf %145, %148 : vector<8x1xf32>
    %150 = math.rsqrt %149 : vector<8x1xf32>
    %151 = vector.broadcast %150 : vector<8x1xf32> to vector<8x32xf32>
    %152 = arith.mulf %147, %151 : vector<8x32xf32>
    %153 = vector.broadcast %12 : vector<1x32xf32> to vector<8x32xf32>
    %154 = arith.mulf %152, %153 : vector<8x32xf32>
    %155 = vector.broadcast %13 : vector<1x32xf32> to vector<8x32xf32>
    %156 = arith.addf %154, %155 : vector<8x32xf32>
    %cst_71 = arith.constant dense<0.000000e+00> : vector<8x64xf32>
    %157 = tpu.matmul %156, %4, %cst_71 {dimension_numbers = #tpu.dot_dimension_numbers<[1], [0], [0], [1], [0, 0, 1, 1], [], []>} : vector<8x32xf32>, vector<32x64xf32>, vector<8x64xf32> -> vector<8x64xf32>
    %158 = vector.broadcast %14 : vector<1x64xf32> to vector<8x64xf32>
    %159 = arith.addf %157, %158 : vector<8x64xf32>
    %cst_72 = arith.constant 0.000000e+00 : f32
    %160 = vector.broadcast %cst_72 : f32 to vector<8x64xf32>
    %161 = arith.maximumf %159, %160 : vector<8x64xf32>
    %cst_73 = arith.constant dense<0.000000e+00> : vector<8x32xf32>
    %162 = tpu.matmul %161, %5, %cst_73 {dimension_numbers = #tpu.dot_dimension_numbers<[1], [0], [0], [1], [0, 0, 1, 1], [], []>} : vector<8x64xf32>, vector<64x32xf32>, vector<8x32xf32> -> vector<8x32xf32>
    %163 = vector.broadcast %15 : vector<1x32xf32> to vector<8x32xf32>
    %164 = arith.addf %162, %163 : vector<8x32xf32>
    %165 = arith.addf %156, %164 : vector<8x32xf32>
    %cst_74 = arith.constant dense<0.000000e+00> : vector<8xf32>
    %166 = vector.multi_reduction <add>, %165, %cst_74 [1] : vector<8x32xf32> to vector<8xf32>
    %167 = vector.shape_cast %166 : vector<8xf32> to vector<8x1xf32>
    %cst_75 = arith.constant 3.200000e+01 : f32
    %168 = vector.broadcast %cst_75 : f32 to vector<8x1xf32>
    %169 = arith.divf %167, %168 : vector<8x1xf32>
    %170 = vector.broadcast %169 : vector<8x1xf32> to vector<8x32xf32>
    %171 = arith.subf %165, %170 : vector<8x32xf32>
    %172 = arith.mulf %171, %171 : vector<8x32xf32>
    %cst_76 = arith.constant dense<0.000000e+00> : vector<8xf32>
    %173 = vector.multi_reduction <add>, %172, %cst_76 [1] : vector<8x32xf32> to vector<8xf32>
    %174 = vector.shape_cast %173 : vector<8xf32> to vector<8x1xf32>
    %cst_77 = arith.constant 3.200000e+01 : f32
    %175 = vector.broadcast %cst_77 : f32 to vector<8x1xf32>
    %176 = arith.divf %174, %175 : vector<8x1xf32>
    %177 = vector.broadcast %169 : vector<8x1xf32> to vector<8x32xf32>
    %178 = arith.subf %165, %177 : vector<8x32xf32>
    %cst_78 = arith.constant 9.99999974E-6 : f32
    %179 = vector.broadcast %cst_78 : f32 to vector<8x1xf32>
    %180 = arith.addf %176, %179 : vector<8x1xf32>
    %181 = math.rsqrt %180 : vector<8x1xf32>
    %182 = vector.broadcast %181 : vector<8x1xf32> to vector<8x32xf32>
    %183 = arith.mulf %178, %182 : vector<8x32xf32>
    %184 = vector.broadcast %16 : vector<1x32xf32> to vector<8x32xf32>
    %185 = arith.mulf %183, %184 : vector<8x32xf32>
    %186 = vector.broadcast %17 : vector<1x32xf32> to vector<8x32xf32>
    %187 = arith.addf %185, %186 : vector<8x32xf32>
    %c0_79 = arith.constant 0 : index
    %c0_80 = arith.constant 0 : index
    %188 = vector.load %arg8[%c0_79, %c0_80] : memref<8x32xf32, #tpu.memory_space<vmem>>, vector<8x32xf32>
    tpu.vector_store %arg8[%c0_79, %c0_80], %187 {strides = array<i32>} : memref<8x32xf32, #tpu.memory_space<vmem>>, vector<8x32xf32>,
    return
  }
  func.func @transform_0(%arg0: i32) -> (i32, i32) {
    %c0_i32 = arith.constant 0 : i32
    %c0_i32_0 = arith.constant 0 : i32
    return %arg0, %c0_i32 : i32, i32
  }
  func.func @transform_1(%arg0: i32) -> (i32, i32) {
    %c0_i32 = arith.constant 0 : i32
    %c0_i32_0 = arith.constant 0 : i32
    return %arg0, %c0_i32 : i32, i32
  }
  func.func @transform_2(%arg0: i32) -> (i32, i32) {
    %c0_i32 = arith.constant 0 : i32
    %c0_i32_0 = arith.constant 0 : i32
    return %arg0, %c0_i32 : i32, i32
  }
  func.func @transform_3(%arg0: i32) -> (i32, i32) {
    %c0_i32 = arith.constant 0 : i32
    %c0_i32_0 = arith.constant 0 : i32
    %c0_i32_1 = arith.constant 0 : i32
    return %c0_i32, %c0_i32_0 : i32, i32
  }
  func.func @transform_4(%arg0: i32) -> (i32, i32) {
    %c0_i32 = arith.constant 0 : i32
    %c0_i32_0 = arith.constant 0 : i32
    %c0_i32_1 = arith.constant 0 : i32
    return %c0_i32, %c0_i32_0 : i32, i32
  }
  func.func @transform_5(%arg0: i32) -> (i32, i32) {
    %c0_i32 = arith.constant 0 : i32
    %c0_i32_0 = arith.constant 0 : i32
    %c0_i32_1 = arith.constant 0 : i32
    return %c0_i32, %c0_i32_0 : i32, i32
  }
  func.func @transform_6(%arg0: i32) -> (i32, i32) {
    %c0_i32 = arith.constant 0 : i32
    %c0_i32_0 = arith.constant 0 : i32
    %c0_i32_1 = arith.constant 0 : i32
    return %c0_i32, %c0_i32_0 : i32, i32
  }
  func.func @transform_7(%arg0: i32) -> (i32, i32) {
    %c0_i32 = arith.constant 0 : i32
    %c0_i32_0 = arith.constant 0 : i32
    return %arg0, %c0_i32 : i32, i32
  }
}

</mosaic_0001>

<llo_original>
// kernel: tpu_custom_call.1
$region0: #{tpu_custom_call.1}
  #allocation0 [shape = 'u32[]', space=smem, size = 0x4, offset = 0x4, fixed_abs, tag = 'smem constant byte address 0x4 - core index']
  #allocation1 [shape = 'u32[144,128]{1,0:T(1,128)}', space=vmem, size = 0x12000, scoped, tag = 'internal scratch']
  %s0 = inlined_call_operand.vmem [shape: f32[16,64], index: 0, kind: input, shape index: {}]
  %s1 = inlined_call_operand.vmem [shape: f32[16,256], index: 1, kind: input, shape index: {}]
  %s2 = inlined_call_operand.vmem [shape: f32[256,32], index: 2, kind: input, shape index: {}]
  %s3 = inlined_call_operand.vmem [shape: f32[256,128], index: 3, kind: input, shape index: {}]
  %s4 = inlined_call_operand.hbm [shape: f32[384,128], index: 4, kind: input, shape index: {}]
  %s5 = inlined_call_operand.hbm [shape: f32[40,384], index: 5, kind: input, shape index: {}]
  %s6 = inlined_call_operand.hbm [shape: f32[352,128], index: 6, kind: input, shape index: {}]
  %s7 = inlined_call_operand.hbm [shape: f32[16,32], index: 7, kind: output, shape index: {}]
  %s8 = sld [smem:[#allocation0]]
  $region73: #{tpu_custom_call.1} parent=0
    _
  %s10 = ssub.s32 1, %s8
  %s11 = scalar_select 0, %s10, %s8
  $region1: #{tpu_custom_call.1} parent=0
    #allocation2 [shape = 'u8[196608]{0}', space=vmem, size = 0x30000, scoped, tag = 'input window, operand 4, single buffered']
    #allocation3 [shape = 's32[2]{0}', space=sflag, size = 0x8, scoped, tag = 'scoped memory for tpu_custom_call.1']
    #allocation4 [shape = 's32[2]{0}', space=sflag, size = 0x8, scoped, tag = 'scoped memory for tpu_custom_call.1']
    #allocation5 [shape = 'u8[61440]{0}', space=vmem, size = 0xf000, scoped, tag = 'input window, operand 5, single buffered']
    #allocation6 [shape = 's32[1]{0}', space=sflag, size = 0x4, scoped, tag = 'scoped memory for tpu_custom_call.1']
    #allocation7 [shape = 'u8[180224]{0}', space=vmem, size = 0x2c000, scoped, tag = 'input window, operand 6, single buffered']
    #allocation8 [shape = 'u8[8192]{0}', space=vmem, size = 0x2000, scoped, tag = 'output window, operand 0']
    %12 = vsyncpa [#allocation3], 0
    %13 = vsyncpa [#allocation6], 0
    %14 = vsyncpa [#allocation4], 0
    %s15 = scalar_lea.sflag [#allocation4], 1
    %16 = vsyncpa %s15, 0
    loop: start=0, step=1, limit=4
    $region2: #{tpu_custom_call.1} parent=1 // loop_pre_header
      _
    $region3: #{tpu_custom_call.1} parent=1 // loop_header
      %s18 = sphi 0, %s22
      %p19 = scmp.ge.s32.totalorder %s18, 4
      %s28 = sphi 0, %s30
      %s31 = sphi 0, %s28
      %s32 = sphi 0, %s31
      %s48 = sphi 0, %s32
      %s54 = sphi 0, %s56
      %s57 = sphi 0, %s54
      %s58 = sphi 0, %s57
      %s74 = sphi 0, %s58
      %s80 = sphi 0, %s82
      %s83 = sphi 0, %s80
      %s84 = sphi 0, %s83
      %s100 = sphi 0, %s84
      %s104 = sphi 0, %s104
      %s106 = sphi 0, %s104
      %s107 = sphi 0, %s106
      %s121 = sphi 0, %s107
      %s125 = sphi 0, %s125
      %s127 = sphi 0, %s125
      %s128 = sphi 0, %s127
      %s142 = sphi 0, %s128
      %s146 = sphi 0, %s146
      %s148 = sphi 0, %s146
      %s149 = sphi 0, %s148
      %s163 = sphi 0, %s149
      %s167 = sphi 0, %s167
      %s169 = sphi 0, %s167
      %s170 = sphi 0, %s169
      %s184 = sphi 0, %s170
      %s190 = sphi 0, %s192
      %s193 = sphi 0, %s190
      %s194 = sphi 0, %s193
      %s210 = sphi 0, %s194
    $region4: #{tpu_custom_call.1} parent=1 // loop_header_branch
      %21 = sbr.rel (%p19) target = $region8
    $region5: #{tpu_custom_call.1} parent=1 // loop_body
      %s23 = ssub.s32 %s18, 1
      %s24 = ssub.s32 %s18, 2
      %s25 = sadd.s32 %s18, 1
      %s26 = ssub.s32 %s18, %s25
      %p27 = scmp.eq.s32.totalorder %s26, 0
      %s29 = sadd.s32 %s28, 1
      %s30 = scalar_select %p27, %s28, %s29
      %p33 = pneg %p27
      %p34 = scmp.eq.s32.totalorder %s18, 1
      %p35 = por %p33, %p34
      %p36 = scmp.ne.s32.totalorder %s28, %s31
      %p37 = scmp.eq.s32.totalorder %s18, 0
      %p38 = por %p36, %p37
      %p39 = scmp.ne.s32.totalorder %s28, %s31
      %p40 = scmp.eq.s32.totalorder %s23, 1
      %p41 = por %p39, %p40
      %p42 = scmp.ne.s32.totalorder %s31, %s32
      %p43 = scmp.eq.s32.totalorder %s23, 0
      %p44 = por %p42, %p43
      %p45 = scmp.ne.s32.totalorder %s31, %s32
      %p46 = scmp.eq.s32.totalorder %s24, 1
      %p47 = por %p45, %p46
      %p49 = scmp.ne.s32.totalorder %s32, %s48
      %p50 = scmp.eq.s32.totalorder %s24, 0
      %p51 = por %p49, %p50
      %s52 = ssub.s32 %s18, %s25
      %p53 = scmp.eq.s32.totalorder %s52, 0
      %s55 = sadd.s32 %s54, 1
      %s56 = scalar_select %p53, %s54, %s55
      %p59 = pneg %p53
      %p60 = scmp.eq.s32.totalorder %s18, 1
      %p61 = por %p59, %p60
      %p62 = scmp.ne.s32.totalorder %s54, %s57
      %p63 = scmp.eq.s32.totalorder %s18, 0
      %p64 = por %p62, %p63
      %p65 = scmp.ne.s32.totalorder %s54, %s57
      %p66 = scmp.eq.s32.totalorder %s23, 1
      %p67 = por %p65, %p66
      %p68 = scmp.ne.s32.totalorder %s57, %s58
      %p69 = scmp.eq.s32.totalorder %s23, 0
      %p70 = por %p68, %p69
      %p71 = scmp.ne.s32.totalorder %s57, %s58
      %p72 = scmp.eq.s32.totalorder %s24, 1
      %p73 = por %p71, %p72
      %p75 = scmp.ne.s32.totalorder %s58, %s74
      %p76 = scmp.eq.s32.totalorder %s24, 0
      %p77 = por %p75, %p76
      %s78 = ssub.s32 %s18, %s25
      %p79 = scmp.eq.s32.totalorder %s78, 0
      %s81 = sadd.s32 %s80, 1
      %s82 = scalar_select %p79, %s80, %s81
      %p85 = pneg %p79
      %p86 = scmp.eq.s32.totalorder %s18, 1
      %p87 = por %p85, %p86
      %p88 = scmp.ne.s32.totalorder %s80, %s83
      %p89 = scmp.eq.s32.totalorder %s18, 0
      %p90 = por %p88, %p89
      %p91 = scmp.ne.s32.totalorder %s80, %s83
      %p92 = scmp.eq.s32.totalorder %s23, 1
      %p93 = por %p91, %p92
      %p94 = scmp.ne.s32.totalorder %s83, %s84
      %p95 = scmp.eq.s32.totalorder %s23, 0
      %p96 = por %p94, %p95
      %p97 = scmp.ne.s32.totalorder %s83, %s84
      %p98 = scmp.eq.s32.totalorder %s24, 1
      %p99 = por %p97, %p98
      %p101 = scmp.ne.s32.totalorder %s84, %s100
      %p102 = scmp.eq.s32.totalorder %s24, 0
      %p103 = por %p101, %p102
      %s105 = sadd.s32 %s104, 1
      %p108 = scmp.eq.s32.totalorder %s18, 1
      %p109 = scmp.ne.s32.totalorder %s104, %s106
      %p110 = scmp.eq.s32.totalorder %s18, 0
      %p111 = por %p109, %p110
      %p112 = scmp.ne.s32.totalorder %s104, %s106
      %p113 = scmp.eq.s32.totalorder %s23, 1
      %p114 = por %p112, %p113
      %p115 = scmp.ne.s32.totalorder %s106, %s107
      %p116 = scmp.eq.s32.totalorder %s23, 0
      %p117 = por %p115, %p116
      %p118 = scmp.ne.s32.totalorder %s106, %s107
      %p119 = scmp.eq.s32.totalorder %s24, 1
      %p120 = por %p118, %p119
      %p122 = scmp.ne.s32.totalorder %s107, %s121
      %p123 = scmp.eq.s32.totalorder %s24, 0
      %p124 = por %p122, %p123
      %s126 = sadd.s32 %s125, 1
      %p129 = scmp.eq.s32.totalorder %s18, 1
      %p130 = scmp.ne.s32.totalorder %s125, %s127
      %p131 = scmp.eq.s32.totalorder %s18, 0
      %p132 = por %p130, %p131
      %p133 = scmp.ne.s32.totalorder %s125, %s127
      %p134 = scmp.eq.s32.totalorder %s23, 1
      %p135 = por %p133, %p134
      %p136 = scmp.ne.s32.totalorder %s127, %s128
      %p137 = scmp.eq.s32.totalorder %s23, 0
      %p138 = por %p136, %p137
      %p139 = scmp.ne.s32.totalorder %s127, %s128
      %p140 = scmp.eq.s32.totalorder %s24, 1
      %p141 = por %p139, %p140
      %p143 = scmp.ne.s32.totalorder %s128, %s142
      %p144 = scmp.eq.s32.totalorder %s24, 0
      %p145 = por %p143, %p144
      %s147 = sadd.s32 %s146, 1
      %p150 = scmp.eq.s32.totalorder %s18, 1
      %p151 = scmp.ne.s32.totalorder %s146, %s148
      %p152 = scmp.eq.s32.totalorder %s18, 0
      %p153 = por %p151, %p152
      %p154 = scmp.ne.s32.totalorder %s146, %s148
      %p155 = scmp.eq.s32.totalorder %s23, 1
      %p156 = por %p154, %p155
      %p157 = scmp.ne.s32.totalorder %s148, %s149
      %p158 = scmp.eq.s32.totalorder %s23, 0
      %p159 = por %p157, %p158
      %p160 = scmp.ne.s32.totalorder %s148, %s149
      %p161 = scmp.eq.s32.totalorder %s24, 1
      %p162 = por %p160, %p161
      %p164 = scmp.ne.s32.totalorder %s149, %s163
      %p165 = scmp.eq.s32.totalorder %s24, 0
      %p166 = por %p164, %p165
      %s168 = sadd.s32 %s167, 1
      %p171 = scmp.eq.s32.totalorder %s18, 1
      %p172 = scmp.ne.s32.totalorder %s167, %s169
      %p173 = scmp.eq.s32.totalorder %s18, 0
      %p174 = por %p172, %p173
      %p175 = scmp.ne.s32.totalorder %s167, %s169
      %p176 = scmp.eq.s32.totalorder %s23, 1
      %p177 = por %p175, %p176
      %p178 = scmp.ne.s32.totalorder %s169, %s170
      %p179 = scmp.eq.s32.totalorder %s23, 0
      %p180 = por %p178, %p179
      %p181 = scmp.ne.s32.totalorder %s169, %s170
      %p182 = scmp.eq.s32.totalorder %s24, 1
      %p183 = por %p181, %p182
      %p185 = scmp.ne.s32.totalorder %s170, %s184
      %p186 = scmp.eq.s32.totalorder %s24, 0
      %p187 = por %p185, %p186
      %s188 = ssub.s32 %s18, %s25
      %p189 = scmp.eq.s32.totalorder %s188, 0
      %s191 = sadd.s32 %s190, 1
      %s192 = scalar_select %p189, %s190, %s191
      %p195 = pneg %p189
      %p196 = scmp.eq.s32.totalorder %s18, 1
      %p197 = por %p195, %p196
      %p198 = scmp.ne.s32.totalorder %s190, %s193
      %p199 = scmp.eq.s32.totalorder %s18, 0
      %p200 = por %p198, %p199
      %p201 = scmp.ne.s32.totalorder %s190, %s193
      %p202 = scmp.eq.s32.totalorder %s23, 1
      %p203 = por %p201, %p202
      %p204 = scmp.ne.s32.totalorder %s193, %s194
      %p205 = scmp.eq.s32.totalorder %s23, 0
      %p206 = por %p204, %p205
      %p207 = scmp.ne.s32.totalorder %s193, %s194
      %p208 = scmp.eq.s32.totalorder %s24, 1
      %p209 = por %p207, %p208
      %p211 = scmp.ne.s32.totalorder %s194, %s210
      %p212 = scmp.eq.s32.totalorder %s24, 0
      %p213 = por %p211, %p212
      %p214 = scmp.le.s32.totalorder 1, %s18
      %p215 = scmp.lt.s32.totalorder %s18, 3
      %p216 = pnand %p214, %p215
      %p217 = pneg %p216
      // Predicated region
      $region9: #{tpu_custom_call.1} parent=5 // pred_check
        _
      $region10: #{tpu_custom_call.1} parent=5 // pred_check_branch
        %219 = sbr.rel (%p216) target = $region12
      $region11: #{tpu_custom_call.1} parent=5 // pred_region
        %s220 = ssub.s32 %s18, 1
        // Predicated region
        $region13: #{tpu_custom_call.1} parent=11 // pred_check
          %p221 = pneg %p117
        $region14: #{tpu_custom_call.1} parent=11 // pred_check_branch
          %223 = sbr.rel (%p221) target = $region16
        $region15: #{tpu_custom_call.1} parent=11 // pred_region
          _
        $region16: #{tpu_custom_call.1} parent=11 // pred_fallthru
          _
        // Predicated region
        $region17: #{tpu_custom_call.1} parent=11 // pred_check
          %p224 = pneg %p138
        $region18: #{tpu_custom_call.1} parent=11 // pred_check_branch
          %226 = sbr.rel (%p224) target = $region20
        $region19: #{tpu_custom_call.1} parent=11 // pred_region
          %s228 = ssub.s32 6144, 6144
          %229 = vsyncadd [#allocation3], %s228
          %s230 = sshll.u32 [#allocation2], 4
          %s231 = int_to_ptr.vmem [resolvable:$true] %s230
          %236 = dma.hbm_to_vmem [thread:$0]  %s4, 6144, %s231, [#allocation3], 128, 128, 8
        $region20: #{tpu_custom_call.1} parent=11 // pred_fallthru
          _
        // Predicated region
        $region21: #{tpu_custom_call.1} parent=11 // pred_check
          %p237 = pneg %p159
        $region22: #{tpu_custom_call.1} parent=11 // pred_check_branch
          %239 = sbr.rel (%p237) target = $region24
        $region23: #{tpu_custom_call.1} parent=11 // pred_region
          %s241 = ssub.s32 1920, 1920
          %242 = vsyncadd [#allocation6], %s241
          %s243 = sshll.u32 [#allocation5], 4
          %s244 = int_to_ptr.vmem [resolvable:$true] %s243
          %249 = dma.hbm_to_vmem [thread:$0]  %s5, 1920, %s244, [#allocation6], 384, 384, 24
        $region24: #{tpu_custom_call.1} parent=11 // pred_fallthru
          _
        // Predicated region
        $region25: #{tpu_custom_call.1} parent=11 // pred_check
          %p250 = pneg %p180
        $region26: #{tpu_custom_call.1} parent=11 // pred_check_branch
          %252 = sbr.rel (%p250) target = $region28
        $region27: #{tpu_custom_call.1} parent=11 // pred_region
          %s254 = ssub.s32 5632, 5632
          %255 = vsyncadd [#allocation6], %s254
          %s256 = sshll.u32 [#allocation7], 4
          %s257 = int_to_ptr.vmem [resolvable:$true] %s256
          %262 = dma.hbm_to_vmem [thread:$0]  %s6, 5632, %s257, [#allocation6], 128, 128, 8
        $region28: #{tpu_custom_call.1} parent=11 // pred_fallthru
          _
      $region12: #{tpu_custom_call.1} parent=5 // pred_fallthru
        _
      %p263 = scmp.lt.s32.totalorder %s18, 2
      // Predicated region
      $region29: #{tpu_custom_call.1} parent=5 // pred_check
        %p264 = pneg %p263
      $region30: #{tpu_custom_call.1} parent=5 // pred_check_branch
        %266 = sbr.rel (%p264) target = $region32
      $region31: #{tpu_custom_call.1} parent=5 // pred_region
        // Predicated region
        $region33: #{tpu_custom_call.1} parent=31 // pred_check
          %p267 = pneg %p38
        $region34: #{tpu_custom_call.1} parent=31 // pred_check_branch
          %269 = sbr.rel (%p267) target = $region36
        $region35: #{tpu_custom_call.1} parent=31 // pred_region
          %p270 = scmp.lt.s32.totalorder %s18, 1
          %s271 = scalar_select %p270, %s18, 1
          %s272 = smul.addr %s271, 8
          %s273 = scalar_lea.vmem %s0, %s272
        $region36: #{tpu_custom_call.1} parent=31 // pred_fallthru
          _
        // Predicated region
        $region37: #{tpu_custom_call.1} parent=31 // pred_check
          %p274 = pneg %p64
        $region38: #{tpu_custom_call.1} parent=31 // pred_check_branch
          %276 = sbr.rel (%p274) target = $region40
        $region39: #{tpu_custom_call.1} parent=31 // pred_region
          %p277 = scmp.lt.s32.totalorder %s18, 1
          %s278 = scalar_select %p277, %s18, 1
          %s279 = smul.addr %s278, 2
          %s280 = smul.addr %s279, 8
          %s281 = scalar_lea.vmem %s1, %s280
        $region40: #{tpu_custom_call.1} parent=31 // pred_fallthru
          _
        // Predicated region
        $region41: #{tpu_custom_call.1} parent=31 // pred_check
          %p282 = pneg %p90
        $region42: #{tpu_custom_call.1} parent=31 // pred_check_branch
          %284 = sbr.rel (%p282) target = $region44
        $region43: #{tpu_custom_call.1} parent=31 // pred_region
          %s285 = smul.u32 16, %s18
          %p286 = scmp.lt.s32.totalorder %s285, 31
          %s287 = scalar_select %p286, %s285, 31
          %s288 = smul.addr %s287, 8
          %s289 = scalar_lea.vmem %s2, %s288
          %s290 = smul.u32 16, %s18
        $region44: #{tpu_custom_call.1} parent=31 // pred_fallthru
          _
      $region32: #{tpu_custom_call.1} parent=5 // pred_fallthru
        _
      %p291 = scmp.le.s32.totalorder 1, %s18
      %p292 = scmp.lt.s32.totalorder %s18, 3
      %p293 = pnand %p291, %p292
      %p294 = pneg %p293
      // Predicated region
      $region45: #{tpu_custom_call.1} parent=5 // pred_check
        _
      $region46: #{tpu_custom_call.1} parent=5 // pred_check_branch
        %296 = sbr.rel (%p293) target = $region48
      $region47: #{tpu_custom_call.1} parent=5 // pred_region
        %s297 = ssub.s32 %s18, 1
        // Predicated region
        $region49: #{tpu_custom_call.1} parent=47 // pred_check
          %p298 = pneg %p138
        $region50: #{tpu_custom_call.1} parent=47 // pred_check_branch
          %300 = sbr.rel (%p298) target = $region52
        $region51: #{tpu_custom_call.1} parent=47 // pred_region
          %301 = dma.done [#allocation3], 6144
        $region52: #{tpu_custom_call.1} parent=47 // pred_fallthru
          _
        // Predicated region
        $region53: #{tpu_custom_call.1} parent=47 // pred_check
          %p302 = pneg %p159
        $region54: #{tpu_custom_call.1} parent=47 // pred_check_branch
          %304 = sbr.rel (%p302) target = $region56
        $region55: #{tpu_custom_call.1} parent=47 // pred_region
          %305 = dma.done [#allocation6], 1920
        $region56: #{tpu_custom_call.1} parent=47 // pred_fallthru
          _
        // Predicated region
        $region57: #{tpu_custom_call.1} parent=47 // pred_check
          %p306 = pneg %p180
        $region58: #{tpu_custom_call.1} parent=47 // pred_check_branch
          %308 = sbr.rel (%p306) target = $region60
        $region59: #{tpu_custom_call.1} parent=47 // pred_region
          %309 = dma.done [#allocation6], 5632
        $region60: #{tpu_custom_call.1} parent=47 // pred_fallthru
          _
        %p310 = scmp.lt.s32.totalorder %s23, 1
        %s311 = scalar_select %p310, %s23, 1
        %s312 = smul.addr %s311, 8
        %s313 = scalar_lea.vmem %s0, %s312
        %p314 = pneg %p44
        %p315 = pneg %p41
        %p316 = scmp.lt.s32.totalorder %s23, 1
        %s317 = scalar_select %p316, %s23, 1
        %s318 = smul.addr %s317, 2
        %s319 = smul.addr %s318, 8
        %s320 = scalar_lea.vmem %s1, %s319
        %p321 = pneg %p70
        %p322 = pneg %p67
        %s323 = smul.u32 16, %s23
        %p324 = scmp.lt.s32.totalorder %s323, 31
        %s325 = scalar_select %p324, %s323, 31
        %s326 = smul.addr %s325, 8
        %s327 = scalar_lea.vmem %s2, %s326
        %p328 = pneg %p96
        %p329 = pneg %p93
        %p330 = pneg %p117
        %p331 = pneg %p114
        %p332 = pneg %p138
        %p333 = pneg %p135
        %p334 = pneg %p159
        %p335 = pneg %p156
        %p336 = pneg %p180
        %p337 = pneg %p177
        %p338 = pneg %p206
        %p339 = pneg %p203
        %s340 = sand.u32 %s193, 1
        %s341 = scalar_lea.sflag [#allocation4], %s340
        %s342 = sand.u32 %s193, 1
        %s343 = smul.addr %s342, 8
        %s344 = scalar_lea.vmem [#allocation8], %s343
        %p345 = scmp.lt.s32.totalorder %s23, 1
        %s346 = scalar_select %p345, %s23, 1
        %s347 = smul.addr %s346, 8
        %s348 = scalar_lea.vmem %s0, %s347
        %p349 = scmp.lt.s32.totalorder %s23, 1
        %s350 = scalar_select %p349, %s23, 1
        %s351 = smul.addr %s350, 2
        %s352 = smul.addr %s351, 8
        %s353 = scalar_lea.vmem %s1, %s352
        %s354 = smul.u32 16, %s23
        %p355 = scmp.lt.s32.totalorder %s354, 31
        %s356 = scalar_select %p355, %s354, 31
        %s357 = smul.addr %s356, 8
        %s358 = scalar_lea.vmem %s2, %s357
        %s359 = smul.u32 16, %s23
        %v361 = vld [vmem:[#allocation7] sm:$0xff]
        %v362 = vld [vmem:[#allocation7 + $0x8] sm:$0xff]
        %v363 = vld [vmem:[#allocation7 + $0x10] sm:$0xff]
        %v364 = vld [vmem:[#allocation7 + $0x18] sm:$0xff]
        %v365 = vld [vmem:[#allocation7 + $0x20] sm:$0xff]
        %v366 = vld [vmem:[#allocation7 + $0x28] sm:$0xff]
        %v367 = vld [vmem:[#allocation7 + $0x30] sm:$0xff]
        %v368 = vld [vmem:[#allocation7 + $0x38] sm:$0xff]
        %v369 = vld [vmem:[#allocation7 + $0x40] sm:$0xff]
        %v370 = vld [vmem:[#allocation7 + $0x48] sm:$0xff]
        %v371 = vld [vmem:[#allocation7 + $0x50] sm:$0xff]
        %v372 = vld [vmem:[#allocation7 + $0x58] sm:$0xff]
        %v373 = vld [vmem:[#allocation7 + $0x60] sm:$0xff]
        %v374 = vld [vmem:[#allocation7 + $0x68] sm:$0xff]
        %v375 = vld [vmem:[#allocation7 + $0x70] sm:$0xff]
        %v376 = vld [vmem:[#allocation7 + $0x78] sm:$0xff]
        %v377 = vld [vmem:[#allocation7 + $0x80] sm:$0xff]
        %v378 = vld [vmem:[#allocation7 + $0x88] sm:$0xff]
        %v379 = vld [vmem:[#allocation7 + $0x90] sm:$0xff]
        %v380 = vld [vmem:[#allocation7 + $0x98] sm:$0xff]
        %v381 = vld [vmem:[#allocation7 + $0xa0] sm:$0xff]
        %v382 = vld [vmem:[#allocation7 + $0xa8] sm:$0xff]
        %v383 = vld [vmem:[#allocation7 + $0xb0] sm:$0xff]
        %v384 = vld [vmem:[#allocation7 + $0xb8] sm:$0xff]
        %v385 = vld [vmem:[#allocation7 + $0xc0] sm:$0xff]
        %v386 = vld [vmem:[#allocation7 + $0xc8] sm:$0xff]
        %v387 = vld [vmem:[#allocation7 + $0xd0] sm:$0xff]
        %v388 = vld [vmem:[#allocation7 + $0xd8] sm:$0xff]
        %v389 = vld [vmem:[#allocation7 + $0xe0] sm:$0xff]
        %v390 = vld [vmem:[#allocation7 + $0xe8] sm:$0xff]
        %v391 = vld [vmem:[#allocation7 + $0xf0] sm:$0xff]
        %v392 = vld [vmem:[#allocation7 + $0xf8] sm:$0xff]
        %v393 = vld [vmem:[#allocation7 + $0x100] sm:$0x1]
        %v394 = vld [vmem:[#allocation7 + $0x108] sm:$0x1]
        %v395 = vld [vmem:[#allocation7 + $0x110] sm:$0x1]
        %v396 = vld [vmem:[#allocation7 + $0x118] sm:$0x1]
        %v397 = vld [vmem:[#allocation7 + $0x120] sm:$0x1]
        %v398 = vld [vmem:[#allocation7 + $0x128] sm:$0x1]
        %v399 = vld [vmem:[#allocation7 + $0x130] sm:$0x1]
        %v400 = vld [vmem:[#allocation7 + $0x138] sm:$0x1]
        %v401 = vld [vmem:[#allocation7 + $0x140] sm:$0x1]
        %v402 = vld [vmem:[#allocation7 + $0x148] sm:$0x1]
        %v403 = vld [vmem:[#allocation7 + $0x150] sm:$0x1]
        %v404 = vld [vmem:[#allocation7 + $0x158] sm:$0x1]
        %v405 = vld [vmem:[%s348] sm:$0xff]
        %v406 = vld [vmem:[%s353] sm:$0xff]
        %v407 = vld [vmem:[%s353 + $0x8] sm:$0xff]
        %v408 = vld [vmem:[%s3] sm:$0xff]
        %v409 = vld [vmem:[%s3 + $0x8] sm:$0xff]
        %v410 = vld [vmem:[%s3 + $0x10] sm:$0xff]
        %v411 = vld [vmem:[%s3 + $0x18] sm:$0xff]
        %v412 = vld [vmem:[%s3 + $0x20] sm:$0xff]
        %v413 = vld [vmem:[%s3 + $0x28] sm:$0xff]
        %v414 = vld [vmem:[%s3 + $0x30] sm:$0xff]
        %v415 = vld [vmem:[%s3 + $0x38] sm:$0xff]
        %v416 = vld [vmem:[%s3 + $0x40] sm:$0xff]
        %v417 = vld [vmem:[%s3 + $0x48] sm:$0xff]
        %v418 = vld [vmem:[%s3 + $0x50] sm:$0xff]
        %v419 = vld [vmem:[%s3 + $0x58] sm:$0xff]
        %v420 = vld [vmem:[%s3 + $0x60] sm:$0xff]
        %v421 = vld [vmem:[%s3 + $0x68] sm:$0xff]
        %v422 = vld [vmem:[%s3 + $0x70] sm:$0xff]
        %v423 = vld [vmem:[%s3 + $0x78] sm:$0xff]
        %v424 = vld [vmem:[%s3 + $0x80] sm:$0xff]
        %v425 = vld [vmem:[%s3 + $0x88] sm:$0xff]
        %v426 = vld [vmem:[%s3 + $0x90] sm:$0xff]
        %v427 = vld [vmem:[%s3 + $0x98] sm:$0xff]
        %v428 = vld [vmem:[%s3 + $0xa0] sm:$0xff]
        %v429 = vld [vmem:[%s3 + $0xa8] sm:$0xff]
        %v430 = vld [vmem:[%s3 + $0xb0] sm:$0xff]
        %v431 = vld [vmem:[%s3 + $0xb8] sm:$0xff]
        %v432 = vld [vmem:[%s3 + $0xc0] sm:$0xff]
        %v433 = vld [vmem:[%s3 + $0xc8] sm:$0xff]
        %v434 = vld [vmem:[%s3 + $0xd0] sm:$0xff]
        %v435 = vld [vmem:[%s3 + $0xd8] sm:$0xff]
        %v436 = vld [vmem:[%s3 + $0xe0] sm:$0xff]
        %v437 = vld [vmem:[%s3 + $0xe8] sm:$0xff]
        %v438 = vld [vmem:[%s3 + $0xf0] sm:$0xff]
        %v439 = vld [vmem:[%s3 + $0xf8] sm:$0xff]
        %v440 = vld [vmem:[#allocation2] sm:$0xff]
        %v441 = vld [vmem:[#allocation2 + $0x8] sm:$0xff]
        %v442 = vld [vmem:[#allocation2 + $0x10] sm:$0xff]
        %v443 = vld [vmem:[#allocation2 + $0x18] sm:$0xff]
        %v444 = vld [vmem:[#allocation2 + $0x20] sm:$0xff]
        %v445 = vld [vmem:[#allocation2 + $0x28] sm:$0xff]
        %v446 = vld [vmem:[#allocation2 + $0x30] sm:$0xff]
        %v447 = vld [vmem:[#allocation2 + $0x38] sm:$0xff]
        %v448 = vld [vmem:[#allocation2 + $0x40] sm:$0xff]
        %v449 = vld [vmem:[#allocation2 + $0x48] sm:$0xff]
        %v450 = vld [vmem:[#allocation2 + $0x50] sm:$0xff]
        %v451 = vld [vmem:[#allocation2 + $0x58] sm:$0xff]
        %v452 = vld [vmem:[#allocation2 + $0x60] sm:$0xff]
        %v453 = vld [vmem:[#allocation2 + $0x68] sm:$0xff]
        %v454 = vld [vmem:[#allocation2 + $0x70] sm:$0xff]
        %v455 = vld [vmem:[#allocation2 + $0x78] sm:$0xff]
        %v456 = vld [vmem:[#allocation2 + $0x80] sm:$0xff]
        %v457 = vld [vmem:[#allocation2 + $0x88] sm:$0xff]
        %v458 = vld [vmem:[#allocation2 + $0x90] sm:$0xff]
        %v459 = vld [vmem:[#allocation2 + $0x98] sm:$0xff]
        %v460 = vld [vmem:[#allocation2 + $0xa0] sm:$0xff]
        %v461 = vld [vmem:[#allocation2 + $0xa8] sm:$0xff]
        %v462 = vld [vmem:[#allocation2 + $0xb0] sm:$0xff]
        %v463 = vld [vmem:[#allocation2 + $0xb8] sm:$0xff]
        %v464 = vld [vmem:[#allocation2 + $0xc0] sm:$0xff]
        %v465 = vld [vmem:[#allocation2 + $0xc8] sm:$0xff]
        %v466 = vld [vmem:[#allocation2 + $0xd0] sm:$0xff]
        %v467 = vld [vmem:[#allocation2 + $0xd8] sm:$0xff]
        %v468 = vld [vmem:[#allocation2 + $0xe0] sm:$0xff]
        %v469 = vld [vmem:[#allocation2 + $0xe8] sm:$0xff]
        %v470 = vld [vmem:[#allocation2 + $0xf0] sm:$0xff]
        %v471 = vld [vmem:[#allocation2 + $0xf8] sm:$0xff]
        %v472 = vld [vmem:[#allocation2 + $0x100] sm:$0xff]
        %v473 = vld [vmem:[#allocation2 + $0x108] sm:$0xff]
        %v474 = vld [vmem:[#allocation2 + $0x110] sm:$0xff]
        %v475 = vld [vmem:[#allocation2 + $0x118] sm:$0xff]
        %v476 = vld [vmem:[#allocation2 + $0x120] sm:$0xff]
        %v477 = vld [vmem:[#allocation2 + $0x128] sm:$0xff]
        %v478 = vld [vmem:[#allocation2 + $0x130] sm:$0xff]
        %v479 = vld [vmem:[#allocation2 + $0x138] sm:$0xff]
        %v480 = vld [vmem:[#allocation2 + $0x140] sm:$0xff]
        %v481 = vld [vmem:[#allocation2 + $0x148] sm:$0xff]
        %v482 = vld [vmem:[#allocation2 + $0x150] sm:$0xff]
        %v483 = vld [vmem:[#allocation2 + $0x158] sm:$0xff]
        %v484 = vld [vmem:[#allocation2 + $0x160] sm:$0xff]
        %v485 = vld [vmem:[#allocation2 + $0x168] sm:$0xff]
        %v486 = vld [vmem:[#allocation2 + $0x170] sm:$0xff]
        %v487 = vld [vmem:[#allocation2 + $0x178] sm:$0xff]
        %v488 = vld [vmem:[#allocation5] sm:$0xff]
        %v489 = vld [vmem:[#allocation5 + $0x8] sm:$0xff]
        %v490 = vld [vmem:[#allocation5 + $0x10] sm:$0xff]
        %v491 = vld [vmem:[#allocation5 + $0x18] sm:$0xff]
        %v492 = vld [vmem:[#allocation5 + $0x20] sm:$0xff]
        %v493 = vld [vmem:[#allocation5 + $0x28] sm:$0xff]
        %v494 = vld [vmem:[#allocation5 + $0x30] sm:$0xff]
        %v495 = vld [vmem:[#allocation5 + $0x38] sm:$0xff]
        %v496 = vld [vmem:[#allocation5 + $0x40] sm:$0xff]
        %v497 = vld [vmem:[#allocation5 + $0x48] sm:$0xff]
        %v498 = vld [vmem:[#allocation5 + $0x50] sm:$0xff]
        %v499 = vld [vmem:[#allocation5 + $0x58] sm:$0xff]
        %s500 = scalar_lea.vmem [#allocation5], 96
        %v501 = vld [vmem:[%s500] ss:$8 sm:$0x7]
        %503 = vrot.lane.b32.xlu0 %v405, 96
        %v504 = vpop.permute.xlu0 %503
        %v506 = vadd.f32 %v405, %v504
        %v507 = vld [vmem:[%s358] sm:$0xff]
        %v508 = vld [vmem:[%s358 + $0x8] sm:$0xff]
        %v509 = vld [vmem:[%s358 + $0x10] sm:$0xff]
        %v510 = vld [vmem:[%s358 + $0x18] sm:$0xff]
        %v511 = vld [vmem:[%s358 + $0x20] sm:$0xff]
        %v512 = vld [vmem:[%s358 + $0x28] sm:$0xff]
        %v513 = vld [vmem:[%s358 + $0x30] sm:$0xff]
        %v514 = vld [vmem:[%s358 + $0x38] sm:$0xff]
        %v515 = vld [vmem:[%s358 + $0x40] sm:$0xff]
        %v516 = vld [vmem:[%s358 + $0x48] sm:$0xff]
        %v517 = vld [vmem:[%s358 + $0x50] sm:$0xff]
        %v518 = vld [vmem:[%s358 + $0x58] sm:$0xff]
        %v519 = vld [vmem:[%s358 + $0x60] sm:$0xff]
        %v520 = vld [vmem:[%s358 + $0x68] sm:$0xff]
        %v521 = vld [vmem:[%s358 + $0x70] sm:$0xff]
        %v522 = vld [vmem:[%s358 + $0x78] sm:$0xff]
        %v523 = vlaneseq
        %v524 = vshrl.u32 %v523, 7
        %v525 = vsub.s32 0, %v524
        %v526 = vrot.slane %v393, %v525
        %vm527 = vcmask 261120
        %v529 = vsel %vm527, %v507, 0
        %v532 = vsel %vm527, %v508, 0
        %v535 = vsel %vm527, %v509, 0
        %v538 = vsel %vm527, %v510, 0
        %v541 = vsel %vm527, %v511, 0
        %v544 = vsel %vm527, %v512, 0
        %v547 = vsel %vm527, %v513, 0
        %v550 = vsel %vm527, %v514, 0
        %v553 = vsel %vm527, %v515, 0
        %v556 = vsel %vm527, %v516, 0
        %v559 = vsel %vm527, %v517, 0
        %v562 = vsel %vm527, %v518, 0
        %v565 = vsel %vm527, %v519, 0
        %v568 = vsel %vm527, %v520, 0
        %v571 = vsel %vm527, %v521, 0
        %v574 = vsel %vm527, %v522, 0
        %576 = vmatprep.subr.mxu0 0.0
        %577 = vmatpush1.msra.mxu0 %v361
        %578 = vmatprep.subr.mxu0 0.0
        %579 = vmatpush1.msra.mxu0 %v362
        %580 = vmatprep.subr.mxu0 0.0
        %581 = vmatpush1.msra.mxu0 %v363
        %582 = vmatprep.subr.mxu0 0.0
        %583 = vmatpush1.msra.mxu0 %v364
        %584 = vmatprep.subr.mxu0 0.0
        %585 = vmatpush1.msra.mxu0 0.0
        %586 = vmatprep.subr.mxu0 0.0
        %587 = vmatpush1.msra.mxu0 0.0
        %588 = vmatprep.subr.mxu0 0.0
        %589 = vmatpush1.msra.mxu0 0.0
        %590 = vmatprep.subr.mxu0 0.0
        %591 = vmatpush1.msra.mxu0 0.0
        %592 = vmatprep.subr.mxu0 0.0
        %593 = vmatpush1.msra.mxu0 0.0
        %594 = vmatprep.subr.mxu0 0.0
        %595 = vmatpush1.msra.mxu0 0.0
        %596 = vmatprep.subr.mxu0 0.0
        %597 = vmatpush1.msra.mxu0 0.0
        %598 = vmatprep.subr.mxu0 0.0
        %599 = vmatpush1.msra.mxu0 0.0
        %600 = vmatprep.subr.mxu0 0.0
        %601 = vmatpush1.msra.mxu0 0.0
        %602 = vmatprep.subr.mxu0 0.0
        %603 = vmatpush1.msra.mxu0 0.0
        %604 = vmatprep.subr.mxu0 0.0
        %605 = vmatpush1.msra.mxu0 0.0
        %606 = vmatprep.subr.mxu0 0.0
        %607 = vmatpush1.msra.mxu0 0.0
        %608 = vmatprep.subr.mxu0 0.0
        %609 = vmatpush1.msra.mxu0 0.0
        %610 = vmatprep.subr.mxu0 0.0
        %611 = vmatpush1.msra.mxu0 0.0
        %612 = vmatprep.subr.mxu0 0.0
        %613 = vmatpush1.msra.mxu0 0.0
        %614 = vmatprep.subr.mxu0 0.0
        %615 = vmatpush1.msra.mxu0 0.0
        %616 = vmatprep.subr.mxu0 0.0
        %617 = vmatpush1.msra.mxu0 0.0
        %618 = vmatprep.subr.mxu0 0.0
        %619 = vmatpush1.msra.mxu0 0.0
        %620 = vmatprep.subr.mxu0 0.0
        %621 = vmatpush1.msra.mxu0 0.0
        %622 = vmatprep.subr.mxu0 0.0
        %623 = vmatpush1.msra.mxu0 0.0
        %624 = vmatprep.subr.mxu0 0.0
        %625 = vmatpush1.msra.mxu0 0.0
        %626 = vmatprep.subr.mxu0 0.0
        %627 = vmatpush1.msra.mxu0 0.0
        %628 = vmatprep.subr.mxu0 0.0
        %629 = vmatpush1.msra.mxu0 0.0
        %630 = vmatprep.subr.mxu0 0.0
        %631 = vmatpush1.msra.mxu0 0.0
        %632 = vmatprep.subr.mxu0 0.0
        %633 = vmatpush1.msra.mxu0 0.0
        %634 = vmatprep.subr.mxu0 0.0
        %635 = vmatpush1.msra.mxu0 0.0
        %636 = vmatprep.subr.mxu0 0.0
        %637 = vmatpush1.msra.mxu0 0.0
        %638 = vmatprep.subr.mxu0 0.0
        %639 = vmatpush1.msra.mxu0 0.0
        %640 = vmatprep.mubr.f32.mxu0 0.0
        %641 = vmatmul.mubr.f32.gmra.mrb[0].mxu0 %v529
        %v642 = vpop.f32.mrb[0].mxu0
        %v643 = vadd.f32 %v526, %v642
        %v644 = vpop.f32.mrb[0].mxu0
        %645 = vmatprep.mubr.f32.mxu0 0.0
        %646 = vmatmul.mubr.f32.gmra.mrb[0].mxu0 %v532
        %v647 = vpop.f32.mrb[0].mxu0
        %v648 = vadd.f32 %v526, %v647
        %v649 = vpop.f32.mrb[0].mxu0
        %650 = vmatprep.mubr.f32.mxu0 0.0
        %651 = vmatmul.mubr.f32.gmra.mrb[0].mxu0 %v535
        %v652 = vpop.f32.mrb[0].mxu0
        %v653 = vadd.f32 %v526, %v652
        %v654 = vpop.f32.mrb[0].mxu0
        %655 = vmatprep.mubr.f32.mxu0 0.0
        %656 = vmatmul.mubr.f32.gmra.mrb[0].mxu0 %v538
        %v657 = vpop.f32.mrb[0].mxu0
        %v658 = vadd.f32 %v526, %v657
        %v659 = vpop.f32.mrb[0].mxu0
        %660 = vmatprep.mubr.f32.mxu0 0.0
        %661 = vmatmul.mubr.f32.gmra.mrb[0].mxu0 %v541
        %v662 = vpop.f32.mrb[0].mxu0
        %v663 = vadd.f32 %v526, %v662
        %v664 = vpop.f32.mrb[0].mxu0
        %665 = vmatprep.mubr.f32.mxu0 0.0
        %666 = vmatmul.mubr.f32.gmra.mrb[0].mxu0 %v544
        %v667 = vpop.f32.mrb[0].mxu0
        %v668 = vadd.f32 %v526, %v667
        %v669 = vpop.f32.mrb[0].mxu0
        %670 = vmatprep.mubr.f32.mxu0 0.0
        %671 = vmatmul.mubr.f32.gmra.mrb[0].mxu0 %v547
        %v672 = vpop.f32.mrb[0].mxu0
        %v673 = vadd.f32 %v526, %v672
        %v674 = vpop.f32.mrb[0].mxu0
        %675 = vmatprep.mubr.f32.mxu0 0.0
        %676 = vmatmul.mubr.f32.gmra.mrb[0].mxu0 %v550
        %v677 = vpop.f32.mrb[0].mxu0
        %v678 = vadd.f32 %v526, %v677
        %v679 = vpop.f32.mrb[0].mxu0
        %680 = vmatprep.mubr.f32.mxu0 0.0
        %681 = vmatmul.mubr.f32.gmra.mrb[0].mxu0 %v553
        %v682 = vpop.f32.mrb[0].mxu0
        %v683 = vadd.f32 %v526, %v682
        %v684 = vpop.f32.mrb[0].mxu0
        %685 = vmatprep.mubr.f32.mxu0 0.0
        %686 = vmatmul.mubr.f32.gmra.mrb[0].mxu0 %v556
        %v687 = vpop.f32.mrb[0].mxu0
        %v688 = vadd.f32 %v526, %v687
        %v689 = vpop.f32.mrb[0].mxu0
        %690 = vmatprep.mubr.f32.mxu0 0.0
        %691 = vmatmul.mubr.f32.gmra.mrb[0].mxu0 %v559
        %v692 = vpop.f32.mrb[0].mxu0
        %v693 = vadd.f32 %v526, %v692
        %v694 = vpop.f32.mrb[0].mxu0
        %695 = vmatprep.mubr.f32.mxu0 0.0
        %696 = vmatmul.mubr.f32.gmra.mrb[0].mxu0 %v562
        %v697 = vpop.f32.mrb[0].mxu0
        %v698 = vadd.f32 %v526, %v697
        %v699 = vpop.f32.mrb[0].mxu0
        %700 = vmatprep.mubr.f32.mxu0 0.0
        %701 = vmatmul.mubr.f32.gmra.mrb[0].mxu0 %v565
        %v702 = vpop.f32.mrb[0].mxu0
        %v703 = vadd.f32 %v526, %v702
        %v704 = vpop.f32.mrb[0].mxu0
        %705 = vmatprep.mubr.f32.mxu0 0.0
        %706 = vmatmul.mubr.f32.gmra.mrb[0].mxu0 %v568
        %v707 = vpop.f32.mrb[0].mxu0
        %v708 = vadd.f32 %v526, %v707
        %v709 = vpop.f32.mrb[0].mxu0
        %710 = vmatprep.mubr.f32.mxu0 0.0
        %711 = vmatmul.mubr.f32.gmra.mrb[0].mxu0 %v571
        %v712 = vpop.f32.mrb[0].mxu0
        %v713 = vadd.f32 %v526, %v712
        %v714 = vpop.f32.mrb[0].mxu0
        %715 = vmatprep.mubr.f32.mxu0 0.0
        %716 = vmatmul.mubr.f32.gmra.mrb[0].mxu0 %v574
        %v717 = vpop.f32.mrb[0].mxu0
        %v718 = vadd.f32 %v526, %v717
        %v719 = vpop.f32.mrb[0].mxu0
        %720 = vdwg.mxu0
        %v721 = vpack.c.bf16 %v648, %v643
        %v722 = vpack.c.bf16 %v658, %v653
        %v723 = vpack.c.bf16 %v668, %v663
        %v724 = vpack.c.bf16 %v678, %v673
        %v725 = vpack.c.bf16 %v688, %v683
        %v726 = vpack.c.bf16 %v698, %v693
        %v727 = vpack.c.bf16 %v708, %v703
        %v728 = vpack.c.bf16 %v718, %v713
        %v730 = vlaneseq
        %v731 = vshrl.u32 %v730, 7
        %v732 = vsub.s32 0, %v731
        %v733 = vrot.slane %v501, %v732
        %v734 = vlaneseq
        %v735 = vshrl.u32 %v734, 7
        %v736 = vsub.s32 1, %v735
        %v737 = vrot.slane %v501, %v736
        %v738 = vlaneseq
        %v739 = vshrl.u32 %v738, 7
        %v740 = vsub.s32 2, %v739
        %v741 = vrot.slane %v501, %v740
        %v746 = vsel %vm527, %v506, 0
        %748 = vmatprep.subr.mxu0 %v489
        %749 = vmatpush1.msra.mxu0 %v488
        %750 = vmatprep.subr.mxu0 %v492
        %751 = vmatpush1.msra.mxu0 %v491
        %752 = vmatprep.subr.mxu0 %v495
        %753 = vmatpush1.msra.mxu0 %v494
        %754 = vmatprep.subr.mxu0 %v498
        %755 = vmatpush1.msra.mxu0 %v497
        %756 = vmatprep.subr.mxu0 0.0
        %757 = vmatpush1.msra.mxu0 0.0
        %758 = vmatprep.subr.mxu0 0.0
        %759 = vmatpush1.msra.mxu0 0.0
        %760 = vmatprep.subr.mxu0 0.0
        %761 = vmatpush1.msra.mxu0 0.0
        %762 = vmatprep.subr.mxu0 0.0
        %763 = vmatpush1.msra.mxu0 0.0
        %764 = vmatprep.subr.mxu0 0.0
        %765 = vmatpush1.msra.mxu0 0.0
        %766 = vmatprep.subr.mxu0 0.0
        %767 = vmatpush1.msra.mxu0 0.0
        %768 = vmatprep.subr.mxu0 0.0
        %769 = vmatpush1.msra.mxu0 0.0
        %770 = vmatprep.subr.mxu0 0.0
        %771 = vmatpush1.msra.mxu0 0.0
        %772 = vmatprep.subr.mxu0 0.0
        %773 = vmatpush1.msra.mxu0 0.0
        %774 = vmatprep.subr.mxu0 0.0
        %775 = vmatpush1.msra.mxu0 0.0
        %776 = vmatprep.subr.mxu0 0.0
        %777 = vmatpush1.msra.mxu0 0.0
        %778 = vmatprep.subr.mxu0 0.0
        %779 = vmatpush1.msra.mxu0 0.0
        %780 = vmatprep.subr.mxu0 0.0
        %781 = vmatpush1.msra.mxu0 0.0
        %782 = vmatprep.subr.mxu0 0.0
        %783 = vmatpush1.msra.mxu0 0.0
        %784 = vmatprep.subr.mxu0 0.0
        %785 = vmatpush1.msra.mxu0 0.0
        %786 = vmatprep.subr.mxu0 0.0
        %787 = vmatpush1.msra.mxu0 0.0
        %788 = vmatprep.subr.mxu0 0.0
        %789 = vmatpush1.msra.mxu0 0.0
        %790 = vmatprep.subr.mxu0 0.0
        %791 = vmatpush1.msra.mxu0 0.0
        %792 = vmatprep.subr.mxu0 0.0
        %793 = vmatpush1.msra.mxu0 0.0
        %794 = vmatprep.subr.mxu0 0.0
        %795 = vmatpush1.msra.mxu0 0.0
        %796 = vmatprep.subr.mxu0 0.0
        %797 = vmatpush1.msra.mxu0 0.0
        %798 = vmatprep.subr.mxu0 0.0
        %799 = vmatpush1.msra.mxu0 0.0
        %800 = vmatprep.subr.mxu0 0.0
        %801 = vmatpush1.msra.mxu0 0.0
        %802 = vmatprep.subr.mxu0 0.0
        %803 = vmatpush1.msra.mxu0 0.0
        %804 = vmatprep.subr.mxu0 0.0
        %805 = vmatpush1.msra.mxu0 0.0
        %806 = vmatprep.subr.mxu0 0.0
        %807 = vmatpush1.msra.mxu0 0.0
        %808 = vmatprep.subr.mxu0 0.0
        %809 = vmatpush1.msra.mxu0 0.0
        %810 = vmatprep.subr.mxu0 0.0
        %811 = vmatpush1.msra.mxu0 0.0
        %812 = vmatprep.mubr.f32.mxu0 0.0
        %813 = vmatmul.mubr.f32.gmra.mrb[0].mxu0 %v746
        %v814 = vpop.f32.mrb[0].mxu0
        %v815 = vadd.f32 %v733, %v814
        %v816 = vpop.f32.mrb[0].mxu0
        %v817 = vadd.f32 %v737, %v816
        %818 = vdwg.mxu0
        %819 = vmatprep.subr.mxu0 0.0
        %820 = vmatpush1.msra.mxu0 %v490
        %821 = vmatprep.subr.mxu0 0.0
        %822 = vmatpush1.msra.mxu0 %v493
        %823 = vmatprep.subr.mxu0 0.0
        %824 = vmatpush1.msra.mxu0 %v496
        %825 = vmatprep.subr.mxu0 0.0
        %826 = vmatpush1.msra.mxu0 %v499
        %827 = vmatprep.subr.mxu0 0.0
        %828 = vmatpush1.msra.mxu0 0.0
        %829 = vmatprep.subr.mxu0 0.0
        %830 = vmatpush1.msra.mxu0 0.0
        %831 = vmatprep.subr.mxu0 0.0
        %832 = vmatpush1.msra.mxu0 0.0
        %833 = vmatprep.subr.mxu0 0.0
        %834 = vmatpush1.msra.mxu0 0.0
        %835 = vmatprep.subr.mxu0 0.0
        %836 = vmatpush1.msra.mxu0 0.0
        %837 = vmatprep.subr.mxu0 0.0
        %838 = vmatpush1.msra.mxu0 0.0
        %839 = vmatprep.subr.mxu0 0.0
        %840 = vmatpush1.msra.mxu0 0.0
        %841 = vmatprep.subr.mxu0 0.0
        %842 = vmatpush1.msra.mxu0 0.0
        %843 = vmatprep.subr.mxu0 0.0
        %844 = vmatpush1.msra.mxu0 0.0
        %845 = vmatprep.subr.mxu0 0.0
        %846 = vmatpush1.msra.mxu0 0.0
        %847 = vmatprep.subr.mxu0 0.0
        %848 = vmatpush1.msra.mxu0 0.0
        %849 = vmatprep.subr.mxu0 0.0
        %850 = vmatpush1.msra.mxu0 0.0
        %851 = vmatprep.subr.mxu0 0.0
        %852 = vmatpush1.msra.mxu0 0.0
        %853 = vmatprep.subr.mxu0 0.0
        %854 = vmatpush1.msra.mxu0 0.0
        %855 = vmatprep.subr.mxu0 0.0
        %856 = vmatpush1.msra.mxu0 0.0
        %857 = vmatprep.subr.mxu0 0.0
        %858 = vmatpush1.msra.mxu0 0.0
        %859 = vmatprep.subr.mxu0 0.0
        %860 = vmatpush1.msra.mxu0 0.0
        %861 = vmatprep.subr.mxu0 0.0
        %862 = vmatpush1.msra.mxu0 0.0
        %863 = vmatprep.subr.mxu0 0.0
        %864 = vmatpush1.msra.mxu0 0.0
        %865 = vmatprep.subr.mxu0 0.0
        %866 = vmatpush1.msra.mxu0 0.0
        %867 = vmatprep.subr.mxu0 0.0
        %868 = vmatpush1.msra.mxu0 0.0
        %869 = vmatprep.subr.mxu0 0.0
        %870 = vmatpush1.msra.mxu0 0.0
        %871 = vmatprep.subr.mxu0 0.0
        %872 = vmatpush1.msra.mxu0 0.0
        %873 = vmatprep.subr.mxu0 0.0
        %874 = vmatpush1.msra.mxu0 0.0
        %875 = vmatprep.subr.mxu0 0.0
        %876 = vmatpush1.msra.mxu0 0.0
        %877 = vmatprep.subr.mxu0 0.0
        %878 = vmatpush1.msra.mxu0 0.0
        %879 = vmatprep.subr.mxu0 0.0
        %880 = vmatpush1.msra.mxu0 0.0
        %881 = vmatprep.subr.mxu0 0.0
        %882 = vmatpush1.msra.mxu0 0.0
        %883 = vmatprep.mubr.f32.mxu0 0.0
        %884 = vmatmul.mubr.f32.gmra.mrb[0].mxu0 %v746
        %v885 = vpop.f32.mrb[0].mxu0
        %v886 = vadd.f32 %v741, %v885
        %v887 = vpop.f32.mrb[0].mxu0
        %888 = vdwg.mxu0
        %889 = vmax.xlane.f32.xlu0 %v886
        %v890 = vpop.xlane.xlu0 %889
        %v891 = vsub.f32 %v886, %v890
        %v892 = vmul.f32 %v891, 1.442695
        %v893 = vpow.pop %v892
        %894 = vmatprep.subr.mxu0 0.0
        %895 = vmatpush1.msra.mxu0 %v440
        %896 = vmatprep.subr.mxu0 0.0
        %897 = vmatpush1.msra.mxu0 %v441
        %898 = vmatprep.subr.mxu0 0.0
        %899 = vmatpush1.msra.mxu0 %v442
        %900 = vmatprep.subr.mxu0 0.0
        %901 = vmatpush1.msra.mxu0 %v443
        %902 = vmatprep.subr.mxu0 0.0
        %903 = vmatpush1.msra.mxu0 %v444
        %904 = vmatprep.subr.mxu0 0.0
        %905 = vmatpush1.msra.mxu0 %v445
        %906 = vmatprep.subr.mxu0 0.0
        %907 = vmatpush1.msra.mxu0 %v446
        %908 = vmatprep.subr.mxu0 0.0
        %909 = vmatpush1.msra.mxu0 %v447
        %910 = vmatprep.subr.mxu0 0.0
        %911 = vmatpush1.msra.mxu0 %v448
        %912 = vmatprep.subr.mxu0 0.0
        %913 = vmatpush1.msra.mxu0 %v449
        %914 = vmatprep.subr.mxu0 0.0
        %915 = vmatpush1.msra.mxu0 %v450
        %916 = vmatprep.subr.mxu0 0.0
        %917 = vmatpush1.msra.mxu0 %v451
        %918 = vmatprep.subr.mxu0 0.0
        %919 = vmatpush1.msra.mxu0 %v452
        %920 = vmatprep.subr.mxu0 0.0
        %921 = vmatpush1.msra.mxu0 %v453
        %922 = vmatprep.subr.mxu0 0.0
        %923 = vmatpush1.msra.mxu0 %v454
        %924 = vmatprep.subr.mxu0 0.0
        %925 = vmatpush1.msra.mxu0 %v455
        %926 = vmatprep.subr.mxu0 0.0
        %927 = vmatpush1.msra.mxu0 0.0
        %928 = vmatprep.subr.mxu0 0.0
        %929 = vmatpush1.msra.mxu0 0.0
        %930 = vmatprep.subr.mxu0 0.0
        %931 = vmatpush1.msra.mxu0 0.0
        %932 = vmatprep.subr.mxu0 0.0
        %933 = vmatpush1.msra.mxu0 0.0
        %934 = vmatprep.subr.mxu0 0.0
        %935 = vmatpush1.msra.mxu0 0.0
        %936 = vmatprep.subr.mxu0 0.0
        %937 = vmatpush1.msra.mxu0 0.0
        %938 = vmatprep.subr.mxu0 0.0
        %939 = vmatpush1.msra.mxu0 0.0
        %940 = vmatprep.subr.mxu0 0.0
        %941 = vmatpush1.msra.mxu0 0.0
        %942 = vmatprep.subr.mxu0 0.0
        %943 = vmatpush1.msra.mxu0 0.0
        %944 = vmatprep.subr.mxu0 0.0
        %945 = vmatpush1.msra.mxu0 0.0
        %946 = vmatprep.subr.mxu0 0.0
        %947 = vmatpush1.msra.mxu0 0.0
        %948 = vmatprep.subr.mxu0 0.0
        %949 = vmatpush1.msra.mxu0 0.0
        %950 = vmatprep.subr.mxu0 0.0
        %951 = vmatpush1.msra.mxu0 0.0
        %952 = vmatprep.subr.mxu0 0.0
        %953 = vmatpush1.msra.mxu0 0.0
        %954 = vmatprep.subr.mxu0 0.0
        %955 = vmatpush1.msra.mxu0 0.0
        %956 = vmatprep.subr.mxu0 0.0
        %957 = vmatpush1.msra.mxu0 0.0
        %958 = vmatprep.mubr.f32.mxu0 0.0
        %959 = vmatmul.mubr.f32.gmra.mrb[0].mxu0 %v893
        %v960 = vpop.f32.mrb[0].mxu0
        %v961 = vadd.f32 0.0, %v960
        %v962 = vpop.f32.mrb[0].mxu0
        %963 = vdwg.mxu0
        %v964 = vrcp.pop %v961
        %v965 = vmul.f32 %v893, %v964
        %v966 = vadd.f32 %v406, %v815
        %v967 = vadd.f32 %v407, %v817
        %v968 = vlaneseq
        %v969 = vshrl.u32 %v968, 7
        %v970 = vsub.s32 0, %v969
        %v971 = vrot.slane %v966, %v970
        %973 = vbcast.lane.b32.xlu0 %v971, 256
        %v974 = vpop.permute.xlu0 %973
        %s976 = sor.u32 256, 8
        %977 = vbcast.lane.b32.xlu0 %v971, %s976
        %v978 = vpop.permute.xlu0 %977
        %s980 = sor.u32 256, 16
        %981 = vbcast.lane.b32.xlu0 %v971, %s980
        %v982 = vpop.permute.xlu0 %981
        %s984 = sor.u32 256, 24
        %985 = vbcast.lane.b32.xlu0 %v971, %s984
        %v986 = vpop.permute.xlu0 %985
        %s988 = sor.u32 256, 32
        %989 = vbcast.lane.b32.xlu0 %v971, %s988
        %v990 = vpop.permute.xlu0 %989
        %s992 = sor.u32 256, 40
        %993 = vbcast.lane.b32.xlu0 %v971, %s992
        %v994 = vpop.permute.xlu0 %993
        %s996 = sor.u32 256, 48
        %997 = vbcast.lane.b32.xlu0 %v971, %s996
        %v998 = vpop.permute.xlu0 %997
        %s1000 = sor.u32 256, 56
        %1001 = vbcast.lane.b32.xlu0 %v971, %s1000
        %v1002 = vpop.permute.xlu0 %1001
        %s1004 = sor.u32 256, 64
        %1005 = vbcast.lane.b32.xlu0 %v971, %s1004
        %v1006 = vpop.permute.xlu0 %1005
        %s1008 = sor.u32 256, 72
        %1009 = vbcast.lane.b32.xlu0 %v971, %s1008
        %v1010 = vpop.permute.xlu0 %1009
        %s1012 = sor.u32 256, 80
        %1013 = vbcast.lane.b32.xlu0 %v971, %s1012
        %v1014 = vpop.permute.xlu0 %1013
        %s1016 = sor.u32 256, 88
        %1017 = vbcast.lane.b32.xlu0 %v971, %s1016
        %v1018 = vpop.permute.xlu0 %1017
        %s1020 = sor.u32 256, 96
        %1021 = vbcast.lane.b32.xlu0 %v971, %s1020
        %v1022 = vpop.permute.xlu0 %1021
        %s1024 = sor.u32 256, 104
        %1025 = vbcast.lane.b32.xlu0 %v971, %s1024
        %v1026 = vpop.permute.xlu0 %1025
        %s1028 = sor.u32 256, 112
        %1029 = vbcast.lane.b32.xlu0 %v971, %s1028
        %v1030 = vpop.permute.xlu0 %1029
        %s1032 = sor.u32 256, 120
        %1033 = vbcast.lane.b32.xlu0 %v971, %s1032
        %v1034 = vpop.permute.xlu0 %1033
        %v1035 = vlaneseq
        %v1036 = vshrl.u32 %v1035, 7
        %v1037 = vsub.s32 1, %v1036
        %v1038 = vrot.slane %v966, %v1037
        %1040 = vbcast.lane.b32.xlu0 %v1038, 256
        %v1041 = vpop.permute.xlu0 %1040
        %s1043 = sor.u32 256, 8
        %1044 = vbcast.lane.b32.xlu0 %v1038, %s1043
        %v1045 = vpop.permute.xlu0 %1044
        %s1047 = sor.u32 256, 16
        %1048 = vbcast.lane.b32.xlu0 %v1038, %s1047
        %v1049 = vpop.permute.xlu0 %1048
        %s1051 = sor.u32 256, 24
        %1052 = vbcast.lane.b32.xlu0 %v1038, %s1051
        %v1053 = vpop.permute.xlu0 %1052
        %s1055 = sor.u32 256, 32
        %1056 = vbcast.lane.b32.xlu0 %v1038, %s1055
        %v1057 = vpop.permute.xlu0 %1056
        %s1059 = sor.u32 256, 40
        %1060 = vbcast.lane.b32.xlu0 %v1038, %s1059
        %v1061 = vpop.permute.xlu0 %1060
        %s1063 = sor.u32 256, 48
        %1064 = vbcast.lane.b32.xlu0 %v1038, %s1063
        %v1065 = vpop.permute.xlu0 %1064
        %s1067 = sor.u32 256, 56
        %1068 = vbcast.lane.b32.xlu0 %v1038, %s1067
        %v1069 = vpop.permute.xlu0 %1068
        %s1071 = sor.u32 256, 64
        %1072 = vbcast.lane.b32.xlu0 %v1038, %s1071
        %v1073 = vpop.permute.xlu0 %1072
        %s1075 = sor.u32 256, 72
        %1076 = vbcast.lane.b32.xlu0 %v1038, %s1075
        %v1077 = vpop.permute.xlu0 %1076
        %s1079 = sor.u32 256, 80
        %1080 = vbcast.lane.b32.xlu0 %v1038, %s1079
        %v1081 = vpop.permute.xlu0 %1080
        %s1083 = sor.u32 256, 88
        %1084 = vbcast.lane.b32.xlu0 %v1038, %s1083
        %v1085 = vpop.permute.xlu0 %1084
        %s1087 = sor.u32 256, 96
        %1088 = vbcast.lane.b32.xlu0 %v1038, %s1087
        %v1089 = vpop.permute.xlu0 %1088
        %s1091 = sor.u32 256, 104
        %1092 = vbcast.lane.b32.xlu0 %v1038, %s1091
        %v1093 = vpop.permute.xlu0 %1092
        %s1095 = sor.u32 256, 112
        %1096 = vbcast.lane.b32.xlu0 %v1038, %s1095
        %v1097 = vpop.permute.xlu0 %1096
        %s1099 = sor.u32 256, 120
        %1100 = vbcast.lane.b32.xlu0 %v1038, %s1099
        %v1101 = vpop.permute.xlu0 %1100
        %v1102 = vlaneseq
        %v1103 = vshrl.u32 %v1102, 7
        %v1104 = vsub.s32 2, %v1103
        %v1105 = vrot.slane %v966, %v1104
        %1107 = vbcast.lane.b32.xlu0 %v1105, 256
        %v1108 = vpop.permute.xlu0 %1107
        %s1110 = sor.u32 256, 8
        %1111 = vbcast.lane.b32.xlu0 %v1105, %s1110
        %v1112 = vpop.permute.xlu0 %1111
        %s1114 = sor.u32 256, 16
        %1115 = vbcast.lane.b32.xlu0 %v1105, %s1114
        %v1116 = vpop.permute.xlu0 %1115
        %s1118 = sor.u32 256, 24
        %1119 = vbcast.lane.b32.xlu0 %v1105, %s1118
        %v1120 = vpop.permute.xlu0 %1119
        %s1122 = sor.u32 256, 32
        %1123 = vbcast.lane.b32.xlu0 %v1105, %s1122
        %v1124 = vpop.permute.xlu0 %1123
        %s1126 = sor.u32 256, 40
        %1127 = vbcast.lane.b32.xlu0 %v1105, %s1126
        %v1128 = vpop.permute.xlu0 %1127
        %s1130 = sor.u32 256, 48
        %1131 = vbcast.lane.b32.xlu0 %v1105, %s1130
        %v1132 = vpop.permute.xlu0 %1131
        %s1134 = sor.u32 256, 56
        %1135 = vbcast.lane.b32.xlu0 %v1105, %s1134
        %v1136 = vpop.permute.xlu0 %1135
        %s1138 = sor.u32 256, 64
        %1139 = vbcast.lane.b32.xlu0 %v1105, %s1138
        %v1140 = vpop.permute.xlu0 %1139
        %s1142 = sor.u32 256, 72
        %1143 = vbcast.lane.b32.xlu0 %v1105, %s1142
        %v1144 = vpop.permute.xlu0 %1143
        %s1146 = sor.u32 256, 80
        %1147 = vbcast.lane.b32.xlu0 %v1105, %s1146
        %v1148 = vpop.permute.xlu0 %1147
        %s1150 = sor.u32 256, 88
        %1151 = vbcast.lane.b32.xlu0 %v1105, %s1150
        %v1152 = vpop.permute.xlu0 %1151
        %s1154 = sor.u32 256, 96
        %1155 = vbcast.lane.b32.xlu0 %v1105, %s1154
        %v1156 = vpop.permute.xlu0 %1155
        %s1158 = sor.u32 256, 104
        %1159 = vbcast.lane.b32.xlu0 %v1105, %s1158
        %v1160 = vpop.permute.xlu0 %1159
        %s1162 = sor.u32 256, 112
        %1163 = vbcast.lane.b32.xlu0 %v1105, %s1162
        %v1164 = vpop.permute.xlu0 %1163
        %s1166 = sor.u32 256, 120
        %1167 = vbcast.lane.b32.xlu0 %v1105, %s1166
        %v1168 = vpop.permute.xlu0 %1167
        %v1169 = vlaneseq
        %v1170 = vshrl.u32 %v1169, 7
        %v1171 = vsub.s32 3, %v1170
        %v1172 = vrot.slane %v966, %v1171
        %1174 = vbcast.lane.b32.xlu0 %v1172, 256
        %v1175 = vpop.permute.xlu0 %1174
        %s1177 = sor.u32 256, 8
        %1178 = vbcast.lane.b32.xlu0 %v1172, %s1177
        %v1179 = vpop.permute.xlu0 %1178
        %s1181 = sor.u32 256, 16
        %1182 = vbcast.lane.b32.xlu0 %v1172, %s1181
        %v1183 = vpop.permute.xlu0 %1182
        %s1185 = sor.u32 256, 24
        %1186 = vbcast.lane.b32.xlu0 %v1172, %s1185
        %v1187 = vpop.permute.xlu0 %1186
        %s1189 = sor.u32 256, 32
        %1190 = vbcast.lane.b32.xlu0 %v1172, %s1189
        %v1191 = vpop.permute.xlu0 %1190
        %s1193 = sor.u32 256, 40
        %1194 = vbcast.lane.b32.xlu0 %v1172, %s1193
        %v1195 = vpop.permute.xlu0 %1194
        %s1197 = sor.u32 256, 48
        %1198 = vbcast.lane.b32.xlu0 %v1172, %s1197
        %v1199 = vpop.permute.xlu0 %1198
        %s1201 = sor.u32 256, 56
        %1202 = vbcast.lane.b32.xlu0 %v1172, %s1201
        %v1203 = vpop.permute.xlu0 %1202
        %s1205 = sor.u32 256, 64
        %1206 = vbcast.lane.b32.xlu0 %v1172, %s1205
        %v1207 = vpop.permute.xlu0 %1206
        %s1209 = sor.u32 256, 72
        %1210 = vbcast.lane.b32.xlu0 %v1172, %s1209
        %v1211 = vpop.permute.xlu0 %1210
        %s1213 = sor.u32 256, 80
        %1214 = vbcast.lane.b32.xlu0 %v1172, %s1213
        %v1215 = vpop.permute.xlu0 %1214
        %s1217 = sor.u32 256, 88
        %1218 = vbcast.lane.b32.xlu0 %v1172, %s1217
        %v1219 = vpop.permute.xlu0 %1218
        %s1221 = sor.u32 256, 96
        %1222 = vbcast.lane.b32.xlu0 %v1172, %s1221
        %v1223 = vpop.permute.xlu0 %1222
        %s1225 = sor.u32 256, 104
        %1226 = vbcast.lane.b32.xlu0 %v1172, %s1225
        %v1227 = vpop.permute.xlu0 %1226
        %s1229 = sor.u32 256, 112
        %1230 = vbcast.lane.b32.xlu0 %v1172, %s1229
        %v1231 = vpop.permute.xlu0 %1230
        %s1233 = sor.u32 256, 120
        %1234 = vbcast.lane.b32.xlu0 %v1172, %s1233
        %v1235 = vpop.permute.xlu0 %1234
        %v1236 = vlaneseq
        %v1237 = vshrl.u32 %v1236, 7
        %v1238 = vsub.s32 4, %v1237
        %v1239 = vrot.slane %v966, %v1238
        %1241 = vbcast.lane.b32.xlu0 %v1239, 256
        %v1242 = vpop.permute.xlu0 %1241
        %s1244 = sor.u32 256, 8
        %1245 = vbcast.lane.b32.xlu0 %v1239, %s1244
        %v1246 = vpop.permute.xlu0 %1245
        %s1248 = sor.u32 256, 16
        %1249 = vbcast.lane.b32.xlu0 %v1239, %s1248
        %v1250 = vpop.permute.xlu0 %1249
        %s1252 = sor.u32 256, 24
        %1253 = vbcast.lane.b32.xlu0 %v1239, %s1252
        %v1254 = vpop.permute.xlu0 %1253
        %s1256 = sor.u32 256, 32
        %1257 = vbcast.lane.b32.xlu0 %v1239, %s1256
        %v1258 = vpop.permute.xlu0 %1257
        %s1260 = sor.u32 256, 40
        %1261 = vbcast.lane.b32.xlu0 %v1239, %s1260
        %v1262 = vpop.permute.xlu0 %1261
        %s1264 = sor.u32 256, 48
        %1265 = vbcast.lane.b32.xlu0 %v1239, %s1264
        %v1266 = vpop.permute.xlu0 %1265
        %s1268 = sor.u32 256, 56
        %1269 = vbcast.lane.b32.xlu0 %v1239, %s1268
        %v1270 = vpop.permute.xlu0 %1269
        %s1272 = sor.u32 256, 64
        %1273 = vbcast.lane.b32.xlu0 %v1239, %s1272
        %v1274 = vpop.permute.xlu0 %1273
        %s1276 = sor.u32 256, 72
        %1277 = vbcast.lane.b32.xlu0 %v1239, %s1276
        %v1278 = vpop.permute.xlu0 %1277
        %s1280 = sor.u32 256, 80
        %1281 = vbcast.lane.b32.xlu0 %v1239, %s1280
        %v1282 = vpop.permute.xlu0 %1281
        %s1284 = sor.u32 256, 88
        %1285 = vbcast.lane.b32.xlu0 %v1239, %s1284
        %v1286 = vpop.permute.xlu0 %1285
        %s1288 = sor.u32 256, 96
        %1289 = vbcast.lane.b32.xlu0 %v1239, %s1288
        %v1290 = vpop.permute.xlu0 %1289
        %s1292 = sor.u32 256, 104
        %1293 = vbcast.lane.b32.xlu0 %v1239, %s1292
        %v1294 = vpop.permute.xlu0 %1293
        %s1296 = sor.u32 256, 112
        %1297 = vbcast.lane.b32.xlu0 %v1239, %s1296
        %v1298 = vpop.permute.xlu0 %1297
        %s1300 = sor.u32 256, 120
        %1301 = vbcast.lane.b32.xlu0 %v1239, %s1300
        %v1302 = vpop.permute.xlu0 %1301
        %v1303 = vlaneseq
        %v1304 = vshrl.u32 %v1303, 7
        %v1305 = vsub.s32 5, %v1304
        %v1306 = vrot.slane %v966, %v1305
        %1308 = vbcast.lane.b32.xlu0 %v1306, 256
        %v1309 = vpop.permute.xlu0 %1308
        %s1311 = sor.u32 256, 8
        %1312 = vbcast.lane.b32.xlu0 %v1306, %s1311
        %v1313 = vpop.permute.xlu0 %1312
        %s1315 = sor.u32 256, 16
        %1316 = vbcast.lane.b32.xlu0 %v1306, %s1315
        %v1317 = vpop.permute.xlu0 %1316
        %s1319 = sor.u32 256, 24
        %1320 = vbcast.lane.b32.xlu0 %v1306, %s1319
        %v1321 = vpop.permute.xlu0 %1320
        %s1323 = sor.u32 256, 32
        %1324 = vbcast.lane.b32.xlu0 %v1306, %s1323
        %v1325 = vpop.permute.xlu0 %1324
        %s1327 = sor.u32 256, 40
        %1328 = vbcast.lane.b32.xlu0 %v1306, %s1327
        %v1329 = vpop.permute.xlu0 %1328
        %s1331 = sor.u32 256, 48
        %1332 = vbcast.lane.b32.xlu0 %v1306, %s1331
        %v1333 = vpop.permute.xlu0 %1332
        %s1335 = sor.u32 256, 56
        %1336 = vbcast.lane.b32.xlu0 %v1306, %s1335
        %v1337 = vpop.permute.xlu0 %1336
        %s1339 = sor.u32 256, 64
        %1340 = vbcast.lane.b32.xlu0 %v1306, %s1339
        %v1341 = vpop.permute.xlu0 %1340
        %s1343 = sor.u32 256, 72
        %1344 = vbcast.lane.b32.xlu0 %v1306, %s1343
        %v1345 = vpop.permute.xlu0 %1344
        %s1347 = sor.u32 256, 80
        %1348 = vbcast.lane.b32.xlu0 %v1306, %s1347
        %v1349 = vpop.permute.xlu0 %1348
        %s1351 = sor.u32 256, 88
        %1352 = vbcast.lane.b32.xlu0 %v1306, %s1351
        %v1353 = vpop.permute.xlu0 %1352
        %s1355 = sor.u32 256, 96
        %1356 = vbcast.lane.b32.xlu0 %v1306, %s1355
        %v1357 = vpop.permute.xlu0 %1356
        %s1359 = sor.u32 256, 104
        %1360 = vbcast.lane.b32.xlu0 %v1306, %s1359
        %v1361 = vpop.permute.xlu0 %1360
        %s1363 = sor.u32 256, 112
        %1364 = vbcast.lane.b32.xlu0 %v1306, %s1363
        %v1365 = vpop.permute.xlu0 %1364
        %s1367 = sor.u32 256, 120
        %1368 = vbcast.lane.b32.xlu0 %v1306, %s1367
        %v1369 = vpop.permute.xlu0 %1368
        %v1370 = vlaneseq
        %v1371 = vshrl.u32 %v1370, 7
        %v1372 = vsub.s32 6, %v1371
        %v1373 = vrot.slane %v966, %v1372
        %1375 = vbcast.lane.b32.xlu0 %v1373, 256
        %v1376 = vpop.permute.xlu0 %1375
        %s1378 = sor.u32 256, 8
        %1379 = vbcast.lane.b32.xlu0 %v1373, %s1378
        %v1380 = vpop.permute.xlu0 %1379
        %s1382 = sor.u32 256, 16
        %1383 = vbcast.lane.b32.xlu0 %v1373, %s1382
        %v1384 = vpop.permute.xlu0 %1383
        %s1386 = sor.u32 256, 24
        %1387 = vbcast.lane.b32.xlu0 %v1373, %s1386
        %v1388 = vpop.permute.xlu0 %1387
        %s1390 = sor.u32 256, 32
        %1391 = vbcast.lane.b32.xlu0 %v1373, %s1390
        %v1392 = vpop.permute.xlu0 %1391
        %s1394 = sor.u32 256, 40
        %1395 = vbcast.lane.b32.xlu0 %v1373, %s1394
        %v1396 = vpop.permute.xlu0 %1395
        %s1398 = sor.u32 256, 48
        %1399 = vbcast.lane.b32.xlu0 %v1373, %s1398
        %v1400 = vpop.permute.xlu0 %1399
        %s1402 = sor.u32 256, 56
        %1403 = vbcast.lane.b32.xlu0 %v1373, %s1402
        %v1404 = vpop.permute.xlu0 %1403
        %s1406 = sor.u32 256, 64
        %1407 = vbcast.lane.b32.xlu0 %v1373, %s1406
        %v1408 = vpop.permute.xlu0 %1407
        %s1410 = sor.u32 256, 72
        %1411 = vbcast.lane.b32.xlu0 %v1373, %s1410
        %v1412 = vpop.permute.xlu0 %1411
        %s1414 = sor.u32 256, 80
        %1415 = vbcast.lane.b32.xlu0 %v1373, %s1414
        %v1416 = vpop.permute.xlu0 %1415
        %s1418 = sor.u32 256, 88
        %1419 = vbcast.lane.b32.xlu0 %v1373, %s1418
        %v1420 = vpop.permute.xlu0 %1419
        %s1422 = sor.u32 256, 96
        %1423 = vbcast.lane.b32.xlu0 %v1373, %s1422
        %v1424 = vpop.permute.xlu0 %1423
        %s1426 = sor.u32 256, 104
        %1427 = vbcast.lane.b32.xlu0 %v1373, %s1426
        %v1428 = vpop.permute.xlu0 %1427
        %s1430 = sor.u32 256, 112
        %1431 = vbcast.lane.b32.xlu0 %v1373, %s1430
        %v1432 = vpop.permute.xlu0 %1431
        %s1434 = sor.u32 256, 120
        %1435 = vbcast.lane.b32.xlu0 %v1373, %s1434
        %v1436 = vpop.permute.xlu0 %1435
        %v1437 = vlaneseq
        %v1438 = vshrl.u32 %v1437, 7
        %v1439 = vsub.s32 7, %v1438
        %v1440 = vrot.slane %v966, %v1439
        %1442 = vbcast.lane.b32.xlu0 %v1440, 256
        %v1443 = vpop.permute.xlu0 %1442
        %s1445 = sor.u32 256, 8
        %1446 = vbcast.lane.b32.xlu0 %v1440, %s1445
        %v1447 = vpop.permute.xlu0 %1446
        %s1449 = sor.u32 256, 16
        %1450 = vbcast.lane.b32.xlu0 %v1440, %s1449
        %v1451 = vpop.permute.xlu0 %1450
        %s1453 = sor.u32 256, 24
        %1454 = vbcast.lane.b32.xlu0 %v1440, %s1453
        %v1455 = vpop.permute.xlu0 %1454
        %s1457 = sor.u32 256, 32
        %1458 = vbcast.lane.b32.xlu0 %v1440, %s1457
        %v1459 = vpop.permute.xlu0 %1458
        %s1461 = sor.u32 256, 40
        %1462 = vbcast.lane.b32.xlu0 %v1440, %s1461
        %v1463 = vpop.permute.xlu0 %1462
        %s1465 = sor.u32 256, 48
        %1466 = vbcast.lane.b32.xlu0 %v1440, %s1465
        %v1467 = vpop.permute.xlu0 %1466
        %s1469 = sor.u32 256, 56
        %1470 = vbcast.lane.b32.xlu0 %v1440, %s1469
        %v1471 = vpop.permute.xlu0 %1470
        %s1473 = sor.u32 256, 64
        %1474 = vbcast.lane.b32.xlu0 %v1440, %s1473
        %v1475 = vpop.permute.xlu0 %1474
        %s1477 = sor.u32 256, 72
        %1478 = vbcast.lane.b32.xlu0 %v1440, %s1477
        %v1479 = vpop.permute.xlu0 %1478
        %s1481 = sor.u32 256, 80
        %1482 = vbcast.lane.b32.xlu0 %v1440, %s1481
        %v1483 = vpop.permute.xlu0 %1482
        %s1485 = sor.u32 256, 88
        %1486 = vbcast.lane.b32.xlu0 %v1440, %s1485
        %v1487 = vpop.permute.xlu0 %1486
        %s1489 = sor.u32 256, 96
        %1490 = vbcast.lane.b32.xlu0 %v1440, %s1489
        %v1491 = vpop.permute.xlu0 %1490
        %s1493 = sor.u32 256, 104
        %1494 = vbcast.lane.b32.xlu0 %v1440, %s1493
        %v1495 = vpop.permute.xlu0 %1494
        %s1497 = sor.u32 256, 112
        %1498 = vbcast.lane.b32.xlu0 %v1440, %s1497
        %v1499 = vpop.permute.xlu0 %1498
        %s1501 = sor.u32 256, 120
        %1502 = vbcast.lane.b32.xlu0 %v1440, %s1501
        %v1503 = vpop.permute.xlu0 %1502
        %v1504 = vsub.f32 %v974, %v408
        %v1505 = vsub.f32 %v978, %v409
        %v1506 = vsub.f32 %v982, %v410
        %v1507 = vsub.f32 %v986, %v411
        %v1508 = vsub.f32 %v990, %v412
        %v1509 = vsub.f32 %v994, %v413
        %v1510 = vsub.f32 %v998, %v414
        %v1511 = vsub.f32 %v1002, %v415
        %v1512 = vsub.f32 %v1006, %v416
        %v1513 = vsub.f32 %v1010, %v417
        %v1514 = vsub.f32 %v1014, %v418
        %v1515 = vsub.f32 %v1018, %v419
        %v1516 = vsub.f32 %v1022, %v420
        %v1517 = vsub.f32 %v1026, %v421
        %v1518 = vsub.f32 %v1030, %v422
        %v1519 = vsub.f32 %v1034, %v423
        %v1520 = vsub.f32 %v1041, %v408
        %v1521 = vsub.f32 %v1045, %v409
        %v1522 = vsub.f32 %v1049, %v410
        %v1523 = vsub.f32 %v1053, %v411
        %v1524 = vsub.f32 %v1057, %v412
        %v1525 = vsub.f32 %v1061, %v413
        %v1526 = vsub.f32 %v1065, %v414
        %v1527 = vsub.f32 %v1069, %v415
        %v1528 = vsub.f32 %v1073, %v416
        %v1529 = vsub.f32 %v1077, %v417
        %v1530 = vsub.f32 %v1081, %v418
        %v1531 = vsub.f32 %v1085, %v419
        %v1532 = vsub.f32 %v1089, %v420
        %v1533 = vsub.f32 %v1093, %v421
        %v1534 = vsub.f32 %v1097, %v422
        %v1535 = vsub.f32 %v1101, %v423
        %v1536 = vsub.f32 %v1108, %v408
        %v1537 = vsub.f32 %v1112, %v409
        %v1538 = vsub.f32 %v1116, %v410
        %v1539 = vsub.f32 %v1120, %v411
        %v1540 = vsub.f32 %v1124, %v412
        %v1541 = vsub.f32 %v1128, %v413
        %v1542 = vsub.f32 %v1132, %v414
        %v1543 = vsub.f32 %v1136, %v415
        %v1544 = vsub.f32 %v1140, %v416
        %v1545 = vsub.f32 %v1144, %v417
        %v1546 = vsub.f32 %v1148, %v418
        %v1547 = vsub.f32 %v1152, %v419
        %v1548 = vsub.f32 %v1156, %v420
        %v1549 = vsub.f32 %v1160, %v421
        %v1550 = vsub.f32 %v1164, %v422
        %v1551 = vsub.f32 %v1168, %v423
        %v1552 = vsub.f32 %v1175, %v408
        %v1553 = vsub.f32 %v1179, %v409
        %v1554 = vsub.f32 %v1183, %v410
        %v1555 = vsub.f32 %v1187, %v411
        %v1556 = vsub.f32 %v1191, %v412
        %v1557 = vsub.f32 %v1195, %v413
        %v1558 = vsub.f32 %v1199, %v414
        %v1559 = vsub.f32 %v1203, %v415
        %v1560 = vsub.f32 %v1207, %v416
        %v1561 = vsub.f32 %v1211, %v417
        %v1562 = vsub.f32 %v1215, %v418
        %v1563 = vsub.f32 %v1219, %v419
        %v1564 = vsub.f32 %v1223, %v420
        %v1565 = vsub.f32 %v1227, %v421
        %v1566 = vsub.f32 %v1231, %v422
        %v1567 = vsub.f32 %v1235, %v423
        %v1568 = vsub.f32 %v1242, %v408
        %v1569 = vsub.f32 %v1246, %v409
        %v1570 = vsub.f32 %v1250, %v410
        %v1571 = vsub.f32 %v1254, %v411
        %v1572 = vsub.f32 %v1258, %v412
        %v1573 = vsub.f32 %v1262, %v413
        %v1574 = vsub.f32 %v1266, %v414
        %v1575 = vsub.f32 %v1270, %v415
        %v1576 = vsub.f32 %v1274, %v416
        %v1577 = vsub.f32 %v1278, %v417
        %v1578 = vsub.f32 %v1282, %v418
        %v1579 = vsub.f32 %v1286, %v419
        %v1580 = vsub.f32 %v1290, %v420
        %v1581 = vsub.f32 %v1294, %v421
        %v1582 = vsub.f32 %v1298, %v422
        %v1583 = vsub.f32 %v1302, %v423
        %v1584 = vsub.f32 %v1309, %v408
        %v1585 = vsub.f32 %v1313, %v409
        %v1586 = vsub.f32 %v1317, %v410
        %v1587 = vsub.f32 %v1321, %v411
        %v1588 = vsub.f32 %v1325, %v412
        %v1589 = vsub.f32 %v1329, %v413
        %v1590 = vsub.f32 %v1333, %v414
        %v1591 = vsub.f32 %v1337, %v415
        %v1592 = vsub.f32 %v1341, %v416
        %v1593 = vsub.f32 %v1345, %v417
        %v1594 = vsub.f32 %v1349, %v418
        %v1595 = vsub.f32 %v1353, %v419
        %v1596 = vsub.f32 %v1357, %v420
        %v1597 = vsub.f32 %v1361, %v421
        %v1598 = vsub.f32 %v1365, %v422
        %v1599 = vsub.f32 %v1369, %v423
        %v1600 = vsub.f32 %v1376, %v408
        %v1601 = vsub.f32 %v1380, %v409
        %v1602 = vsub.f32 %v1384, %v410
        %v1603 = vsub.f32 %v1388, %v411
        %v1604 = vsub.f32 %v1392, %v412
        %v1605 = vsub.f32 %v1396, %v413
        %v1606 = vsub.f32 %v1400, %v414
        %v1607 = vsub.f32 %v1404, %v415
        %v1608 = vsub.f32 %v1408, %v416
        %v1609 = vsub.f32 %v1412, %v417
        %v1610 = vsub.f32 %v1416, %v418
        %v1611 = vsub.f32 %v1420, %v419
        %v1612 = vsub.f32 %v1424, %v420
        %v1613 = vsub.f32 %v1428, %v421
        %v1614 = vsub.f32 %v1432, %v422
        %v1615 = vsub.f32 %v1436, %v423
        %v1616 = vsub.f32 %v1443, %v408
        %v1617 = vsub.f32 %v1447, %v409
        %v1618 = vsub.f32 %v1451, %v410
        %v1619 = vsub.f32 %v1455, %v411
        %v1620 = vsub.f32 %v1459, %v412
        %v1621 = vsub.f32 %v1463, %v413
        %v1622 = vsub.f32 %v1467, %v414
        %v1623 = vsub.f32 %v1471, %v415
        %v1624 = vsub.f32 %v1475, %v416
        %v1625 = vsub.f32 %v1479, %v417
        %v1626 = vsub.f32 %v1483, %v418
        %v1627 = vsub.f32 %v1487, %v419
        %v1628 = vsub.f32 %v1491, %v420
        %v1629 = vsub.f32 %v1495, %v421
        %v1630 = vsub.f32 %v1499, %v422
        %v1631 = vsub.f32 %v1503, %v423
        %v1632 = vand.u32 2147483647, %v1504
        %v1633 = vand.u32 2147483647, %v1505
        %v1634 = vand.u32 2147483647, %v1506
        %v1635 = vand.u32 2147483647, %v1507
        %v1636 = vand.u32 2147483647, %v1508
        %v1637 = vand.u32 2147483647, %v1509
        %v1638 = vand.u32 2147483647, %v1510
        %v1639 = vand.u32 2147483647, %v1511
        %v1640 = vand.u32 2147483647, %v1512
        %v1641 = vand.u32 2147483647, %v1513
        %v1642 = vand.u32 2147483647, %v1514
        %v1643 = vand.u32 2147483647, %v1515
        %v1644 = vand.u32 2147483647, %v1516
        %v1645 = vand.u32 2147483647, %v1517
        %v1646 = vand.u32 2147483647, %v1518
        %v1647 = vand.u32 2147483647, %v1519
        %v1648 = vand.u32 2147483647, %v1520
        %v1649 = vand.u32 2147483647, %v1521
        %v1650 = vand.u32 2147483647, %v1522
        %v1651 = vand.u32 2147483647, %v1523
        %v1652 = vand.u32 2147483647, %v1524
        %v1653 = vand.u32 2147483647, %v1525
        %v1654 = vand.u32 2147483647, %v1526
        %v1655 = vand.u32 2147483647, %v1527
        %v1656 = vand.u32 2147483647, %v1528
        %v1657 = vand.u32 2147483647, %v1529
        %v1658 = vand.u32 2147483647, %v1530
        %v1659 = vand.u32 2147483647, %v1531
        %v1660 = vand.u32 2147483647, %v1532
        %v1661 = vand.u32 2147483647, %v1533
        %v1662 = vand.u32 2147483647, %v1534
        %v1663 = vand.u32 2147483647, %v1535
        %v1664 = vand.u32 2147483647, %v1536
        %v1665 = vand.u32 2147483647, %v1537
        %v1666 = vand.u32 2147483647, %v1538
        %v1667 = vand.u32 2147483647, %v1539
        %v1668 = vand.u32 2147483647, %v1540
        %v1669 = vand.u32 2147483647, %v1541
        %v1670 = vand.u32 2147483647, %v1542
        %v1671 = vand.u32 2147483647, %v1543
        %v1672 = vand.u32 2147483647, %v1544
        %v1673 = vand.u32 2147483647, %v1545
        %v1674 = vand.u32 2147483647, %v1546
        %v1675 = vand.u32 2147483647, %v1547
        %v1676 = vand.u32 2147483647, %v1548
        %v1677 = vand.u32 2147483647, %v1549
        %v1678 = vand.u32 2147483647, %v1550
        %v1679 = vand.u32 2147483647, %v1551
        %v1680 = vand.u32 2147483647, %v1552
        %v1681 = vand.u32 2147483647, %v1553
        %v1682 = vand.u32 2147483647, %v1554
        %v1683 = vand.u32 2147483647, %v1555
        %v1684 = vand.u32 2147483647, %v1556
        %v1685 = vand.u32 2147483647, %v1557
        %v1686 = vand.u32 2147483647, %v1558
        %v1687 = vand.u32 2147483647, %v1559
        %v1688 = vand.u32 2147483647, %v1560
        %v1689 = vand.u32 2147483647, %v1561
        %v1690 = vand.u32 2147483647, %v1562
        %v1691 = vand.u32 2147483647, %v1563
        %v1692 = vand.u32 2147483647, %v1564
        %v1693 = vand.u32 2147483647, %v1565
        %v1694 = vand.u32 2147483647, %v1566
        %v1695 = vand.u32 2147483647, %v1567
        %v1696 = vand.u32 2147483647, %v1568
        %v1697 = vand.u32 2147483647, %v1569
        %v1698 = vand.u32 2147483647, %v1570
        %v1699 = vand.u32 2147483647, %v1571
        %v1700 = vand.u32 2147483647, %v1572
        %v1701 = vand.u32 2147483647, %v1573
        %v1702 = vand.u32 2147483647, %v1574
        %v1703 = vand.u32 2147483647, %v1575
        %v1704 = vand.u32 2147483647, %v1576
        %v1705 = vand.u32 2147483647, %v1577
        %v1706 = vand.u32 2147483647, %v1578
        %v1707 = vand.u32 2147483647, %v1579
        %v1708 = vand.u32 2147483647, %v1580
        %v1709 = vand.u32 2147483647, %v1581
        %v1710 = vand.u32 2147483647, %v1582
        %v1711 = vand.u32 2147483647, %v1583
        %v1712 = vand.u32 2147483647, %v1584
        %v1713 = vand.u32 2147483647, %v1585
        %v1714 = vand.u32 2147483647, %v1586
        %v1715 = vand.u32 2147483647, %v1587
        %v1716 = vand.u32 2147483647, %v1588
        %v1717 = vand.u32 2147483647, %v1589
        %v1718 = vand.u32 2147483647, %v1590
        %v1719 = vand.u32 2147483647, %v1591
        %v1720 = vand.u32 2147483647, %v1592
        %v1721 = vand.u32 2147483647, %v1593
        %v1722 = vand.u32 2147483647, %v1594
        %v1723 = vand.u32 2147483647, %v1595
        %v1724 = vand.u32 2147483647, %v1596
        %v1725 = vand.u32 2147483647, %v1597
        %v1726 = vand.u32 2147483647, %v1598
        %v1727 = vand.u32 2147483647, %v1599
        %v1728 = vand.u32 2147483647, %v1600
        %v1729 = vand.u32 2147483647, %v1601
        %v1730 = vand.u32 2147483647, %v1602
        %v1731 = vand.u32 2147483647, %v1603
        %v1732 = vand.u32 2147483647, %v1604
        %v1733 = vand.u32 2147483647, %v1605
        %v1734 = vand.u32 2147483647, %v1606
        %v1735 = vand.u32 2147483647, %v1607
        %v1736 = vand.u32 2147483647, %v1608
        %v1737 = vand.u32 2147483647, %v1609
        %v1738 = vand.u32 2147483647, %v1610
        %v1739 = vand.u32 2147483647, %v1611
        %v1740 = vand.u32 2147483647, %v1612
        %v1741 = vand.u32 2147483647, %v1613
        %v1742 = vand.u32 2147483647, %v1614
        %v1743 = vand.u32 2147483647, %v1615
        %v1744 = vand.u32 2147483647, %v1616
        %v1745 = vand.u32 2147483647, %v1617
        %v1746 = vand.u32 2147483647, %v1618
        %v1747 = vand.u32 2147483647, %v1619
        %v1748 = vand.u32 2147483647, %v1620
        %v1749 = vand.u32 2147483647, %v1621
        %v1750 = vand.u32 2147483647, %v1622
        %v1751 = vand.u32 2147483647, %v1623
        %v1752 = vand.u32 2147483647, %v1624
        %v1753 = vand.u32 2147483647, %v1625
        %v1754 = vand.u32 2147483647, %v1626
        %v1755 = vand.u32 2147483647, %v1627
        %v1756 = vand.u32 2147483647, %v1628
        %v1757 = vand.u32 2147483647, %v1629
        %v1758 = vand.u32 2147483647, %v1630
        %v1759 = vand.u32 2147483647, %v1631
        %v1760 = vsub.f32 1.0, %v1632
        %v1761 = vsub.f32 1.0, %v1633
        %v1762 = vsub.f32 1.0, %v1634
        %v1763 = vsub.f32 1.0, %v1635
        %v1764 = vsub.f32 1.0, %v1636
        %v1765 = vsub.f32 1.0, %v1637
        %v1766 = vsub.f32 1.0, %v1638
        %v1767 = vsub.f32 1.0, %v1639
        %v1768 = vsub.f32 1.0, %v1640
        %v1769 = vsub.f32 1.0, %v1641
        %v1770 = vsub.f32 1.0, %v1642
        %v1771 = vsub.f32 1.0, %v1643
        %v1772 = vsub.f32 1.0, %v1644
        %v1773 = vsub.f32 1.0, %v1645
        %v1774 = vsub.f32 1.0, %v1646
        %v1775 = vsub.f32 1.0, %v1647
        %v1776 = vsub.f32 1.0, %v1648
        %v1777 = vsub.f32 1.0, %v1649
        %v1778 = vsub.f32 1.0, %v1650
        %v1779 = vsub.f32 1.0, %v1651
        %v1780 = vsub.f32 1.0, %v1652
        %v1781 = vsub.f32 1.0, %v1653
        %v1782 = vsub.f32 1.0, %v1654
        %v1783 = vsub.f32 1.0, %v1655
        %v1784 = vsub.f32 1.0, %v1656
        %v1785 = vsub.f32 1.0, %v1657
        %v1786 = vsub.f32 1.0, %v1658
        %v1787 = vsub.f32 1.0, %v1659
        %v1788 = vsub.f32 1.0, %v1660
        %v1789 = vsub.f32 1.0, %v1661
        %v1790 = vsub.f32 1.0, %v1662
        %v1791 = vsub.f32 1.0, %v1663
        %v1792 = vsub.f32 1.0, %v1664
        %v1793 = vsub.f32 1.0, %v1665
        %v1794 = vsub.f32 1.0, %v1666
        %v1795 = vsub.f32 1.0, %v1667
        %v1796 = vsub.f32 1.0, %v1668
        %v1797 = vsub.f32 1.0, %v1669
        %v1798 = vsub.f32 1.0, %v1670
        %v1799 = vsub.f32 1.0, %v1671
        %v1800 = vsub.f32 1.0, %v1672
        %v1801 = vsub.f32 1.0, %v1673
        %v1802 = vsub.f32 1.0, %v1674
        %v1803 = vsub.f32 1.0, %v1675
        %v1804 = vsub.f32 1.0, %v1676
        %v1805 = vsub.f32 1.0, %v1677
        %v1806 = vsub.f32 1.0, %v1678
        %v1807 = vsub.f32 1.0, %v1679
        %v1808 = vsub.f32 1.0, %v1680
        %v1809 = vsub.f32 1.0, %v1681
        %v1810 = vsub.f32 1.0, %v1682
        %v1811 = vsub.f32 1.0, %v1683
        %v1812 = vsub.f32 1.0, %v1684
        %v1813 = vsub.f32 1.0, %v1685
        %v1814 = vsub.f32 1.0, %v1686
        %v1815 = vsub.f32 1.0, %v1687
        %v1816 = vsub.f32 1.0, %v1688
        %v1817 = vsub.f32 1.0, %v1689
        %v1818 = vsub.f32 1.0, %v1690
        %v1819 = vsub.f32 1.0, %v1691
        %v1820 = vsub.f32 1.0, %v1692
        %v1821 = vsub.f32 1.0, %v1693
        %v1822 = vsub.f32 1.0, %v1694
        %v1823 = vsub.f32 1.0, %v1695
        %v1824 = vsub.f32 1.0, %v1696
        %v1825 = vsub.f32 1.0, %v1697
        %v1826 = vsub.f32 1.0, %v1698
        %v1827 = vsub.f32 1.0, %v1699
        %v1828 = vsub.f32 1.0, %v1700
        %v1829 = vsub.f32 1.0, %v1701
        %v1830 = vsub.f32 1.0, %v1702
        %v1831 = vsub.f32 1.0, %v1703
        %v1832 = vsub.f32 1.0, %v1704
        %v1833 = vsub.f32 1.0, %v1705
        %v1834 = vsub.f32 1.0, %v1706
        %v1835 = vsub.f32 1.0, %v1707
        %v1836 = vsub.f32 1.0, %v1708
        %v1837 = vsub.f32 1.0, %v1709
        %v1838 = vsub.f32 1.0, %v1710
        %v1839 = vsub.f32 1.0, %v1711
        %v1840 = vsub.f32 1.0, %v1712
        %v1841 = vsub.f32 1.0, %v1713
        %v1842 = vsub.f32 1.0, %v1714
        %v1843 = vsub.f32 1.0, %v1715
        %v1844 = vsub.f32 1.0, %v1716
        %v1845 = vsub.f32 1.0, %v1717
        %v1846 = vsub.f32 1.0, %v1718
        %v1847 = vsub.f32 1.0, %v1719
        %v1848 = vsub.f32 1.0, %v1720
        %v1849 = vsub.f32 1.0, %v1721
        %v1850 = vsub.f32 1.0, %v1722
        %v1851 = vsub.f32 1.0, %v1723
        %v1852 = vsub.f32 1.0, %v1724
        %v1853 = vsub.f32 1.0, %v1725
        %v1854 = vsub.f32 1.0, %v1726
        %v1855 = vsub.f32 1.0, %v1727
        %v1856 = vsub.f32 1.0, %v1728
        %v1857 = vsub.f32 1.0, %v1729
        %v1858 = vsub.f32 1.0, %v1730
        %v1859 = vsub.f32 1.0, %v1731
        %v1860 = vsub.f32 1.0, %v1732
        %v1861 = vsub.f32 1.0, %v1733
        %v1862 = vsub.f32 1.0, %v1734
        %v1863 = vsub.f32 1.0, %v1735
        %v1864 = vsub.f32 1.0, %v1736
        %v1865 = vsub.f32 1.0, %v1737
        %v1866 = vsub.f32 1.0, %v1738
        %v1867 = vsub.f32 1.0, %v1739
        %v1868 = vsub.f32 1.0, %v1740
        %v1869 = vsub.f32 1.0, %v1741
        %v1870 = vsub.f32 1.0, %v1742
        %v1871 = vsub.f32 1.0, %v1743
        %v1872 = vsub.f32 1.0, %v1744
        %v1873 = vsub.f32 1.0, %v1745
        %v1874 = vsub.f32 1.0, %v1746
        %v1875 = vsub.f32 1.0, %v1747
        %v1876 = vsub.f32 1.0, %v1748
        %v1877 = vsub.f32 1.0, %v1749
        %v1878 = vsub.f32 1.0, %v1750
        %v1879 = vsub.f32 1.0, %v1751
        %v1880 = vsub.f32 1.0, %v1752
        %v1881 = vsub.f32 1.0, %v1753
        %v1882 = vsub.f32 1.0, %v1754
        %v1883 = vsub.f32 1.0, %v1755
        %v1884 = vsub.f32 1.0, %v1756
        %v1885 = vsub.f32 1.0, %v1757
        %v1886 = vsub.f32 1.0, %v1758
        %v1887 = vsub.f32 1.0, %v1759
        %v1888 = vmax.f32 %v1760, 0.0
        %v1889 = vmax.f32 %v1761, 0.0
        %v1890 = vmax.f32 %v1762, 0.0
        %v1891 = vmax.f32 %v1763, 0.0
        %v1892 = vmax.f32 %v1764, 0.0
        %v1893 = vmax.f32 %v1765, 0.0
        %v1894 = vmax.f32 %v1766, 0.0
        %v1895 = vmax.f32 %v1767, 0.0
        %v1896 = vmax.f32 %v1768, 0.0
        %v1897 = vmax.f32 %v1769, 0.0
        %v1898 = vmax.f32 %v1770, 0.0
        %v1899 = vmax.f32 %v1771, 0.0
        %v1900 = vmax.f32 %v1772, 0.0
        %v1901 = vmax.f32 %v1773, 0.0
        %v1902 = vmax.f32 %v1774, 0.0
        %v1903 = vmax.f32 %v1775, 0.0
        %v1904 = vmax.f32 %v1776, 0.0
        %v1905 = vmax.f32 %v1777, 0.0
        %v1906 = vmax.f32 %v1778, 0.0
        %v1907 = vmax.f32 %v1779, 0.0
        %v1908 = vmax.f32 %v1780, 0.0
        %v1909 = vmax.f32 %v1781, 0.0
        %v1910 = vmax.f32 %v1782, 0.0
        %v1911 = vmax.f32 %v1783, 0.0
        %v1912 = vmax.f32 %v1784, 0.0
        %v1913 = vmax.f32 %v1785, 0.0
        %v1914 = vmax.f32 %v1786, 0.0
        %v1915 = vmax.f32 %v1787, 0.0
        %v1916 = vmax.f32 %v1788, 0.0
        %v1917 = vmax.f32 %v1789, 0.0
        %v1918 = vmax.f32 %v1790, 0.0
        %v1919 = vmax.f32 %v1791, 0.0
        %v1920 = vmax.f32 %v1792, 0.0
        %v1921 = vmax.f32 %v1793, 0.0
        %v1922 = vmax.f32 %v1794, 0.0
        %v1923 = vmax.f32 %v1795, 0.0
        %v1924 = vmax.f32 %v1796, 0.0
        %v1925 = vmax.f32 %v1797, 0.0
        %v1926 = vmax.f32 %v1798, 0.0
        %v1927 = vmax.f32 %v1799, 0.0
        %v1928 = vmax.f32 %v1800, 0.0
        %v1929 = vmax.f32 %v1801, 0.0
        %v1930 = vmax.f32 %v1802, 0.0
        %v1931 = vmax.f32 %v1803, 0.0
        %v1932 = vmax.f32 %v1804, 0.0
        %v1933 = vmax.f32 %v1805, 0.0
        %v1934 = vmax.f32 %v1806, 0.0
        %v1935 = vmax.f32 %v1807, 0.0
        %v1936 = vmax.f32 %v1808, 0.0
        %v1937 = vmax.f32 %v1809, 0.0
        %v1938 = vmax.f32 %v1810, 0.0
        %v1939 = vmax.f32 %v1811, 0.0
        %v1940 = vmax.f32 %v1812, 0.0
        %v1941 = vmax.f32 %v1813, 0.0
        %v1942 = vmax.f32 %v1814, 0.0
        %v1943 = vmax.f32 %v1815, 0.0
        %v1944 = vmax.f32 %v1816, 0.0
        %v1945 = vmax.f32 %v1817, 0.0
        %v1946 = vmax.f32 %v1818, 0.0
        %v1947 = vmax.f32 %v1819, 0.0
        %v1948 = vmax.f32 %v1820, 0.0
        %v1949 = vmax.f32 %v1821, 0.0
        %v1950 = vmax.f32 %v1822, 0.0
        %v1951 = vmax.f32 %v1823, 0.0
        %v1952 = vmax.f32 %v1824, 0.0
        %v1953 = vmax.f32 %v1825, 0.0
        %v1954 = vmax.f32 %v1826, 0.0
        %v1955 = vmax.f32 %v1827, 0.0
        %v1956 = vmax.f32 %v1828, 0.0
        %v1957 = vmax.f32 %v1829, 0.0
        %v1958 = vmax.f32 %v1830, 0.0
        %v1959 = vmax.f32 %v1831, 0.0
        %v1960 = vmax.f32 %v1832, 0.0
        %v1961 = vmax.f32 %v1833, 0.0
        %v1962 = vmax.f32 %v1834, 0.0
        %v1963 = vmax.f32 %v1835, 0.0
        %v1964 = vmax.f32 %v1836, 0.0
        %v1965 = vmax.f32 %v1837, 0.0
        %v1966 = vmax.f32 %v1838, 0.0
        %v1967 = vmax.f32 %v1839, 0.0
        %v1968 = vmax.f32 %v1840, 0.0
        %v1969 = vmax.f32 %v1841, 0.0
        %v1970 = vmax.f32 %v1842, 0.0
        %v1971 = vmax.f32 %v1843, 0.0
        %v1972 = vmax.f32 %v1844, 0.0
        %v1973 = vmax.f32 %v1845, 0.0
        %v1974 = vmax.f32 %v1846, 0.0
        %v1975 = vmax.f32 %v1847, 0.0
        %v1976 = vmax.f32 %v1848, 0.0
        %v1977 = vmax.f32 %v1849, 0.0
        %v1978 = vmax.f32 %v1850, 0.0
        %v1979 = vmax.f32 %v1851, 0.0
        %v1980 = vmax.f32 %v1852, 0.0
        %v1981 = vmax.f32 %v1853, 0.0
        %v1982 = vmax.f32 %v1854, 0.0
        %v1983 = vmax.f32 %v1855, 0.0
        %v1984 = vmax.f32 %v1856, 0.0
        %v1985 = vmax.f32 %v1857, 0.0
        %v1986 = vmax.f32 %v1858, 0.0
        %v1987 = vmax.f32 %v1859, 0.0
        %v1988 = vmax.f32 %v1860, 0.0
        %v1989 = vmax.f32 %v1861, 0.0
        %v1990 = vmax.f32 %v1862, 0.0
        %v1991 = vmax.f32 %v1863, 0.0
        %v1992 = vmax.f32 %v1864, 0.0
        %v1993 = vmax.f32 %v1865, 0.0
        %v1994 = vmax.f32 %v1866, 0.0
        %v1995 = vmax.f32 %v1867, 0.0
        %v1996 = vmax.f32 %v1868, 0.0
        %v1997 = vmax.f32 %v1869, 0.0
        %v1998 = vmax.f32 %v1870, 0.0
        %v1999 = vmax.f32 %v1871, 0.0
        %v2000 = vmax.f32 %v1872, 0.0
        %v2001 = vmax.f32 %v1873, 0.0
        %v2002 = vmax.f32 %v1874, 0.0
        %v2003 = vmax.f32 %v1875, 0.0
        %v2004 = vmax.f32 %v1876, 0.0
        %v2005 = vmax.f32 %v1877, 0.0
        %v2006 = vmax.f32 %v1878, 0.0
        %v2007 = vmax.f32 %v1879, 0.0
        %v2008 = vmax.f32 %v1880, 0.0
        %v2009 = vmax.f32 %v1881, 0.0
        %v2010 = vmax.f32 %v1882, 0.0
        %v2011 = vmax.f32 %v1883, 0.0
        %v2012 = vmax.f32 %v1884, 0.0
        %v2013 = vmax.f32 %v1885, 0.0
        %v2014 = vmax.f32 %v1886, 0.0
        %v2015 = vmax.f32 %v1887, 0.0
        %v2016 = vlaneseq
        %v2017 = vshrl.u32 %v2016, 7
        %v2018 = vsub.s32 0, %v2017
        %v2019 = vrot.slane %v967, %v2018
        %2021 = vbcast.lane.b32.xlu0 %v2019, 256
        %v2022 = vpop.permute.xlu0 %2021
        %s2024 = sor.u32 256, 8
        %2025 = vbcast.lane.b32.xlu0 %v2019, %s2024
        %v2026 = vpop.permute.xlu0 %2025
        %s2028 = sor.u32 256, 16
        %2029 = vbcast.lane.b32.xlu0 %v2019, %s2028
        %v2030 = vpop.permute.xlu0 %2029
        %s2032 = sor.u32 256, 24
        %2033 = vbcast.lane.b32.xlu0 %v2019, %s2032
        %v2034 = vpop.permute.xlu0 %2033
        %s2036 = sor.u32 256, 32
        %2037 = vbcast.lane.b32.xlu0 %v2019, %s2036
        %v2038 = vpop.permute.xlu0 %2037
        %s2040 = sor.u32 256, 40
        %2041 = vbcast.lane.b32.xlu0 %v2019, %s2040
        %v2042 = vpop.permute.xlu0 %2041
        %s2044 = sor.u32 256, 48
        %2045 = vbcast.lane.b32.xlu0 %v2019, %s2044
        %v2046 = vpop.permute.xlu0 %2045
        %s2048 = sor.u32 256, 56
        %2049 = vbcast.lane.b32.xlu0 %v2019, %s2048
        %v2050 = vpop.permute.xlu0 %2049
        %s2052 = sor.u32 256, 64
        %2053 = vbcast.lane.b32.xlu0 %v2019, %s2052
        %v2054 = vpop.permute.xlu0 %2053
        %s2056 = sor.u32 256, 72
        %2057 = vbcast.lane.b32.xlu0 %v2019, %s2056
        %v2058 = vpop.permute.xlu0 %2057
        %s2060 = sor.u32 256, 80
        %2061 = vbcast.lane.b32.xlu0 %v2019, %s2060
        %v2062 = vpop.permute.xlu0 %2061
        %s2064 = sor.u32 256, 88
        %2065 = vbcast.lane.b32.xlu0 %v2019, %s2064
        %v2066 = vpop.permute.xlu0 %2065
        %s2068 = sor.u32 256, 96
        %2069 = vbcast.lane.b32.xlu0 %v2019, %s2068
        %v2070 = vpop.permute.xlu0 %2069
        %s2072 = sor.u32 256, 104
        %2073 = vbcast.lane.b32.xlu0 %v2019, %s2072
        %v2074 = vpop.permute.xlu0 %2073
        %s2076 = sor.u32 256, 112
        %2077 = vbcast.lane.b32.xlu0 %v2019, %s2076
        %v2078 = vpop.permute.xlu0 %2077
        %s2080 = sor.u32 256, 120
        %2081 = vbcast.lane.b32.xlu0 %v2019, %s2080
        %v2082 = vpop.permute.xlu0 %2081
        %v2083 = vlaneseq
        %v2084 = vshrl.u32 %v2083, 7
        %v2085 = vsub.s32 1, %v2084
        %v2086 = vrot.slane %v967, %v2085
        %2088 = vbcast.lane.b32.xlu0 %v2086, 256
        %v2089 = vpop.permute.xlu0 %2088
        %s2091 = sor.u32 256, 8
        %2092 = vbcast.lane.b32.xlu0 %v2086, %s2091
        %v2093 = vpop.permute.xlu0 %2092
        %s2095 = sor.u32 256, 16
        %2096 = vbcast.lane.b32.xlu0 %v2086, %s2095
        %v2097 = vpop.permute.xlu0 %2096
        %s2099 = sor.u32 256, 24
        %2100 = vbcast.lane.b32.xlu0 %v2086, %s2099
        %v2101 = vpop.permute.xlu0 %2100
        %s2103 = sor.u32 256, 32
        %2104 = vbcast.lane.b32.xlu0 %v2086, %s2103
        %v2105 = vpop.permute.xlu0 %2104
        %s2107 = sor.u32 256, 40
        %2108 = vbcast.lane.b32.xlu0 %v2086, %s2107
        %v2109 = vpop.permute.xlu0 %2108
        %s2111 = sor.u32 256, 48
        %2112 = vbcast.lane.b32.xlu0 %v2086, %s2111
        %v2113 = vpop.permute.xlu0 %2112
        %s2115 = sor.u32 256, 56
        %2116 = vbcast.lane.b32.xlu0 %v2086, %s2115
        %v2117 = vpop.permute.xlu0 %2116
        %s2119 = sor.u32 256, 64
        %2120 = vbcast.lane.b32.xlu0 %v2086, %s2119
        %v2121 = vpop.permute.xlu0 %2120
        %s2123 = sor.u32 256, 72
        %2124 = vbcast.lane.b32.xlu0 %v2086, %s2123
        %v2125 = vpop.permute.xlu0 %2124
        %s2127 = sor.u32 256, 80
        %2128 = vbcast.lane.b32.xlu0 %v2086, %s2127
        %v2129 = vpop.permute.xlu0 %2128
        %s2131 = sor.u32 256, 88
        %2132 = vbcast.lane.b32.xlu0 %v2086, %s2131
        %v2133 = vpop.permute.xlu0 %2132
        %s2135 = sor.u32 256, 96
        %2136 = vbcast.lane.b32.xlu0 %v2086, %s2135
        %v2137 = vpop.permute.xlu0 %2136
        %s2139 = sor.u32 256, 104
        %2140 = vbcast.lane.b32.xlu0 %v2086, %s2139
        %v2141 = vpop.permute.xlu0 %2140
        %s2143 = sor.u32 256, 112
        %2144 = vbcast.lane.b32.xlu0 %v2086, %s2143
        %v2145 = vpop.permute.xlu0 %2144
        %s2147 = sor.u32 256, 120
        %2148 = vbcast.lane.b32.xlu0 %v2086, %s2147
        %v2149 = vpop.permute.xlu0 %2148
        %v2150 = vlaneseq
        %v2151 = vshrl.u32 %v2150, 7
        %v2152 = vsub.s32 2, %v2151
        %v2153 = vrot.slane %v967, %v2152
        %2155 = vbcast.lane.b32.xlu0 %v2153, 256
        %v2156 = vpop.permute.xlu0 %2155
        %s2158 = sor.u32 256, 8
        %2159 = vbcast.lane.b32.xlu0 %v2153, %s2158
        %v2160 = vpop.permute.xlu0 %2159
        %s2162 = sor.u32 256, 16
        %2163 = vbcast.lane.b32.xlu0 %v2153, %s2162
        %v2164 = vpop.permute.xlu0 %2163
        %s2166 = sor.u32 256, 24
        %2167 = vbcast.lane.b32.xlu0 %v2153, %s2166
        %v2168 = vpop.permute.xlu0 %2167
        %s2170 = sor.u32 256, 32
        %2171 = vbcast.lane.b32.xlu0 %v2153, %s2170
        %v2172 = vpop.permute.xlu0 %2171
        %s2174 = sor.u32 256, 40
        %2175 = vbcast.lane.b32.xlu0 %v2153, %s2174
        %v2176 = vpop.permute.xlu0 %2175
        %s2178 = sor.u32 256, 48
        %2179 = vbcast.lane.b32.xlu0 %v2153, %s2178
        %v2180 = vpop.permute.xlu0 %2179
        %s2182 = sor.u32 256, 56
        %2183 = vbcast.lane.b32.xlu0 %v2153, %s2182
        %v2184 = vpop.permute.xlu0 %2183
        %s2186 = sor.u32 256, 64
        %2187 = vbcast.lane.b32.xlu0 %v2153, %s2186
        %v2188 = vpop.permute.xlu0 %2187
        %s2190 = sor.u32 256, 72
        %2191 = vbcast.lane.b32.xlu0 %v2153, %s2190
        %v2192 = vpop.permute.xlu0 %2191
        %s2194 = sor.u32 256, 80
        %2195 = vbcast.lane.b32.xlu0 %v2153, %s2194
        %v2196 = vpop.permute.xlu0 %2195
        %s2198 = sor.u32 256, 88
        %2199 = vbcast.lane.b32.xlu0 %v2153, %s2198
        %v2200 = vpop.permute.xlu0 %2199
        %s2202 = sor.u32 256, 96
        %2203 = vbcast.lane.b32.xlu0 %v2153, %s2202
        %v2204 = vpop.permute.xlu0 %2203
        %s2206 = sor.u32 256, 104
        %2207 = vbcast.lane.b32.xlu0 %v2153, %s2206
        %v2208 = vpop.permute.xlu0 %2207
        %s2210 = sor.u32 256, 112
        %2211 = vbcast.lane.b32.xlu0 %v2153, %s2210
        %v2212 = vpop.permute.xlu0 %2211
        %s2214 = sor.u32 256, 120
        %2215 = vbcast.lane.b32.xlu0 %v2153, %s2214
        %v2216 = vpop.permute.xlu0 %2215
        %v2217 = vlaneseq
        %v2218 = vshrl.u32 %v2217, 7
        %v2219 = vsub.s32 3, %v2218
        %v2220 = vrot.slane %v967, %v2219
        %2222 = vbcast.lane.b32.xlu0 %v2220, 256
        %v2223 = vpop.permute.xlu0 %2222
        %s2225 = sor.u32 256, 8
        %2226 = vbcast.lane.b32.xlu0 %v2220, %s2225
        %v2227 = vpop.permute.xlu0 %2226
        %s2229 = sor.u32 256, 16
        %2230 = vbcast.lane.b32.xlu0 %v2220, %s2229
        %v2231 = vpop.permute.xlu0 %2230
        %s2233 = sor.u32 256, 24
        %2234 = vbcast.lane.b32.xlu0 %v2220, %s2233
        %v2235 = vpop.permute.xlu0 %2234
        %s2237 = sor.u32 256, 32
        %2238 = vbcast.lane.b32.xlu0 %v2220, %s2237
        %v2239 = vpop.permute.xlu0 %2238
        %s2241 = sor.u32 256, 40
        %2242 = vbcast.lane.b32.xlu0 %v2220, %s2241
        %v2243 = vpop.permute.xlu0 %2242
        %s2245 = sor.u32 256, 48
        %2246 = vbcast.lane.b32.xlu0 %v2220, %s2245
        %v2247 = vpop.permute.xlu0 %2246
        %s2249 = sor.u32 256, 56
        %2250 = vbcast.lane.b32.xlu0 %v2220, %s2249
        %v2251 = vpop.permute.xlu0 %2250
        %s2253 = sor.u32 256, 64
        %2254 = vbcast.lane.b32.xlu0 %v2220, %s2253
        %v2255 = vpop.permute.xlu0 %2254
        %s2257 = sor.u32 256, 72
        %2258 = vbcast.lane.b32.xlu0 %v2220, %s2257
        %v2259 = vpop.permute.xlu0 %2258
        %s2261 = sor.u32 256, 80
        %2262 = vbcast.lane.b32.xlu0 %v2220, %s2261
        %v2263 = vpop.permute.xlu0 %2262
        %s2265 = sor.u32 256, 88
        %2266 = vbcast.lane.b32.xlu0 %v2220, %s2265
        %v2267 = vpop.permute.xlu0 %2266
        %s2269 = sor.u32 256, 96
        %2270 = vbcast.lane.b32.xlu0 %v2220, %s2269
        %v2271 = vpop.permute.xlu0 %2270
        %s2273 = sor.u32 256, 104
        %2274 = vbcast.lane.b32.xlu0 %v2220, %s2273
        %v2275 = vpop.permute.xlu0 %2274
        %s2277 = sor.u32 256, 112
        %2278 = vbcast.lane.b32.xlu0 %v2220, %s2277
        %v2279 = vpop.permute.xlu0 %2278
        %s2281 = sor.u32 256, 120
        %2282 = vbcast.lane.b32.xlu0 %v2220, %s2281
        %v2283 = vpop.permute.xlu0 %2282
        %v2284 = vlaneseq
        %v2285 = vshrl.u32 %v2284, 7
        %v2286 = vsub.s32 4, %v2285
        %v2287 = vrot.slane %v967, %v2286
        %2289 = vbcast.lane.b32.xlu0 %v2287, 256
        %v2290 = vpop.permute.xlu0 %2289
        %s2292 = sor.u32 256, 8
        %2293 = vbcast.lane.b32.xlu0 %v2287, %s2292
        %v2294 = vpop.permute.xlu0 %2293
        %s2296 = sor.u32 256, 16
        %2297 = vbcast.lane.b32.xlu0 %v2287, %s2296
        %v2298 = vpop.permute.xlu0 %2297
        %s2300 = sor.u32 256, 24
        %2301 = vbcast.lane.b32.xlu0 %v2287, %s2300
        %v2302 = vpop.permute.xlu0 %2301
        %s2304 = sor.u32 256, 32
        %2305 = vbcast.lane.b32.xlu0 %v2287, %s2304
        %v2306 = vpop.permute.xlu0 %2305
        %s2308 = sor.u32 256, 40
        %2309 = vbcast.lane.b32.xlu0 %v2287, %s2308
        %v2310 = vpop.permute.xlu0 %2309
        %s2312 = sor.u32 256, 48
        %2313 = vbcast.lane.b32.xlu0 %v2287, %s2312
        %v2314 = vpop.permute.xlu0 %2313
        %s2316 = sor.u32 256, 56
        %2317 = vbcast.lane.b32.xlu0 %v2287, %s2316
        %v2318 = vpop.permute.xlu0 %2317
        %s2320 = sor.u32 256, 64
        %2321 = vbcast.lane.b32.xlu0 %v2287, %s2320
        %v2322 = vpop.permute.xlu0 %2321
        %s2324 = sor.u32 256, 72
        %2325 = vbcast.lane.b32.xlu0 %v2287, %s2324
        %v2326 = vpop.permute.xlu0 %2325
        %s2328 = sor.u32 256, 80
        %2329 = vbcast.lane.b32.xlu0 %v2287, %s2328
        %v2330 = vpop.permute.xlu0 %2329
        %s2332 = sor.u32 256, 88
        %2333 = vbcast.lane.b32.xlu0 %v2287, %s2332
        %v2334 = vpop.permute.xlu0 %2333
        %s2336 = sor.u32 256, 96
        %2337 = vbcast.lane.b32.xlu0 %v2287, %s2336
        %v2338 = vpop.permute.xlu0 %2337
        %s2340 = sor.u32 256, 104
        %2341 = vbcast.lane.b32.xlu0 %v2287, %s2340
        %v2342 = vpop.permute.xlu0 %2341
        %s2344 = sor.u32 256, 112
        %2345 = vbcast.lane.b32.xlu0 %v2287, %s2344
        %v2346 = vpop.permute.xlu0 %2345
        %s2348 = sor.u32 256, 120
        %2349 = vbcast.lane.b32.xlu0 %v2287, %s2348
        %v2350 = vpop.permute.xlu0 %2349
        %v2351 = vlaneseq
        %v2352 = vshrl.u32 %v2351, 7
        %v2353 = vsub.s32 5, %v2352
        %v2354 = vrot.slane %v967, %v2353
        %2356 = vbcast.lane.b32.xlu0 %v2354, 256
        %v2357 = vpop.permute.xlu0 %2356
        %s2359 = sor.u32 256, 8
        %2360 = vbcast.lane.b32.xlu0 %v2354, %s2359
        %v2361 = vpop.permute.xlu0 %2360
        %s2363 = sor.u32 256, 16
        %2364 = vbcast.lane.b32.xlu0 %v2354, %s2363
        %v2365 = vpop.permute.xlu0 %2364
        %s2367 = sor.u32 256, 24
        %2368 = vbcast.lane.b32.xlu0 %v2354, %s2367
        %v2369 = vpop.permute.xlu0 %2368
        %s2371 = sor.u32 256, 32
        %2372 = vbcast.lane.b32.xlu0 %v2354, %s2371
        %v2373 = vpop.permute.xlu0 %2372
        %s2375 = sor.u32 256, 40
        %2376 = vbcast.lane.b32.xlu0 %v2354, %s2375
        %v2377 = vpop.permute.xlu0 %2376
        %s2379 = sor.u32 256, 48
        %2380 = vbcast.lane.b32.xlu0 %v2354, %s2379
        %v2381 = vpop.permute.xlu0 %2380
        %s2383 = sor.u32 256, 56
        %2384 = vbcast.lane.b32.xlu0 %v2354, %s2383
        %v2385 = vpop.permute.xlu0 %2384
        %s2387 = sor.u32 256, 64
        %2388 = vbcast.lane.b32.xlu0 %v2354, %s2387
        %v2389 = vpop.permute.xlu0 %2388
        %s2391 = sor.u32 256, 72
        %2392 = vbcast.lane.b32.xlu0 %v2354, %s2391
        %v2393 = vpop.permute.xlu0 %2392
        %s2395 = sor.u32 256, 80
        %2396 = vbcast.lane.b32.xlu0 %v2354, %s2395
        %v2397 = vpop.permute.xlu0 %2396
        %s2399 = sor.u32 256, 88
        %2400 = vbcast.lane.b32.xlu0 %v2354, %s2399
        %v2401 = vpop.permute.xlu0 %2400
        %s2403 = sor.u32 256, 96
        %2404 = vbcast.lane.b32.xlu0 %v2354, %s2403
        %v2405 = vpop.permute.xlu0 %2404
        %s2407 = sor.u32 256, 104
        %2408 = vbcast.lane.b32.xlu0 %v2354, %s2407
        %v2409 = vpop.permute.xlu0 %2408
        %s2411 = sor.u32 256, 112
        %2412 = vbcast.lane.b32.xlu0 %v2354, %s2411
        %v2413 = vpop.permute.xlu0 %2412
        %s2415 = sor.u32 256, 120
        %2416 = vbcast.lane.b32.xlu0 %v2354, %s2415
        %v2417 = vpop.permute.xlu0 %2416
        %v2418 = vlaneseq
        %v2419 = vshrl.u32 %v2418, 7
        %v2420 = vsub.s32 6, %v2419
        %v2421 = vrot.slane %v967, %v2420
        %2423 = vbcast.lane.b32.xlu0 %v2421, 256
        %v2424 = vpop.permute.xlu0 %2423
        %s2426 = sor.u32 256, 8
        %2427 = vbcast.lane.b32.xlu0 %v2421, %s2426
        %v2428 = vpop.permute.xlu0 %2427
        %s2430 = sor.u32 256, 16
        %2431 = vbcast.lane.b32.xlu0 %v2421, %s2430
        %v2432 = vpop.permute.xlu0 %2431
        %s2434 = sor.u32 256, 24
        %2435 = vbcast.lane.b32.xlu0 %v2421, %s2434
        %v2436 = vpop.permute.xlu0 %2435
        %s2438 = sor.u32 256, 32
        %2439 = vbcast.lane.b32.xlu0 %v2421, %s2438
        %v2440 = vpop.permute.xlu0 %2439
        %s2442 = sor.u32 256, 40
        %2443 = vbcast.lane.b32.xlu0 %v2421, %s2442
        %v2444 = vpop.permute.xlu0 %2443
        %s2446 = sor.u32 256, 48
        %2447 = vbcast.lane.b32.xlu0 %v2421, %s2446
        %v2448 = vpop.permute.xlu0 %2447
        %s2450 = sor.u32 256, 56
        %2451 = vbcast.lane.b32.xlu0 %v2421, %s2450
        %v2452 = vpop.permute.xlu0 %2451
        %s2454 = sor.u32 256, 64
        %2455 = vbcast.lane.b32.xlu0 %v2421, %s2454
        %v2456 = vpop.permute.xlu0 %2455
        %s2458 = sor.u32 256, 72
        %2459 = vbcast.lane.b32.xlu0 %v2421, %s2458
        %v2460 = vpop.permute.xlu0 %2459
        %s2462 = sor.u32 256, 80
        %2463 = vbcast.lane.b32.xlu0 %v2421, %s2462
        %v2464 = vpop.permute.xlu0 %2463
        %s2466 = sor.u32 256, 88
        %2467 = vbcast.lane.b32.xlu0 %v2421, %s2466
        %v2468 = vpop.permute.xlu0 %2467
        %s2470 = sor.u32 256, 96
        %2471 = vbcast.lane.b32.xlu0 %v2421, %s2470
        %v2472 = vpop.permute.xlu0 %2471
        %s2474 = sor.u32 256, 104
        %2475 = vbcast.lane.b32.xlu0 %v2421, %s2474
        %v2476 = vpop.permute.xlu0 %2475
        %s2478 = sor.u32 256, 112
        %2479 = vbcast.lane.b32.xlu0 %v2421, %s2478
        %v2480 = vpop.permute.xlu0 %2479
        %s2482 = sor.u32 256, 120
        %2483 = vbcast.lane.b32.xlu0 %v2421, %s2482
        %v2484 = vpop.permute.xlu0 %2483
        %v2485 = vlaneseq
        %v2486 = vshrl.u32 %v2485, 7
        %v2487 = vsub.s32 7, %v2486
        %v2488 = vrot.slane %v967, %v2487
        %2490 = vbcast.lane.b32.xlu0 %v2488, 256
        %v2491 = vpop.permute.xlu0 %2490
        %s2493 = sor.u32 256, 8
        %2494 = vbcast.lane.b32.xlu0 %v2488, %s2493
        %v2495 = vpop.permute.xlu0 %2494
        %s2497 = sor.u32 256, 16
        %2498 = vbcast.lane.b32.xlu0 %v2488, %s2497
        %v2499 = vpop.permute.xlu0 %2498
        %s2501 = sor.u32 256, 24
        %2502 = vbcast.lane.b32.xlu0 %v2488, %s2501
        %v2503 = vpop.permute.xlu0 %2502
        %s2505 = sor.u32 256, 32
        %2506 = vbcast.lane.b32.xlu0 %v2488, %s2505
        %v2507 = vpop.permute.xlu0 %2506
        %s2509 = sor.u32 256, 40
        %2510 = vbcast.lane.b32.xlu0 %v2488, %s2509
        %v2511 = vpop.permute.xlu0 %2510
        %s2513 = sor.u32 256, 48
        %2514 = vbcast.lane.b32.xlu0 %v2488, %s2513
        %v2515 = vpop.permute.xlu0 %2514
        %s2517 = sor.u32 256, 56
        %2518 = vbcast.lane.b32.xlu0 %v2488, %s2517
        %v2519 = vpop.permute.xlu0 %2518
        %s2521 = sor.u32 256, 64
        %2522 = vbcast.lane.b32.xlu0 %v2488, %s2521
        %v2523 = vpop.permute.xlu0 %2522
        %s2525 = sor.u32 256, 72
        %2526 = vbcast.lane.b32.xlu0 %v2488, %s2525
        %v2527 = vpop.permute.xlu0 %2526
        %s2529 = sor.u32 256, 80
        %2530 = vbcast.lane.b32.xlu0 %v2488, %s2529
        %v2531 = vpop.permute.xlu0 %2530
        %s2533 = sor.u32 256, 88
        %2534 = vbcast.lane.b32.xlu0 %v2488, %s2533
        %v2535 = vpop.permute.xlu0 %2534
        %s2537 = sor.u32 256, 96
        %2538 = vbcast.lane.b32.xlu0 %v2488, %s2537
        %v2539 = vpop.permute.xlu0 %2538
        %s2541 = sor.u32 256, 104
        %2542 = vbcast.lane.b32.xlu0 %v2488, %s2541
        %v2543 = vpop.permute.xlu0 %2542
        %s2545 = sor.u32 256, 112
        %2546 = vbcast.lane.b32.xlu0 %v2488, %s2545
        %v2547 = vpop.permute.xlu0 %2546
        %s2549 = sor.u32 256, 120
        %2550 = vbcast.lane.b32.xlu0 %v2488, %s2549
        %v2551 = vpop.permute.xlu0 %2550
        %v2552 = vsub.f32 %v2022, %v424
        %v2553 = vsub.f32 %v2026, %v425
        %v2554 = vsub.f32 %v2030, %v426
        %v2555 = vsub.f32 %v2034, %v427
        %v2556 = vsub.f32 %v2038, %v428
        %v2557 = vsub.f32 %v2042, %v429
        %v2558 = vsub.f32 %v2046, %v430
        %v2559 = vsub.f32 %v2050, %v431
        %v2560 = vsub.f32 %v2054, %v432
        %v2561 = vsub.f32 %v2058, %v433
        %v2562 = vsub.f32 %v2062, %v434
        %v2563 = vsub.f32 %v2066, %v435
        %v2564 = vsub.f32 %v2070, %v436
        %v2565 = vsub.f32 %v2074, %v437
        %v2566 = vsub.f32 %v2078, %v438
        %v2567 = vsub.f32 %v2082, %v439
        %v2568 = vsub.f32 %v2089, %v424
        %v2569 = vsub.f32 %v2093, %v425
        %v2570 = vsub.f32 %v2097, %v426
        %v2571 = vsub.f32 %v2101, %v427
        %v2572 = vsub.f32 %v2105, %v428
        %v2573 = vsub.f32 %v2109, %v429
        %v2574 = vsub.f32 %v2113, %v430
        %v2575 = vsub.f32 %v2117, %v431
        %v2576 = vsub.f32 %v2121, %v432
        %v2577 = vsub.f32 %v2125, %v433
        %v2578 = vsub.f32 %v2129, %v434
        %v2579 = vsub.f32 %v2133, %v435
        %v2580 = vsub.f32 %v2137, %v436
        %v2581 = vsub.f32 %v2141, %v437
        %v2582 = vsub.f32 %v2145, %v438
        %v2583 = vsub.f32 %v2149, %v439
        %v2584 = vsub.f32 %v2156, %v424
        %v2585 = vsub.f32 %v2160, %v425
        %v2586 = vsub.f32 %v2164, %v426
        %v2587 = vsub.f32 %v2168, %v427
        %v2588 = vsub.f32 %v2172, %v428
        %v2589 = vsub.f32 %v2176, %v429
        %v2590 = vsub.f32 %v2180, %v430
        %v2591 = vsub.f32 %v2184, %v431
        %v2592 = vsub.f32 %v2188, %v432
        %v2593 = vsub.f32 %v2192, %v433
        %v2594 = vsub.f32 %v2196, %v434
        %v2595 = vsub.f32 %v2200, %v435
        %v2596 = vsub.f32 %v2204, %v436
        %v2597 = vsub.f32 %v2208, %v437
        %v2598 = vsub.f32 %v2212, %v438
        %v2599 = vsub.f32 %v2216, %v439
        %v2600 = vsub.f32 %v2223, %v424
        %v2601 = vsub.f32 %v2227, %v425
        %v2602 = vsub.f32 %v2231, %v426
        %v2603 = vsub.f32 %v2235, %v427
        %v2604 = vsub.f32 %v2239, %v428
        %v2605 = vsub.f32 %v2243, %v429
        %v2606 = vsub.f32 %v2247, %v430
        %v2607 = vsub.f32 %v2251, %v431
        %v2608 = vsub.f32 %v2255, %v432
        %v2609 = vsub.f32 %v2259, %v433
        %v2610 = vsub.f32 %v2263, %v434
        %v2611 = vsub.f32 %v2267, %v435
        %v2612 = vsub.f32 %v2271, %v436
        %v2613 = vsub.f32 %v2275, %v437
        %v2614 = vsub.f32 %v2279, %v438
        %v2615 = vsub.f32 %v2283, %v439
        %v2616 = vsub.f32 %v2290, %v424
        %v2617 = vsub.f32 %v2294, %v425
        %v2618 = vsub.f32 %v2298, %v426
        %v2619 = vsub.f32 %v2302, %v427
        %v2620 = vsub.f32 %v2306, %v428
        %v2621 = vsub.f32 %v2310, %v429
        %v2622 = vsub.f32 %v2314, %v430
        %v2623 = vsub.f32 %v2318, %v431
        %v2624 = vsub.f32 %v2322, %v432
        %v2625 = vsub.f32 %v2326, %v433
        %v2626 = vsub.f32 %v2330, %v434
        %v2627 = vsub.f32 %v2334, %v435
        %v2628 = vsub.f32 %v2338, %v436
        %v2629 = vsub.f32 %v2342, %v437
        %v2630 = vsub.f32 %v2346, %v438
        %v2631 = vsub.f32 %v2350, %v439
        %v2632 = vsub.f32 %v2357, %v424
        %v2633 = vsub.f32 %v2361, %v425
        %v2634 = vsub.f32 %v2365, %v426
        %v2635 = vsub.f32 %v2369, %v427
        %v2636 = vsub.f32 %v2373, %v428
        %v2637 = vsub.f32 %v2377, %v429
        %v2638 = vsub.f32 %v2381, %v430
        %v2639 = vsub.f32 %v2385, %v431
        %v2640 = vsub.f32 %v2389, %v432
        %v2641 = vsub.f32 %v2393, %v433
        %v2642 = vsub.f32 %v2397, %v434
        %v2643 = vsub.f32 %v2401, %v435
        %v2644 = vsub.f32 %v2405, %v436
        %v2645 = vsub.f32 %v2409, %v437
        %v2646 = vsub.f32 %v2413, %v438
        %v2647 = vsub.f32 %v2417, %v439
        %v2648 = vsub.f32 %v2424, %v424
        %v2649 = vsub.f32 %v2428, %v425
        %v2650 = vsub.f32 %v2432, %v426
        %v2651 = vsub.f32 %v2436, %v427
        %v2652 = vsub.f32 %v2440, %v428
        %v2653 = vsub.f32 %v2444, %v429
        %v2654 = vsub.f32 %v2448, %v430
        %v2655 = vsub.f32 %v2452, %v431
        %v2656 = vsub.f32 %v2456, %v432
        %v2657 = vsub.f32 %v2460, %v433
        %v2658 = vsub.f32 %v2464, %v434
        %v2659 = vsub.f32 %v2468, %v435
        %v2660 = vsub.f32 %v2472, %v436
        %v2661 = vsub.f32 %v2476, %v437
        %v2662 = vsub.f32 %v2480, %v438
        %v2663 = vsub.f32 %v2484, %v439
        %v2664 = vsub.f32 %v2491, %v424
        %v2665 = vsub.f32 %v2495, %v425
        %v2666 = vsub.f32 %v2499, %v426
        %v2667 = vsub.f32 %v2503, %v427
        %v2668 = vsub.f32 %v2507, %v428
        %v2669 = vsub.f32 %v2511, %v429
        %v2670 = vsub.f32 %v2515, %v430
        %v2671 = vsub.f32 %v2519, %v431
        %v2672 = vsub.f32 %v2523, %v432
        %v2673 = vsub.f32 %v2527, %v433
        %v2674 = vsub.f32 %v2531, %v434
        %v2675 = vsub.f32 %v2535, %v435
        %v2676 = vsub.f32 %v2539, %v436
        %v2677 = vsub.f32 %v2543, %v437
        %v2678 = vsub.f32 %v2547, %v438
        %v2679 = vsub.f32 %v2551, %v439
        %v2680 = vand.u32 2147483647, %v2552
        %v2681 = vand.u32 2147483647, %v2553
        %v2682 = vand.u32 2147483647, %v2554
        %v2683 = vand.u32 2147483647, %v2555
        %v2684 = vand.u32 2147483647, %v2556
        %v2685 = vand.u32 2147483647, %v2557
        %v2686 = vand.u32 2147483647, %v2558
        %v2687 = vand.u32 2147483647, %v2559
        %v2688 = vand.u32 2147483647, %v2560
        %v2689 = vand.u32 2147483647, %v2561
        %v2690 = vand.u32 2147483647, %v2562
        %v2691 = vand.u32 2147483647, %v2563
        %v2692 = vand.u32 2147483647, %v2564
        %v2693 = vand.u32 2147483647, %v2565
        %v2694 = vand.u32 2147483647, %v2566
        %v2695 = vand.u32 2147483647, %v2567
        %v2696 = vand.u32 2147483647, %v2568
        %v2697 = vand.u32 2147483647, %v2569
        %v2698 = vand.u32 2147483647, %v2570
        %v2699 = vand.u32 2147483647, %v2571
        %v2700 = vand.u32 2147483647, %v2572
        %v2701 = vand.u32 2147483647, %v2573
        %v2702 = vand.u32 2147483647, %v2574
        %v2703 = vand.u32 2147483647, %v2575
        %v2704 = vand.u32 2147483647, %v2576
        %v2705 = vand.u32 2147483647, %v2577
        %v2706 = vand.u32 2147483647, %v2578
        %v2707 = vand.u32 2147483647, %v2579
        %v2708 = vand.u32 2147483647, %v2580
        %v2709 = vand.u32 2147483647, %v2581
        %v2710 = vand.u32 2147483647, %v2582
        %v2711 = vand.u32 2147483647, %v2583
        %v2712 = vand.u32 2147483647, %v2584
        %v2713 = vand.u32 2147483647, %v2585
        %v2714 = vand.u32 2147483647, %v2586
        %v2715 = vand.u32 2147483647, %v2587
        %v2716 = vand.u32 2147483647, %v2588
        %v2717 = vand.u32 2147483647, %v2589
        %v2718 = vand.u32 2147483647, %v2590
        %v2719 = vand.u32 2147483647, %v2591
        %v2720 = vand.u32 2147483647, %v2592
        %v2721 = vand.u32 2147483647, %v2593
        %v2722 = vand.u32 2147483647, %v2594
        %v2723 = vand.u32 2147483647, %v2595
        %v2724 = vand.u32 2147483647, %v2596
        %v2725 = vand.u32 2147483647, %v2597
        %v2726 = vand.u32 2147483647, %v2598
        %v2727 = vand.u32 2147483647, %v2599
        %v2728 = vand.u32 2147483647, %v2600
        %v2729 = vand.u32 2147483647, %v2601
        %v2730 = vand.u32 2147483647, %v2602
        %v2731 = vand.u32 2147483647, %v2603
        %v2732 = vand.u32 2147483647, %v2604
        %v2733 = vand.u32 2147483647, %v2605
        %v2734 = vand.u32 2147483647, %v2606
        %v2735 = vand.u32 2147483647, %v2607
        %v2736 = vand.u32 2147483647, %v2608
        %v2737 = vand.u32 2147483647, %v2609
        %v2738 = vand.u32 2147483647, %v2610
        %v2739 = vand.u32 2147483647, %v2611
        %v2740 = vand.u32 2147483647, %v2612
        %v2741 = vand.u32 2147483647, %v2613
        %v2742 = vand.u32 2147483647, %v2614
        %v2743 = vand.u32 2147483647, %v2615
        %v2744 = vand.u32 2147483647, %v2616
        %v2745 = vand.u32 2147483647, %v2617
        %v2746 = vand.u32 2147483647, %v2618
        %v2747 = vand.u32 2147483647, %v2619
        %v2748 = vand.u32 2147483647, %v2620
        %v2749 = vand.u32 2147483647, %v2621
        %v2750 = vand.u32 2147483647, %v2622
        %v2751 = vand.u32 2147483647, %v2623
        %v2752 = vand.u32 2147483647, %v2624
        %v2753 = vand.u32 2147483647, %v2625
        %v2754 = vand.u32 2147483647, %v2626
        %v2755 = vand.u32 2147483647, %v2627
        %v2756 = vand.u32 2147483647, %v2628
        %v2757 = vand.u32 2147483647, %v2629
        %v2758 = vand.u32 2147483647, %v2630
        %v2759 = vand.u32 2147483647, %v2631
        %v2760 = vand.u32 2147483647, %v2632
        %v2761 = vand.u32 2147483647, %v2633
        %v2762 = vand.u32 2147483647, %v2634
        %v2763 = vand.u32 2147483647, %v2635
        %v2764 = vand.u32 2147483647, %v2636
        %v2765 = vand.u32 2147483647, %v2637
        %v2766 = vand.u32 2147483647, %v2638
        %v2767 = vand.u32 2147483647, %v2639
        %v2768 = vand.u32 2147483647, %v2640
        %v2769 = vand.u32 2147483647, %v2641
        %v2770 = vand.u32 2147483647, %v2642
        %v2771 = vand.u32 2147483647, %v2643
        %v2772 = vand.u32 2147483647, %v2644
        %v2773 = vand.u32 2147483647, %v2645
        %v2774 = vand.u32 2147483647, %v2646
        %v2775 = vand.u32 2147483647, %v2647
        %v2776 = vand.u32 2147483647, %v2648
        %v2777 = vand.u32 2147483647, %v2649
        %v2778 = vand.u32 2147483647, %v2650
        %v2779 = vand.u32 2147483647, %v2651
        %v2780 = vand.u32 2147483647, %v2652
        %v2781 = vand.u32 2147483647, %v2653
        %v2782 = vand.u32 2147483647, %v2654
        %v2783 = vand.u32 2147483647, %v2655
        %v2784 = vand.u32 2147483647, %v2656
        %v2785 = vand.u32 2147483647, %v2657
        %v2786 = vand.u32 2147483647, %v2658
        %v2787 = vand.u32 2147483647, %v2659
        %v2788 = vand.u32 2147483647, %v2660
        %v2789 = vand.u32 2147483647, %v2661
        %v2790 = vand.u32 2147483647, %v2662
        %v2791 = vand.u32 2147483647, %v2663
        %v2792 = vand.u32 2147483647, %v2664
        %v2793 = vand.u32 2147483647, %v2665
        %v2794 = vand.u32 2147483647, %v2666
        %v2795 = vand.u32 2147483647, %v2667
        %v2796 = vand.u32 2147483647, %v2668
        %v2797 = vand.u32 2147483647, %v2669
        %v2798 = vand.u32 2147483647, %v2670
        %v2799 = vand.u32 2147483647, %v2671
        %v2800 = vand.u32 2147483647, %v2672
        %v2801 = vand.u32 2147483647, %v2673
        %v2802 = vand.u32 2147483647, %v2674
        %v2803 = vand.u32 2147483647, %v2675
        %v2804 = vand.u32 2147483647, %v2676
        %v2805 = vand.u32 2147483647, %v2677
        %v2806 = vand.u32 2147483647, %v2678
        %v2807 = vand.u32 2147483647, %v2679
        %v2808 = vsub.f32 1.0, %v2680
        %v2809 = vsub.f32 1.0, %v2681
        %v2810 = vsub.f32 1.0, %v2682
        %v2811 = vsub.f32 1.0, %v2683
        %v2812 = vsub.f32 1.0, %v2684
        %v2813 = vsub.f32 1.0, %v2685
        %v2814 = vsub.f32 1.0, %v2686
        %v2815 = vsub.f32 1.0, %v2687
        %v2816 = vsub.f32 1.0, %v2688
        %v2817 = vsub.f32 1.0, %v2689
        %v2818 = vsub.f32 1.0, %v2690
        %v2819 = vsub.f32 1.0, %v2691
        %v2820 = vsub.f32 1.0, %v2692
        %v2821 = vsub.f32 1.0, %v2693
        %v2822 = vsub.f32 1.0, %v2694
        %v2823 = vsub.f32 1.0, %v2695
        %v2824 = vsub.f32 1.0, %v2696
        %v2825 = vsub.f32 1.0, %v2697
        %v2826 = vsub.f32 1.0, %v2698
        %v2827 = vsub.f32 1.0, %v2699
        %v2828 = vsub.f32 1.0, %v2700
        %v2829 = vsub.f32 1.0, %v2701
        %v2830 = vsub.f32 1.0, %v2702
        %v2831 = vsub.f32 1.0, %v2703
        %v2832 = vsub.f32 1.0, %v2704
        %v2833 = vsub.f32 1.0, %v2705
        %v2834 = vsub.f32 1.0, %v2706
        %v2835 = vsub.f32 1.0, %v2707
        %v2836 = vsub.f32 1.0, %v2708
        %v2837 = vsub.f32 1.0, %v2709
        %v2838 = vsub.f32 1.0, %v2710
        %v2839 = vsub.f32 1.0, %v2711
        %v2840 = vsub.f32 1.0, %v2712
        %v2841 = vsub.f32 1.0, %v2713
        %v2842 = vsub.f32 1.0, %v2714
        %v2843 = vsub.f32 1.0, %v2715
        %v2844 = vsub.f32 1.0, %v2716
        %v2845 = vsub.f32 1.0, %v2717
        %v2846 = vsub.f32 1.0, %v2718
        %v2847 = vsub.f32 1.0, %v2719
        %v2848 = vsub.f32 1.0, %v2720
        %v2849 = vsub.f32 1.0, %v2721
        %v2850 = vsub.f32 1.0, %v2722
        %v2851 = vsub.f32 1.0, %v2723
        %v2852 = vsub.f32 1.0, %v2724
        %v2853 = vsub.f32 1.0, %v2725
        %v2854 = vsub.f32 1.0, %v2726
        %v2855 = vsub.f32 1.0, %v2727
        %v2856 = vsub.f32 1.0, %v2728
        %v2857 = vsub.f32 1.0, %v2729
        %v2858 = vsub.f32 1.0, %v2730
        %v2859 = vsub.f32 1.0, %v2731
        %v2860 = vsub.f32 1.0, %v2732
        %v2861 = vsub.f32 1.0, %v2733
        %v2862 = vsub.f32 1.0, %v2734
        %v2863 = vsub.f32 1.0, %v2735
        %v2864 = vsub.f32 1.0, %v2736
        %v2865 = vsub.f32 1.0, %v2737
        %v2866 = vsub.f32 1.0, %v2738
        %v2867 = vsub.f32 1.0, %v2739
        %v2868 = vsub.f32 1.0, %v2740
        %v2869 = vsub.f32 1.0, %v2741
        %v2870 = vsub.f32 1.0, %v2742
        %v2871 = vsub.f32 1.0, %v2743
        %v2872 = vsub.f32 1.0, %v2744
        %v2873 = vsub.f32 1.0, %v2745
        %v2874 = vsub.f32 1.0, %v2746
        %v2875 = vsub.f32 1.0, %v2747
        %v2876 = vsub.f32 1.0, %v2748
        %v2877 = vsub.f32 1.0, %v2749
        %v2878 = vsub.f32 1.0, %v2750
        %v2879 = vsub.f32 1.0, %v2751
        %v2880 = vsub.f32 1.0, %v2752
        %v2881 = vsub.f32 1.0, %v2753
        %v2882 = vsub.f32 1.0, %v2754
        %v2883 = vsub.f32 1.0, %v2755
        %v2884 = vsub.f32 1.0, %v2756
        %v2885 = vsub.f32 1.0, %v2757
        %v2886 = vsub.f32 1.0, %v2758
        %v2887 = vsub.f32 1.0, %v2759
        %v2888 = vsub.f32 1.0, %v2760
        %v2889 = vsub.f32 1.0, %v2761
        %v2890 = vsub.f32 1.0, %v2762
        %v2891 = vsub.f32 1.0, %v2763
        %v2892 = vsub.f32 1.0, %v2764
        %v2893 = vsub.f32 1.0, %v2765
        %v2894 = vsub.f32 1.0, %v2766
        %v2895 = vsub.f32 1.0, %v2767
        %v2896 = vsub.f32 1.0, %v2768
        %v2897 = vsub.f32 1.0, %v2769
        %v2898 = vsub.f32 1.0, %v2770
        %v2899 = vsub.f32 1.0, %v2771
        %v2900 = vsub.f32 1.0, %v2772
        %v2901 = vsub.f32 1.0, %v2773
        %v2902 = vsub.f32 1.0, %v2774
        %v2903 = vsub.f32 1.0, %v2775
        %v2904 = vsub.f32 1.0, %v2776
        %v2905 = vsub.f32 1.0, %v2777
        %v2906 = vsub.f32 1.0, %v2778
        %v2907 = vsub.f32 1.0, %v2779
        %v2908 = vsub.f32 1.0, %v2780
        %v2909 = vsub.f32 1.0, %v2781
        %v2910 = vsub.f32 1.0, %v2782
        %v2911 = vsub.f32 1.0, %v2783
        %v2912 = vsub.f32 1.0, %v2784
        %v2913 = vsub.f32 1.0, %v2785
        %v2914 = vsub.f32 1.0, %v2786
        %v2915 = vsub.f32 1.0, %v2787
        %v2916 = vsub.f32 1.0, %v2788
        %v2917 = vsub.f32 1.0, %v2789
        %v2918 = vsub.f32 1.0, %v2790
        %v2919 = vsub.f32 1.0, %v2791
        %v2920 = vsub.f32 1.0, %v2792
        %v2921 = vsub.f32 1.0, %v2793
        %v2922 = vsub.f32 1.0, %v2794
        %v2923 = vsub.f32 1.0, %v2795
        %v2924 = vsub.f32 1.0, %v2796
        %v2925 = vsub.f32 1.0, %v2797
        %v2926 = vsub.f32 1.0, %v2798
        %v2927 = vsub.f32 1.0, %v2799
        %v2928 = vsub.f32 1.0, %v2800
        %v2929 = vsub.f32 1.0, %v2801
        %v2930 = vsub.f32 1.0, %v2802
        %v2931 = vsub.f32 1.0, %v2803
        %v2932 = vsub.f32 1.0, %v2804
        %v2933 = vsub.f32 1.0, %v2805
        %v2934 = vsub.f32 1.0, %v2806
        %v2935 = vsub.f32 1.0, %v2807
        %v2936 = vmax.f32 %v2808, 0.0
        %v2937 = vmax.f32 %v2809, 0.0
        %v2938 = vmax.f32 %v2810, 0.0
        %v2939 = vmax.f32 %v2811, 0.0
        %v2940 = vmax.f32 %v2812, 0.0
        %v2941 = vmax.f32 %v2813, 0.0
        %v2942 = vmax.f32 %v2814, 0.0
        %v2943 = vmax.f32 %v2815, 0.0
        %v2944 = vmax.f32 %v2816, 0.0
        %v2945 = vmax.f32 %v2817, 0.0
        %v2946 = vmax.f32 %v2818, 0.0
        %v2947 = vmax.f32 %v2819, 0.0
        %v2948 = vmax.f32 %v2820, 0.0
        %v2949 = vmax.f32 %v2821, 0.0
        %v2950 = vmax.f32 %v2822, 0.0
        %v2951 = vmax.f32 %v2823, 0.0
        %v2952 = vmax.f32 %v2824, 0.0
        %v2953 = vmax.f32 %v2825, 0.0
        %v2954 = vmax.f32 %v2826, 0.0
        %v2955 = vmax.f32 %v2827, 0.0
        %v2956 = vmax.f32 %v2828, 0.0
        %v2957 = vmax.f32 %v2829, 0.0
        %v2958 = vmax.f32 %v2830, 0.0
        %v2959 = vmax.f32 %v2831, 0.0
        %v2960 = vmax.f32 %v2832, 0.0
        %v2961 = vmax.f32 %v2833, 0.0
        %v2962 = vmax.f32 %v2834, 0.0
        %v2963 = vmax.f32 %v2835, 0.0
        %v2964 = vmax.f32 %v2836, 0.0
        %v2965 = vmax.f32 %v2837, 0.0
        %v2966 = vmax.f32 %v2838, 0.0
        %v2967 = vmax.f32 %v2839, 0.0
        %v2968 = vmax.f32 %v2840, 0.0
        %v2969 = vmax.f32 %v2841, 0.0
        %v2970 = vmax.f32 %v2842, 0.0
        %v2971 = vmax.f32 %v2843, 0.0
        %v2972 = vmax.f32 %v2844, 0.0
        %v2973 = vmax.f32 %v2845, 0.0
        %v2974 = vmax.f32 %v2846, 0.0
        %v2975 = vmax.f32 %v2847, 0.0
        %v2976 = vmax.f32 %v2848, 0.0
        %v2977 = vmax.f32 %v2849, 0.0
        %v2978 = vmax.f32 %v2850, 0.0
        %v2979 = vmax.f32 %v2851, 0.0
        %v2980 = vmax.f32 %v2852, 0.0
        %v2981 = vmax.f32 %v2853, 0.0
        %v2982 = vmax.f32 %v2854, 0.0
        %v2983 = vmax.f32 %v2855, 0.0
        %v2984 = vmax.f32 %v2856, 0.0
        %v2985 = vmax.f32 %v2857, 0.0
        %v2986 = vmax.f32 %v2858, 0.0
        %v2987 = vmax.f32 %v2859, 0.0
        %v2988 = vmax.f32 %v2860, 0.0
        %v2989 = vmax.f32 %v2861, 0.0
        %v2990 = vmax.f32 %v2862, 0.0
        %v2991 = vmax.f32 %v2863, 0.0
        %v2992 = vmax.f32 %v2864, 0.0
        %v2993 = vmax.f32 %v2865, 0.0
        %v2994 = vmax.f32 %v2866, 0.0
        %v2995 = vmax.f32 %v2867, 0.0
        %v2996 = vmax.f32 %v2868, 0.0
        %v2997 = vmax.f32 %v2869, 0.0
        %v2998 = vmax.f32 %v2870, 0.0
        %v2999 = vmax.f32 %v2871, 0.0
        %v3000 = vmax.f32 %v2872, 0.0
        %v3001 = vmax.f32 %v2873, 0.0
        %v3002 = vmax.f32 %v2874, 0.0
        %v3003 = vmax.f32 %v2875, 0.0
        %v3004 = vmax.f32 %v2876, 0.0
        %v3005 = vmax.f32 %v2877, 0.0
        %v3006 = vmax.f32 %v2878, 0.0
        %v3007 = vmax.f32 %v2879, 0.0
        %v3008 = vmax.f32 %v2880, 0.0
        %v3009 = vmax.f32 %v2881, 0.0
        %v3010 = vmax.f32 %v2882, 0.0
        %v3011 = vmax.f32 %v2883, 0.0
        %v3012 = vmax.f32 %v2884, 0.0
        %v3013 = vmax.f32 %v2885, 0.0
        %v3014 = vmax.f32 %v2886, 0.0
        %v3015 = vmax.f32 %v2887, 0.0
        %v3016 = vmax.f32 %v2888, 0.0
        %v3017 = vmax.f32 %v2889, 0.0
        %v3018 = vmax.f32 %v2890, 0.0
        %v3019 = vmax.f32 %v2891, 0.0
        %v3020 = vmax.f32 %v2892, 0.0
        %v3021 = vmax.f32 %v2893, 0.0
        %v3022 = vmax.f32 %v2894, 0.0
        %v3023 = vmax.f32 %v2895, 0.0
        %v3024 = vmax.f32 %v2896, 0.0
        %v3025 = vmax.f32 %v2897, 0.0
        %v3026 = vmax.f32 %v2898, 0.0
        %v3027 = vmax.f32 %v2899, 0.0
        %v3028 = vmax.f32 %v2900, 0.0
        %v3029 = vmax.f32 %v2901, 0.0
        %v3030 = vmax.f32 %v2902, 0.0
        %v3031 = vmax.f32 %v2903, 0.0
        %v3032 = vmax.f32 %v2904, 0.0
        %v3033 = vmax.f32 %v2905, 0.0
        %v3034 = vmax.f32 %v2906, 0.0
        %v3035 = vmax.f32 %v2907, 0.0
        %v3036 = vmax.f32 %v2908, 0.0
        %v3037 = vmax.f32 %v2909, 0.0
        %v3038 = vmax.f32 %v2910, 0.0
        %v3039 = vmax.f32 %v2911, 0.0
        %v3040 = vmax.f32 %v2912, 0.0
        %v3041 = vmax.f32 %v2913, 0.0
        %v3042 = vmax.f32 %v2914, 0.0
        %v3043 = vmax.f32 %v2915, 0.0
        %v3044 = vmax.f32 %v2916, 0.0
        %v3045 = vmax.f32 %v2917, 0.0
        %v3046 = vmax.f32 %v2918, 0.0
        %v3047 = vmax.f32 %v2919, 0.0
        %v3048 = vmax.f32 %v2920, 0.0
        %v3049 = vmax.f32 %v2921, 0.0
        %v3050 = vmax.f32 %v2922, 0.0
        %v3051 = vmax.f32 %v2923, 0.0
        %v3052 = vmax.f32 %v2924, 0.0
        %v3053 = vmax.f32 %v2925, 0.0
        %v3054 = vmax.f32 %v2926, 0.0
        %v3055 = vmax.f32 %v2927, 0.0
        %v3056 = vmax.f32 %v2928, 0.0
        %v3057 = vmax.f32 %v2929, 0.0
        %v3058 = vmax.f32 %v2930, 0.0
        %v3059 = vmax.f32 %v2931, 0.0
        %v3060 = vmax.f32 %v2932, 0.0
        %v3061 = vmax.f32 %v2933, 0.0
        %v3062 = vmax.f32 %v2934, 0.0
        %v3063 = vmax.f32 %v2935, 0.0
        %v3064 = vlaneseq
        %v3065 = vshrl.u32 %v3064, 7
        %v3066 = vsub.s32 0, %v3065
        %v3067 = vrot.slane %v965, %v3066
        %3069 = vbcast.lane.b32.xlu0 %v3067, 256
        %v3070 = vpop.permute.xlu0 %3069
        %s3072 = sor.u32 256, 8
        %3073 = vbcast.lane.b32.xlu0 %v3067, %s3072
        %v3074 = vpop.permute.xlu0 %3073
        %s3076 = sor.u32 256, 16
        %3077 = vbcast.lane.b32.xlu0 %v3067, %s3076
        %v3078 = vpop.permute.xlu0 %3077
        %s3080 = sor.u32 256, 24
        %3081 = vbcast.lane.b32.xlu0 %v3067, %s3080
        %v3082 = vpop.permute.xlu0 %3081
        %s3084 = sor.u32 256, 32
        %3085 = vbcast.lane.b32.xlu0 %v3067, %s3084
        %v3086 = vpop.permute.xlu0 %3085
        %s3088 = sor.u32 256, 40
        %3089 = vbcast.lane.b32.xlu0 %v3067, %s3088
        %v3090 = vpop.permute.xlu0 %3089
        %s3092 = sor.u32 256, 48
        %3093 = vbcast.lane.b32.xlu0 %v3067, %s3092
        %v3094 = vpop.permute.xlu0 %3093
        %s3096 = sor.u32 256, 56
        %3097 = vbcast.lane.b32.xlu0 %v3067, %s3096
        %v3098 = vpop.permute.xlu0 %3097
        %s3100 = sor.u32 256, 64
        %3101 = vbcast.lane.b32.xlu0 %v3067, %s3100
        %v3102 = vpop.permute.xlu0 %3101
        %s3104 = sor.u32 256, 72
        %3105 = vbcast.lane.b32.xlu0 %v3067, %s3104
        %v3106 = vpop.permute.xlu0 %3105
        %s3108 = sor.u32 256, 80
        %3109 = vbcast.lane.b32.xlu0 %v3067, %s3108
        %v3110 = vpop.permute.xlu0 %3109
        %s3112 = sor.u32 256, 88
        %3113 = vbcast.lane.b32.xlu0 %v3067, %s3112
        %v3114 = vpop.permute.xlu0 %3113
        %s3116 = sor.u32 256, 96
        %3117 = vbcast.lane.b32.xlu0 %v3067, %s3116
        %v3118 = vpop.permute.xlu0 %3117
        %s3120 = sor.u32 256, 104
        %3121 = vbcast.lane.b32.xlu0 %v3067, %s3120
        %v3122 = vpop.permute.xlu0 %3121
        %s3124 = sor.u32 256, 112
        %3125 = vbcast.lane.b32.xlu0 %v3067, %s3124
        %v3126 = vpop.permute.xlu0 %3125
        %s3128 = sor.u32 256, 120
        %3129 = vbcast.lane.b32.xlu0 %v3067, %s3128
        %v3130 = vpop.permute.xlu0 %3129
        %v3131 = vlaneseq
        %v3132 = vshrl.u32 %v3131, 7
        %v3133 = vsub.s32 1, %v3132
        %v3134 = vrot.slane %v965, %v3133
        %3136 = vbcast.lane.b32.xlu0 %v3134, 256
        %v3137 = vpop.permute.xlu0 %3136
        %s3139 = sor.u32 256, 8
        %3140 = vbcast.lane.b32.xlu0 %v3134, %s3139
        %v3141 = vpop.permute.xlu0 %3140
        %s3143 = sor.u32 256, 16
        %3144 = vbcast.lane.b32.xlu0 %v3134, %s3143
        %v3145 = vpop.permute.xlu0 %3144
        %s3147 = sor.u32 256, 24
        %3148 = vbcast.lane.b32.xlu0 %v3134, %s3147
        %v3149 = vpop.permute.xlu0 %3148
        %s3151 = sor.u32 256, 32
        %3152 = vbcast.lane.b32.xlu0 %v3134, %s3151
        %v3153 = vpop.permute.xlu0 %3152
        %s3155 = sor.u32 256, 40
        %3156 = vbcast.lane.b32.xlu0 %v3134, %s3155
        %v3157 = vpop.permute.xlu0 %3156
        %s3159 = sor.u32 256, 48
        %3160 = vbcast.lane.b32.xlu0 %v3134, %s3159
        %v3161 = vpop.permute.xlu0 %3160
        %s3163 = sor.u32 256, 56
        %3164 = vbcast.lane.b32.xlu0 %v3134, %s3163
        %v3165 = vpop.permute.xlu0 %3164
        %s3167 = sor.u32 256, 64
        %3168 = vbcast.lane.b32.xlu0 %v3134, %s3167
        %v3169 = vpop.permute.xlu0 %3168
        %s3171 = sor.u32 256, 72
        %3172 = vbcast.lane.b32.xlu0 %v3134, %s3171
        %v3173 = vpop.permute.xlu0 %3172
        %s3175 = sor.u32 256, 80
        %3176 = vbcast.lane.b32.xlu0 %v3134, %s3175
        %v3177 = vpop.permute.xlu0 %3176
        %s3179 = sor.u32 256, 88
        %3180 = vbcast.lane.b32.xlu0 %v3134, %s3179
        %v3181 = vpop.permute.xlu0 %3180
        %s3183 = sor.u32 256, 96
        %3184 = vbcast.lane.b32.xlu0 %v3134, %s3183
        %v3185 = vpop.permute.xlu0 %3184
        %s3187 = sor.u32 256, 104
        %3188 = vbcast.lane.b32.xlu0 %v3134, %s3187
        %v3189 = vpop.permute.xlu0 %3188
        %s3191 = sor.u32 256, 112
        %3192 = vbcast.lane.b32.xlu0 %v3134, %s3191
        %v3193 = vpop.permute.xlu0 %3192
        %s3195 = sor.u32 256, 120
        %3196 = vbcast.lane.b32.xlu0 %v3134, %s3195
        %v3197 = vpop.permute.xlu0 %3196
        %v3198 = vlaneseq
        %v3199 = vshrl.u32 %v3198, 7
        %v3200 = vsub.s32 2, %v3199
        %v3201 = vrot.slane %v965, %v3200
        %3203 = vbcast.lane.b32.xlu0 %v3201, 256
        %v3204 = vpop.permute.xlu0 %3203
        %s3206 = sor.u32 256, 8
        %3207 = vbcast.lane.b32.xlu0 %v3201, %s3206
        %v3208 = vpop.permute.xlu0 %3207
        %s3210 = sor.u32 256, 16
        %3211 = vbcast.lane.b32.xlu0 %v3201, %s3210
        %v3212 = vpop.permute.xlu0 %3211
        %s3214 = sor.u32 256, 24
        %3215 = vbcast.lane.b32.xlu0 %v3201, %s3214
        %v3216 = vpop.permute.xlu0 %3215
        %s3218 = sor.u32 256, 32
        %3219 = vbcast.lane.b32.xlu0 %v3201, %s3218
        %v3220 = vpop.permute.xlu0 %3219
        %s3222 = sor.u32 256, 40
        %3223 = vbcast.lane.b32.xlu0 %v3201, %s3222
        %v3224 = vpop.permute.xlu0 %3223
        %s3226 = sor.u32 256, 48
        %3227 = vbcast.lane.b32.xlu0 %v3201, %s3226
        %v3228 = vpop.permute.xlu0 %3227
        %s3230 = sor.u32 256, 56
        %3231 = vbcast.lane.b32.xlu0 %v3201, %s3230
        %v3232 = vpop.permute.xlu0 %3231
        %s3234 = sor.u32 256, 64
        %3235 = vbcast.lane.b32.xlu0 %v3201, %s3234
        %v3236 = vpop.permute.xlu0 %3235
        %s3238 = sor.u32 256, 72
        %3239 = vbcast.lane.b32.xlu0 %v3201, %s3238
        %v3240 = vpop.permute.xlu0 %3239
        %s3242 = sor.u32 256, 80
        %3243 = vbcast.lane.b32.xlu0 %v3201, %s3242
        %v3244 = vpop.permute.xlu0 %3243
        %s3246 = sor.u32 256, 88
        %3247 = vbcast.lane.b32.xlu0 %v3201, %s3246
        %v3248 = vpop.permute.xlu0 %3247
        %s3250 = sor.u32 256, 96
        %3251 = vbcast.lane.b32.xlu0 %v3201, %s3250
        %v3252 = vpop.permute.xlu0 %3251
        %s3254 = sor.u32 256, 104
        %3255 = vbcast.lane.b32.xlu0 %v3201, %s3254
        %v3256 = vpop.permute.xlu0 %3255
        %s3258 = sor.u32 256, 112
        %3259 = vbcast.lane.b32.xlu0 %v3201, %s3258
        %v3260 = vpop.permute.xlu0 %3259
        %s3262 = sor.u32 256, 120
        %3263 = vbcast.lane.b32.xlu0 %v3201, %s3262
        %v3264 = vpop.permute.xlu0 %3263
        %v3265 = vlaneseq
        %v3266 = vshrl.u32 %v3265, 7
        %v3267 = vsub.s32 3, %v3266
        %v3268 = vrot.slane %v965, %v3267
        %3270 = vbcast.lane.b32.xlu0 %v3268, 256
        %v3271 = vpop.permute.xlu0 %3270
        %s3273 = sor.u32 256, 8
        %3274 = vbcast.lane.b32.xlu0 %v3268, %s3273
        %v3275 = vpop.permute.xlu0 %3274
        %s3277 = sor.u32 256, 16
        %3278 = vbcast.lane.b32.xlu0 %v3268, %s3277
        %v3279 = vpop.permute.xlu0 %3278
        %s3281 = sor.u32 256, 24
        %3282 = vbcast.lane.b32.xlu0 %v3268, %s3281
        %v3283 = vpop.permute.xlu0 %3282
        %s3285 = sor.u32 256, 32
        %3286 = vbcast.lane.b32.xlu0 %v3268, %s3285
        %v3287 = vpop.permute.xlu0 %3286
        %s3289 = sor.u32 256, 40
        %3290 = vbcast.lane.b32.xlu0 %v3268, %s3289
        %v3291 = vpop.permute.xlu0 %3290
        %s3293 = sor.u32 256, 48
        %3294 = vbcast.lane.b32.xlu0 %v3268, %s3293
        %v3295 = vpop.permute.xlu0 %3294
        %s3297 = sor.u32 256, 56
        %3298 = vbcast.lane.b32.xlu0 %v3268, %s3297
        %v3299 = vpop.permute.xlu0 %3298
        %s3301 = sor.u32 256, 64
        %3302 = vbcast.lane.b32.xlu0 %v3268, %s3301
        %v3303 = vpop.permute.xlu0 %3302
        %s3305 = sor.u32 256, 72
        %3306 = vbcast.lane.b32.xlu0 %v3268, %s3305
        %v3307 = vpop.permute.xlu0 %3306
        %s3309 = sor.u32 256, 80
        %3310 = vbcast.lane.b32.xlu0 %v3268, %s3309
        %v3311 = vpop.permute.xlu0 %3310
        %s3313 = sor.u32 256, 88
        %3314 = vbcast.lane.b32.xlu0 %v3268, %s3313
        %v3315 = vpop.permute.xlu0 %3314
        %s3317 = sor.u32 256, 96
        %3318 = vbcast.lane.b32.xlu0 %v3268, %s3317
        %v3319 = vpop.permute.xlu0 %3318
        %s3321 = sor.u32 256, 104
        %3322 = vbcast.lane.b32.xlu0 %v3268, %s3321
        %v3323 = vpop.permute.xlu0 %3322
        %s3325 = sor.u32 256, 112
        %3326 = vbcast.lane.b32.xlu0 %v3268, %s3325
        %v3327 = vpop.permute.xlu0 %3326
        %s3329 = sor.u32 256, 120
        %3330 = vbcast.lane.b32.xlu0 %v3268, %s3329
        %v3331 = vpop.permute.xlu0 %3330
        %v3332 = vlaneseq
        %v3333 = vshrl.u32 %v3332, 7
        %v3334 = vsub.s32 4, %v3333
        %v3335 = vrot.slane %v965, %v3334
        %3337 = vbcast.lane.b32.xlu0 %v3335, 256
        %v3338 = vpop.permute.xlu0 %3337
        %s3340 = sor.u32 256, 8
        %3341 = vbcast.lane.b32.xlu0 %v3335, %s3340
        %v3342 = vpop.permute.xlu0 %3341
        %s3344 = sor.u32 256, 16
        %3345 = vbcast.lane.b32.xlu0 %v3335, %s3344
        %v3346 = vpop.permute.xlu0 %3345
        %s3348 = sor.u32 256, 24
        %3349 = vbcast.lane.b32.xlu0 %v3335, %s3348
        %v3350 = vpop.permute.xlu0 %3349
        %s3352 = sor.u32 256, 32
        %3353 = vbcast.lane.b32.xlu0 %v3335, %s3352
        %v3354 = vpop.permute.xlu0 %3353
        %s3356 = sor.u32 256, 40
        %3357 = vbcast.lane.b32.xlu0 %v3335, %s3356
        %v3358 = vpop.permute.xlu0 %3357
        %s3360 = sor.u32 256, 48
        %3361 = vbcast.lane.b32.xlu0 %v3335, %s3360
        %v3362 = vpop.permute.xlu0 %3361
        %s3364 = sor.u32 256, 56
        %3365 = vbcast.lane.b32.xlu0 %v3335, %s3364
        %v3366 = vpop.permute.xlu0 %3365
        %s3368 = sor.u32 256, 64
        %3369 = vbcast.lane.b32.xlu0 %v3335, %s3368
        %v3370 = vpop.permute.xlu0 %3369
        %s3372 = sor.u32 256, 72
        %3373 = vbcast.lane.b32.xlu0 %v3335, %s3372
        %v3374 = vpop.permute.xlu0 %3373
        %s3376 = sor.u32 256, 80
        %3377 = vbcast.lane.b32.xlu0 %v3335, %s3376
        %v3378 = vpop.permute.xlu0 %3377
        %s3380 = sor.u32 256, 88
        %3381 = vbcast.lane.b32.xlu0 %v3335, %s3380
        %v3382 = vpop.permute.xlu0 %3381
        %s3384 = sor.u32 256, 96
        %3385 = vbcast.lane.b32.xlu0 %v3335, %s3384
        %v3386 = vpop.permute.xlu0 %3385
        %s3388 = sor.u32 256, 104
        %3389 = vbcast.lane.b32.xlu0 %v3335, %s3388
        %v3390 = vpop.permute.xlu0 %3389
        %s3392 = sor.u32 256, 112
        %3393 = vbcast.lane.b32.xlu0 %v3335, %s3392
        %v3394 = vpop.permute.xlu0 %3393
        %s3396 = sor.u32 256, 120
        %3397 = vbcast.lane.b32.xlu0 %v3335, %s3396
        %v3398 = vpop.permute.xlu0 %3397
        %v3399 = vlaneseq
        %v3400 = vshrl.u32 %v3399, 7
        %v3401 = vsub.s32 5, %v3400
        %v3402 = vrot.slane %v965, %v3401
        %3404 = vbcast.lane.b32.xlu0 %v3402, 256
        %v3405 = vpop.permute.xlu0 %3404
        %s3407 = sor.u32 256, 8
        %3408 = vbcast.lane.b32.xlu0 %v3402, %s3407
        %v3409 = vpop.permute.xlu0 %3408
        %s3411 = sor.u32 256, 16
        %3412 = vbcast.lane.b32.xlu0 %v3402, %s3411
        %v3413 = vpop.permute.xlu0 %3412
        %s3415 = sor.u32 256, 24
        %3416 = vbcast.lane.b32.xlu0 %v3402, %s3415
        %v3417 = vpop.permute.xlu0 %3416
        %s3419 = sor.u32 256, 32
        %3420 = vbcast.lane.b32.xlu0 %v3402, %s3419
        %v3421 = vpop.permute.xlu0 %3420
        %s3423 = sor.u32 256, 40
        %3424 = vbcast.lane.b32.xlu0 %v3402, %s3423
        %v3425 = vpop.permute.xlu0 %3424
        %s3427 = sor.u32 256, 48
        %3428 = vbcast.lane.b32.xlu0 %v3402, %s3427
        %v3429 = vpop.permute.xlu0 %3428
        %s3431 = sor.u32 256, 56
        %3432 = vbcast.lane.b32.xlu0 %v3402, %s3431
        %v3433 = vpop.permute.xlu0 %3432
        %s3435 = sor.u32 256, 64
        %3436 = vbcast.lane.b32.xlu0 %v3402, %s3435
        %v3437 = vpop.permute.xlu0 %3436
        %s3439 = sor.u32 256, 72
        %3440 = vbcast.lane.b32.xlu0 %v3402, %s3439
        %v3441 = vpop.permute.xlu0 %3440
        %s3443 = sor.u32 256, 80
        %3444 = vbcast.lane.b32.xlu0 %v3402, %s3443
        %v3445 = vpop.permute.xlu0 %3444
        %s3447 = sor.u32 256, 88
        %3448 = vbcast.lane.b32.xlu0 %v3402, %s3447
        %v3449 = vpop.permute.xlu0 %3448
        %s3451 = sor.u32 256, 96
        %3452 = vbcast.lane.b32.xlu0 %v3402, %s3451
        %v3453 = vpop.permute.xlu0 %3452
        %s3455 = sor.u32 256, 104
        %3456 = vbcast.lane.b32.xlu0 %v3402, %s3455
        %v3457 = vpop.permute.xlu0 %3456
        %s3459 = sor.u32 256, 112
        %3460 = vbcast.lane.b32.xlu0 %v3402, %s3459
        %v3461 = vpop.permute.xlu0 %3460
        %s3463 = sor.u32 256, 120
        %3464 = vbcast.lane.b32.xlu0 %v3402, %s3463
        %v3465 = vpop.permute.xlu0 %3464
        %v3466 = vlaneseq
        %v3467 = vshrl.u32 %v3466, 7
        %v3468 = vsub.s32 6, %v3467
        %v3469 = vrot.slane %v965, %v3468
        %3471 = vbcast.lane.b32.xlu0 %v3469, 256
        %v3472 = vpop.permute.xlu0 %3471
        %s3474 = sor.u32 256, 8
        %3475 = vbcast.lane.b32.xlu0 %v3469, %s3474
        %v3476 = vpop.permute.xlu0 %3475
        %s3478 = sor.u32 256, 16
        %3479 = vbcast.lane.b32.xlu0 %v3469, %s3478
        %v3480 = vpop.permute.xlu0 %3479
        %s3482 = sor.u32 256, 24
        %3483 = vbcast.lane.b32.xlu0 %v3469, %s3482
        %v3484 = vpop.permute.xlu0 %3483
        %s3486 = sor.u32 256, 32
        %3487 = vbcast.lane.b32.xlu0 %v3469, %s3486
        %v3488 = vpop.permute.xlu0 %3487
        %s3490 = sor.u32 256, 40
        %3491 = vbcast.lane.b32.xlu0 %v3469, %s3490
        %v3492 = vpop.permute.xlu0 %3491
        %s3494 = sor.u32 256, 48
        %3495 = vbcast.lane.b32.xlu0 %v3469, %s3494
        %v3496 = vpop.permute.xlu0 %3495
        %s3498 = sor.u32 256, 56
        %3499 = vbcast.lane.b32.xlu0 %v3469, %s3498
        %v3500 = vpop.permute.xlu0 %3499
        %s3502 = sor.u32 256, 64
        %3503 = vbcast.lane.b32.xlu0 %v3469, %s3502
        %v3504 = vpop.permute.xlu0 %3503
        %s3506 = sor.u32 256, 72
        %3507 = vbcast.lane.b32.xlu0 %v3469, %s3506
        %v3508 = vpop.permute.xlu0 %3507
        %s3510 = sor.u32 256, 80
        %3511 = vbcast.lane.b32.xlu0 %v3469, %s3510
        %v3512 = vpop.permute.xlu0 %3511
        %s3514 = sor.u32 256, 88
        %3515 = vbcast.lane.b32.xlu0 %v3469, %s3514
        %v3516 = vpop.permute.xlu0 %3515
        %s3518 = sor.u32 256, 96
        %3519 = vbcast.lane.b32.xlu0 %v3469, %s3518
        %v3520 = vpop.permute.xlu0 %3519
        %s3522 = sor.u32 256, 104
        %3523 = vbcast.lane.b32.xlu0 %v3469, %s3522
        %v3524 = vpop.permute.xlu0 %3523
        %s3526 = sor.u32 256, 112
        %3527 = vbcast.lane.b32.xlu0 %v3469, %s3526
        %v3528 = vpop.permute.xlu0 %3527
        %s3530 = sor.u32 256, 120
        %3531 = vbcast.lane.b32.xlu0 %v3469, %s3530
        %v3532 = vpop.permute.xlu0 %3531
        %v3533 = vlaneseq
        %v3534 = vshrl.u32 %v3533, 7
        %v3535 = vsub.s32 7, %v3534
        %v3536 = vrot.slane %v965, %v3535
        %3538 = vbcast.lane.b32.xlu0 %v3536, 256
        %v3539 = vpop.permute.xlu0 %3538
        %s3541 = sor.u32 256, 8
        %3542 = vbcast.lane.b32.xlu0 %v3536, %s3541
        %v3543 = vpop.permute.xlu0 %3542
        %s3545 = sor.u32 256, 16
        %3546 = vbcast.lane.b32.xlu0 %v3536, %s3545
        %v3547 = vpop.permute.xlu0 %3546
        %s3549 = sor.u32 256, 24
        %3550 = vbcast.lane.b32.xlu0 %v3536, %s3549
        %v3551 = vpop.permute.xlu0 %3550
        %s3553 = sor.u32 256, 32
        %3554 = vbcast.lane.b32.xlu0 %v3536, %s3553
        %v3555 = vpop.permute.xlu0 %3554
        %s3557 = sor.u32 256, 40
        %3558 = vbcast.lane.b32.xlu0 %v3536, %s3557
        %v3559 = vpop.permute.xlu0 %3558
        %s3561 = sor.u32 256, 48
        %3562 = vbcast.lane.b32.xlu0 %v3536, %s3561
        %v3563 = vpop.permute.xlu0 %3562
        %s3565 = sor.u32 256, 56
        %3566 = vbcast.lane.b32.xlu0 %v3536, %s3565
        %v3567 = vpop.permute.xlu0 %3566
        %s3569 = sor.u32 256, 64
        %3570 = vbcast.lane.b32.xlu0 %v3536, %s3569
        %v3571 = vpop.permute.xlu0 %3570
        %s3573 = sor.u32 256, 72
        %3574 = vbcast.lane.b32.xlu0 %v3536, %s3573
        %v3575 = vpop.permute.xlu0 %3574
        %s3577 = sor.u32 256, 80
        %3578 = vbcast.lane.b32.xlu0 %v3536, %s3577
        %v3579 = vpop.permute.xlu0 %3578
        %s3581 = sor.u32 256, 88
        %3582 = vbcast.lane.b32.xlu0 %v3536, %s3581
        %v3583 = vpop.permute.xlu0 %3582
        %s3585 = sor.u32 256, 96
        %3586 = vbcast.lane.b32.xlu0 %v3536, %s3585
        %v3587 = vpop.permute.xlu0 %3586
        %s3589 = sor.u32 256, 104
        %3590 = vbcast.lane.b32.xlu0 %v3536, %s3589
        %v3591 = vpop.permute.xlu0 %3590
        %s3593 = sor.u32 256, 112
        %3594 = vbcast.lane.b32.xlu0 %v3536, %s3593
        %v3595 = vpop.permute.xlu0 %3594
        %s3597 = sor.u32 256, 120
        %3598 = vbcast.lane.b32.xlu0 %v3536, %s3597
        %v3599 = vpop.permute.xlu0 %3598
        %v3600 = vmul.f32 %v3070, %v1888
        %v3601 = vmul.f32 %v3074, %v1889
        %v3602 = vmul.f32 %v3078, %v1890
        %v3603 = vmul.f32 %v3082, %v1891
        %v3604 = vmul.f32 %v3086, %v1892
        %v3605 = vmul.f32 %v3090, %v1893
        %v3606 = vmul.f32 %v3094, %v1894
        %v3607 = vmul.f32 %v3098, %v1895
        %v3608 = vmul.f32 %v3102, %v1896
        %v3609 = vmul.f32 %v3106, %v1897
        %v3610 = vmul.f32 %v3110, %v1898
        %v3611 = vmul.f32 %v3114, %v1899
        %v3612 = vmul.f32 %v3118, %v1900
        %v3613 = vmul.f32 %v3122, %v1901
        %v3614 = vmul.f32 %v3126, %v1902
        %v3615 = vmul.f32 %v3130, %v1903
        %v3616 = vmul.f32 %v3137, %v1904
        %v3617 = vmul.f32 %v3141, %v1905
        %v3618 = vmul.f32 %v3145, %v1906
        %v3619 = vmul.f32 %v3149, %v1907
        %v3620 = vmul.f32 %v3153, %v1908
        %v3621 = vmul.f32 %v3157, %v1909
        %v3622 = vmul.f32 %v3161, %v1910
        %v3623 = vmul.f32 %v3165, %v1911
        %v3624 = vmul.f32 %v3169, %v1912
        %v3625 = vmul.f32 %v3173, %v1913
        %v3626 = vmul.f32 %v3177, %v1914
        %v3627 = vmul.f32 %v3181, %v1915
        %v3628 = vmul.f32 %v3185, %v1916
        %v3629 = vmul.f32 %v3189, %v1917
        %v3630 = vmul.f32 %v3193, %v1918
        %v3631 = vmul.f32 %v3197, %v1919
        %v3632 = vmul.f32 %v3204, %v1920
        %v3633 = vmul.f32 %v3208, %v1921
        %v3634 = vmul.f32 %v3212, %v1922
        %v3635 = vmul.f32 %v3216, %v1923
        %v3636 = vmul.f32 %v3220, %v1924
        %v3637 = vmul.f32 %v3224, %v1925
        %v3638 = vmul.f32 %v3228, %v1926
        %v3639 = vmul.f32 %v3232, %v1927
        %v3640 = vmul.f32 %v3236, %v1928
        %v3641 = vmul.f32 %v3240, %v1929
        %v3642 = vmul.f32 %v3244, %v1930
        %v3643 = vmul.f32 %v3248, %v1931
        %v3644 = vmul.f32 %v3252, %v1932
        %v3645 = vmul.f32 %v3256, %v1933
        %v3646 = vmul.f32 %v3260, %v1934
        %v3647 = vmul.f32 %v3264, %v1935
        %v3648 = vmul.f32 %v3271, %v1936
        %v3649 = vmul.f32 %v3275, %v1937
        %v3650 = vmul.f32 %v3279, %v1938
        %v3651 = vmul.f32 %v3283, %v1939
        %v3652 = vmul.f32 %v3287, %v1940
        %v3653 = vmul.f32 %v3291, %v1941
        %v3654 = vmul.f32 %v3295, %v1942
        %v3655 = vmul.f32 %v3299, %v1943
        %v3656 = vmul.f32 %v3303, %v1944
        %v3657 = vmul.f32 %v3307, %v1945
        %v3658 = vmul.f32 %v3311, %v1946
        %v3659 = vmul.f32 %v3315, %v1947
        %v3660 = vmul.f32 %v3319, %v1948
        %v3661 = vmul.f32 %v3323, %v1949
        %v3662 = vmul.f32 %v3327, %v1950
        %v3663 = vmul.f32 %v3331, %v1951
        %v3664 = vmul.f32 %v3338, %v1952
        %v3665 = vmul.f32 %v3342, %v1953
        %v3666 = vmul.f32 %v3346, %v1954
        %v3667 = vmul.f32 %v3350, %v1955
        %v3668 = vmul.f32 %v3354, %v1956
        %v3669 = vmul.f32 %v3358, %v1957
        %v3670 = vmul.f32 %v3362, %v1958
        %v3671 = vmul.f32 %v3366, %v1959
        %v3672 = vmul.f32 %v3370, %v1960
        %v3673 = vmul.f32 %v3374, %v1961
        %v3674 = vmul.f32 %v3378, %v1962
        %v3675 = vmul.f32 %v3382, %v1963
        %v3676 = vmul.f32 %v3386, %v1964
        %v3677 = vmul.f32 %v3390, %v1965
        %v3678 = vmul.f32 %v3394, %v1966
        %v3679 = vmul.f32 %v3398, %v1967
        %v3680 = vmul.f32 %v3405, %v1968
        %v3681 = vmul.f32 %v3409, %v1969
        %v3682 = vmul.f32 %v3413, %v1970
        %v3683 = vmul.f32 %v3417, %v1971
        %v3684 = vmul.f32 %v3421, %v1972
        %v3685 = vmul.f32 %v3425, %v1973
        %v3686 = vmul.f32 %v3429, %v1974
        %v3687 = vmul.f32 %v3433, %v1975
        %v3688 = vmul.f32 %v3437, %v1976
        %v3689 = vmul.f32 %v3441, %v1977
        %v3690 = vmul.f32 %v3445, %v1978
        %v3691 = vmul.f32 %v3449, %v1979
        %v3692 = vmul.f32 %v3453, %v1980
        %v3693 = vmul.f32 %v3457, %v1981
        %v3694 = vmul.f32 %v3461, %v1982
        %v3695 = vmul.f32 %v3465, %v1983
        %v3696 = vmul.f32 %v3472, %v1984
        %v3697 = vmul.f32 %v3476, %v1985
        %v3698 = vmul.f32 %v3480, %v1986
        %v3699 = vmul.f32 %v3484, %v1987
        %v3700 = vmul.f32 %v3488, %v1988
        %v3701 = vmul.f32 %v3492, %v1989
        %v3702 = vmul.f32 %v3496, %v1990
        %v3703 = vmul.f32 %v3500, %v1991
        %v3704 = vmul.f32 %v3504, %v1992
        %v3705 = vmul.f32 %v3508, %v1993
        %v3706 = vmul.f32 %v3512, %v1994
        %v3707 = vmul.f32 %v3516, %v1995
        %v3708 = vmul.f32 %v3520, %v1996
        %v3709 = vmul.f32 %v3524, %v1997
        %v3710 = vmul.f32 %v3528, %v1998
        %v3711 = vmul.f32 %v3532, %v1999
        %v3712 = vmul.f32 %v3539, %v2000
        %v3713 = vmul.f32 %v3543, %v2001
        %v3714 = vmul.f32 %v3547, %v2002
        %v3715 = vmul.f32 %v3551, %v2003
        %v3716 = vmul.f32 %v3555, %v2004
        %v3717 = vmul.f32 %v3559, %v2005
        %v3718 = vmul.f32 %v3563, %v2006
        %v3719 = vmul.f32 %v3567, %v2007
        %v3720 = vmul.f32 %v3571, %v2008
        %v3721 = vmul.f32 %v3575, %v2009
        %v3722 = vmul.f32 %v3579, %v2010
        %v3723 = vmul.f32 %v3583, %v2011
        %v3724 = vmul.f32 %v3587, %v2012
        %v3725 = vmul.f32 %v3591, %v2013
        %v3726 = vmul.f32 %v3595, %v2014
        %v3727 = vmul.f32 %v3599, %v2015
        %v3728 = vmul.f32 %v3600, %v2936
        %v3729 = vmul.f32 %v3601, %v2937
        %v3730 = vmul.f32 %v3602, %v2938
        %v3731 = vmul.f32 %v3603, %v2939
        %v3732 = vmul.f32 %v3604, %v2940
        %v3733 = vmul.f32 %v3605, %v2941
        %v3734 = vmul.f32 %v3606, %v2942
        %v3735 = vmul.f32 %v3607, %v2943
        %v3736 = vmul.f32 %v3608, %v2944
        %v3737 = vmul.f32 %v3609, %v2945
        %v3738 = vmul.f32 %v3610, %v2946
        %v3739 = vmul.f32 %v3611, %v2947
        %v3740 = vmul.f32 %v3612, %v2948
        %v3741 = vmul.f32 %v3613, %v2949
        %v3742 = vmul.f32 %v3614, %v2950
        %v3743 = vmul.f32 %v3615, %v2951
        %v3744 = vmul.f32 %v3616, %v2952
        %v3745 = vmul.f32 %v3617, %v2953
        %v3746 = vmul.f32 %v3618, %v2954
        %v3747 = vmul.f32 %v3619, %v2955
        %v3748 = vmul.f32 %v3620, %v2956
        %v3749 = vmul.f32 %v3621, %v2957
        %v3750 = vmul.f32 %v3622, %v2958
        %v3751 = vmul.f32 %v3623, %v2959
        %v3752 = vmul.f32 %v3624, %v2960
        %v3753 = vmul.f32 %v3625, %v2961
        %v3754 = vmul.f32 %v3626, %v2962
        %v3755 = vmul.f32 %v3627, %v2963
        %v3756 = vmul.f32 %v3628, %v2964
        %v3757 = vmul.f32 %v3629, %v2965
        %v3758 = vmul.f32 %v3630, %v2966
        %v3759 = vmul.f32 %v3631, %v2967
        %v3760 = vmul.f32 %v3632, %v2968
        %v3761 = vmul.f32 %v3633, %v2969
        %v3762 = vmul.f32 %v3634, %v2970
        %v3763 = vmul.f32 %v3635, %v2971
        %v3764 = vmul.f32 %v3636, %v2972
        %v3765 = vmul.f32 %v3637, %v2973
        %v3766 = vmul.f32 %v3638, %v2974
        %v3767 = vmul.f32 %v3639, %v2975
        %v3768 = vmul.f32 %v3640, %v2976
        %v3769 = vmul.f32 %v3641, %v2977
        %v3770 = vmul.f32 %v3642, %v2978
        %v3771 = vmul.f32 %v3643, %v2979
        %v3772 = vmul.f32 %v3644, %v2980
        %v3773 = vmul.f32 %v3645, %v2981
        %v3774 = vmul.f32 %v3646, %v2982
        %v3775 = vmul.f32 %v3647, %v2983
        %v3776 = vmul.f32 %v3648, %v2984
        %v3777 = vmul.f32 %v3649, %v2985
        %v3778 = vmul.f32 %v3650, %v2986
        %v3779 = vmul.f32 %v3651, %v2987
        %v3780 = vmul.f32 %v3652, %v2988
        %v3781 = vmul.f32 %v3653, %v2989
        %v3782 = vmul.f32 %v3654, %v2990
        %v3783 = vmul.f32 %v3655, %v2991
        %v3784 = vmul.f32 %v3656, %v2992
        %v3785 = vmul.f32 %v3657, %v2993
        %v3786 = vmul.f32 %v3658, %v2994
        %v3787 = vmul.f32 %v3659, %v2995
        %v3788 = vmul.f32 %v3660, %v2996
        %v3789 = vmul.f32 %v3661, %v2997
        %v3790 = vmul.f32 %v3662, %v2998
        %v3791 = vmul.f32 %v3663, %v2999
        %v3792 = vmul.f32 %v3664, %v3000
        %v3793 = vmul.f32 %v3665, %v3001
        %v3794 = vmul.f32 %v3666, %v3002
        %v3795 = vmul.f32 %v3667, %v3003
        %v3796 = vmul.f32 %v3668, %v3004
        %v3797 = vmul.f32 %v3669, %v3005
        %v3798 = vmul.f32 %v3670, %v3006
        %v3799 = vmul.f32 %v3671, %v3007
        %v3800 = vmul.f32 %v3672, %v3008
        %v3801 = vmul.f32 %v3673, %v3009
        %v3802 = vmul.f32 %v3674, %v3010
        %v3803 = vmul.f32 %v3675, %v3011
        %v3804 = vmul.f32 %v3676, %v3012
        %v3805 = vmul.f32 %v3677, %v3013
        %v3806 = vmul.f32 %v3678, %v3014
        %v3807 = vmul.f32 %v3679, %v3015
        %v3808 = vmul.f32 %v3680, %v3016
        %v3809 = vmul.f32 %v3681, %v3017
        %v3810 = vmul.f32 %v3682, %v3018
        %v3811 = vmul.f32 %v3683, %v3019
        %v3812 = vmul.f32 %v3684, %v3020
        %v3813 = vmul.f32 %v3685, %v3021
        %v3814 = vmul.f32 %v3686, %v3022
        %v3815 = vmul.f32 %v3687, %v3023
        %v3816 = vmul.f32 %v3688, %v3024
        %v3817 = vmul.f32 %v3689, %v3025
        %v3818 = vmul.f32 %v3690, %v3026
        %v3819 = vmul.f32 %v3691, %v3027
        %v3820 = vmul.f32 %v3692, %v3028
        %v3821 = vmul.f32 %v3693, %v3029
        %v3822 = vmul.f32 %v3694, %v3030
        %v3823 = vmul.f32 %v3695, %v3031
        %v3824 = vmul.f32 %v3696, %v3032
        %v3825 = vmul.f32 %v3697, %v3033
        %v3826 = vmul.f32 %v3698, %v3034
        %v3827 = vmul.f32 %v3699, %v3035
        %v3828 = vmul.f32 %v3700, %v3036
        %v3829 = vmul.f32 %v3701, %v3037
        %v3830 = vmul.f32 %v3702, %v3038
        %v3831 = vmul.f32 %v3703, %v3039
        %v3832 = vmul.f32 %v3704, %v3040
        %v3833 = vmul.f32 %v3705, %v3041
        %v3834 = vmul.f32 %v3706, %v3042
        %v3835 = vmul.f32 %v3707, %v3043
        %v3836 = vmul.f32 %v3708, %v3044
        %v3837 = vmul.f32 %v3709, %v3045
        %v3838 = vmul.f32 %v3710, %v3046
        %v3839 = vmul.f32 %v3711, %v3047
        %v3840 = vmul.f32 %v3712, %v3048
        %v3841 = vmul.f32 %v3713, %v3049
        %v3842 = vmul.f32 %v3714, %v3050
        %v3843 = vmul.f32 %v3715, %v3051
        %v3844 = vmul.f32 %v3716, %v3052
        %v3845 = vmul.f32 %v3717, %v3053
        %v3846 = vmul.f32 %v3718, %v3054
        %v3847 = vmul.f32 %v3719, %v3055
        %v3848 = vmul.f32 %v3720, %v3056
        %v3849 = vmul.f32 %v3721, %v3057
        %v3850 = vmul.f32 %v3722, %v3058
        %v3851 = vmul.f32 %v3723, %v3059
        %v3852 = vmul.f32 %v3724, %v3060
        %v3853 = vmul.f32 %v3725, %v3061
        %v3854 = vmul.f32 %v3726, %v3062
        %v3855 = vmul.f32 %v3727, %v3063
        %v3856 = vpack.c.bf16 %v3729, %v3728
        %v3857 = vpack.c.bf16 %v3731, %v3730
        %v3858 = vpack.c.bf16 %v3733, %v3732
        %v3859 = vpack.c.bf16 %v3735, %v3734
        %v3860 = vpack.c.bf16 %v3737, %v3736
        %v3861 = vpack.c.bf16 %v3739, %v3738
        %v3862 = vpack.c.bf16 %v3741, %v3740
        %v3863 = vpack.c.bf16 %v3743, %v3742
        %v3864 = vpack.c.bf16 %v3745, %v3744
        %v3865 = vpack.c.bf16 %v3747, %v3746
        %v3866 = vpack.c.bf16 %v3749, %v3748
        %v3867 = vpack.c.bf16 %v3751, %v3750
        %v3868 = vpack.c.bf16 %v3753, %v3752
        %v3869 = vpack.c.bf16 %v3755, %v3754
        %v3870 = vpack.c.bf16 %v3757, %v3756
        %v3871 = vpack.c.bf16 %v3759, %v3758
        %v3872 = vpack.c.bf16 %v3761, %v3760
        %v3873 = vpack.c.bf16 %v3763, %v3762
        %v3874 = vpack.c.bf16 %v3765, %v3764
        %v3875 = vpack.c.bf16 %v3767, %v3766
        %v3876 = vpack.c.bf16 %v3769, %v3768
        %v3877 = vpack.c.bf16 %v3771, %v3770
        %v3878 = vpack.c.bf16 %v3773, %v3772
        %v3879 = vpack.c.bf16 %v3775, %v3774
        %v3880 = vpack.c.bf16 %v3777, %v3776
        %v3881 = vpack.c.bf16 %v3779, %v3778
        %v3882 = vpack.c.bf16 %v3781, %v3780
        %v3883 = vpack.c.bf16 %v3783, %v3782
        %v3884 = vpack.c.bf16 %v3785, %v3784
        %v3885 = vpack.c.bf16 %v3787, %v3786
        %v3886 = vpack.c.bf16 %v3789, %v3788
        %v3887 = vpack.c.bf16 %v3791, %v3790
        %v3888 = vpack.c.bf16 %v3793, %v3792
        %v3889 = vpack.c.bf16 %v3795, %v3794
        %v3890 = vpack.c.bf16 %v3797, %v3796
        %v3891 = vpack.c.bf16 %v3799, %v3798
        %v3892 = vpack.c.bf16 %v3801, %v3800
        %v3893 = vpack.c.bf16 %v3803, %v3802
        %v3894 = vpack.c.bf16 %v3805, %v3804
        %v3895 = vpack.c.bf16 %v3807, %v3806
        %v3896 = vpack.c.bf16 %v3809, %v3808
        %v3897 = vpack.c.bf16 %v3811, %v3810
        %v3898 = vpack.c.bf16 %v3813, %v3812
        %v3899 = vpack.c.bf16 %v3815, %v3814
        %v3900 = vpack.c.bf16 %v3817, %v3816
        %v3901 = vpack.c.bf16 %v3819, %v3818
        %v3902 = vpack.c.bf16 %v3821, %v3820
        %v3903 = vpack.c.bf16 %v3823, %v3822
        %v3904 = vpack.c.bf16 %v3825, %v3824
        %v3905 = vpack.c.bf16 %v3827, %v3826
        %v3906 = vpack.c.bf16 %v3829, %v3828
        %v3907 = vpack.c.bf16 %v3831, %v3830
        %v3908 = vpack.c.bf16 %v3833, %v3832
        %v3909 = vpack.c.bf16 %v3835, %v3834
        %v3910 = vpack.c.bf16 %v3837, %v3836
        %v3911 = vpack.c.bf16 %v3839, %v3838
        %v3912 = vpack.c.bf16 %v3841, %v3840
        %v3913 = vpack.c.bf16 %v3843, %v3842
        %v3914 = vpack.c.bf16 %v3845, %v3844
        %v3915 = vpack.c.bf16 %v3847, %v3846
        %v3916 = vpack.c.bf16 %v3849, %v3848
        %v3917 = vpack.c.bf16 %v3851, %v3850
        %v3918 = vpack.c.bf16 %v3853, %v3852
        %v3919 = vpack.c.bf16 %v3855, %v3854
        %3920 = vmatprep.subr.bf16.mxu0 0
        %3921 = vmatpush1.bf16.msra.mxu0 %v721
        %3922 = vmatprep.subr.bf16.mxu0 0
        %3923 = vmatpush1.bf16.msra.mxu0 %v722
        %3924 = vmatprep.subr.bf16.mxu0 0
        %3925 = vmatpush1.bf16.msra.mxu0 %v723
        %3926 = vmatprep.subr.bf16.mxu0 0
        %3927 = vmatpush1.bf16.msra.mxu0 %v724
        %3928 = vmatprep.subr.bf16.mxu0 0
        %3929 = vmatpush1.bf16.msra.mxu0 %v725
        %3930 = vmatprep.subr.bf16.mxu0 0
        %3931 = vmatpush1.bf16.msra.mxu0 %v726
        %3932 = vmatprep.subr.bf16.mxu0 0
        %3933 = vmatpush1.bf16.msra.mxu0 %v727
        %3934 = vmatprep.subr.bf16.mxu0 0
        %3935 = vmatpush1.bf16.msra.mxu0 %v728
        %3936 = vmatprep.subr.bf16.mxu0 0
        %3937 = vmatpush1.bf16.msra.mxu0 0
        %3938 = vmatprep.subr.bf16.mxu0 0
        %3939 = vmatpush1.bf16.msra.mxu0 0
        %3940 = vmatprep.subr.bf16.mxu0 0
        %3941 = vmatpush1.bf16.msra.mxu0 0
        %3942 = vmatprep.subr.bf16.mxu0 0
        %3943 = vmatpush1.bf16.msra.mxu0 0
        %3944 = vmatprep.subr.bf16.mxu0 0
        %3945 = vmatpush1.bf16.msra.mxu0 0
        %3946 = vmatprep.subr.bf16.mxu0 0
        %3947 = vmatpush1.bf16.msra.mxu0 0
        %3948 = vmatprep.subr.bf16.mxu0 0
        %3949 = vmatpush1.bf16.msra.mxu0 0
        %3950 = vmatprep.subr.bf16.mxu0 0
        %3951 = vmatpush1.bf16.msra.mxu0 0
        %3952 = vmatprep.mubr.bf16.mxu0 0
        %3953 = vmatmul.mubr.bf16.gmra.mrb[0].mxu0 %v3856
        %v3954 = vpop.f32.mrb[0].mxu0
        %v3955 = vadd.f32 0.0, %v3954
        %v3956 = vpop.f32.mrb[0].mxu0
        %v3957 = vpop.f32.mrb[0].mxu0
        %v3958 = vadd.f32 0.0, %v3957
        %v3959 = vpop.f32.mrb[0].mxu0
        %3960 = vmatprep.mubr.bf16.mxu0 0
        %3961 = vmatmul.mubr.bf16.gmra.mrb[0].mxu0 %v3857
        %v3962 = vpop.f32.mrb[0].mxu0
        %v3963 = vadd.f32 0.0, %v3962
        %v3964 = vpop.f32.mrb[0].mxu0
        %v3965 = vpop.f32.mrb[0].mxu0
        %v3966 = vadd.f32 0.0, %v3965
        %v3967 = vpop.f32.mrb[0].mxu0
        %3968 = vmatprep.mubr.bf16.mxu0 0
        %3969 = vmatmul.mubr.bf16.gmra.mrb[0].mxu0 %v3858
        %v3970 = vpop.f32.mrb[0].mxu0
        %v3971 = vadd.f32 0.0, %v3970
        %v3972 = vpop.f32.mrb[0].mxu0
        %v3973 = vpop.f32.mrb[0].mxu0
        %v3974 = vadd.f32 0.0, %v3973
        %v3975 = vpop.f32.mrb[0].mxu0
        %3976 = vmatprep.mubr.bf16.mxu0 0
        %3977 = vmatmul.mubr.bf16.gmra.mrb[0].mxu0 %v3859
        %v3978 = vpop.f32.mrb[0].mxu0
        %v3979 = vadd.f32 0.0, %v3978
        %v3980 = vpop.f32.mrb[0].mxu0
        %v3981 = vpop.f32.mrb[0].mxu0
        %v3982 = vadd.f32 0.0, %v3981
        %v3983 = vpop.f32.mrb[0].mxu0
        %3984 = vmatprep.mubr.bf16.mxu0 0
        %3985 = vmatmul.mubr.bf16.gmra.mrb[0].mxu0 %v3860
        %v3986 = vpop.f32.mrb[0].mxu0
        %v3987 = vadd.f32 0.0, %v3986
        %v3988 = vpop.f32.mrb[0].mxu0
        %v3989 = vpop.f32.mrb[0].mxu0
        %v3990 = vadd.f32 0.0, %v3989
        %v3991 = vpop.f32.mrb[0].mxu0
        %3992 = vmatprep.mubr.bf16.mxu0 0
        %3993 = vmatmul.mubr.bf16.gmra.mrb[0].mxu0 %v3861
        %v3994 = vpop.f32.mrb[0].mxu0
        %v3995 = vadd.f32 0.0, %v3994
        %v3996 = vpop.f32.mrb[0].mxu0
        %v3997 = vpop.f32.mrb[0].mxu0
        %v3998 = vadd.f32 0.0, %v3997
        %v3999 = vpop.f32.mrb[0].mxu0
        %4000 = vmatprep.mubr.bf16.mxu0 0
        %4001 = vmatmul.mubr.bf16.gmra.mrb[0].mxu0 %v3862
        %v4002 = vpop.f32.mrb[0].mxu0
        %v4003 = vadd.f32 0.0, %v4002
        %v4004 = vpop.f32.mrb[0].mxu0
        %v4005 = vpop.f32.mrb[0].mxu0
        %v4006 = vadd.f32 0.0, %v4005
        %v4007 = vpop.f32.mrb[0].mxu0
        %4008 = vmatprep.mubr.bf16.mxu0 0
        %4009 = vmatmul.mubr.bf16.gmra.mrb[0].mxu0 %v3863
        %v4010 = vpop.f32.mrb[0].mxu0
        %v4011 = vadd.f32 0.0, %v4010
        %v4012 = vpop.f32.mrb[0].mxu0
        %v4013 = vpop.f32.mrb[0].mxu0
        %v4014 = vadd.f32 0.0, %v4013
        %v4015 = vpop.f32.mrb[0].mxu0
        %4016 = vmatprep.mubr.bf16.mxu0 0
        %4017 = vmatmul.mubr.bf16.gmra.mrb[0].mxu0 %v3864
        %v4018 = vpop.f32.mrb[0].mxu0
        %v4019 = vadd.f32 0.0, %v4018
        %v4020 = vpop.f32.mrb[0].mxu0
        %v4021 = vpop.f32.mrb[0].mxu0
        %v4022 = vadd.f32 0.0, %v4021
        %v4023 = vpop.f32.mrb[0].mxu0
        %4024 = vmatprep.mubr.bf16.mxu0 0
        %4025 = vmatmul.mubr.bf16.gmra.mrb[0].mxu0 %v3865
        %v4026 = vpop.f32.mrb[0].mxu0
        %v4027 = vadd.f32 0.0, %v4026
        %v4028 = vpop.f32.mrb[0].mxu0
        %v4029 = vpop.f32.mrb[0].mxu0
        %v4030 = vadd.f32 0.0, %v4029
        %v4031 = vpop.f32.mrb[0].mxu0
        %4032 = vmatprep.mubr.bf16.mxu0 0
        %4033 = vmatmul.mubr.bf16.gmra.mrb[0].mxu0 %v3866
        %v4034 = vpop.f32.mrb[0].mxu0
        %v4035 = vadd.f32 0.0, %v4034
        %v4036 = vpop.f32.mrb[0].mxu0
        %v4037 = vpop.f32.mrb[0].mxu0
        %v4038 = vadd.f32 0.0, %v4037
        %v4039 = vpop.f32.mrb[0].mxu0
        %4040 = vmatprep.mubr.bf16.mxu0 0
        %4041 = vmatmul.mubr.bf16.gmra.mrb[0].mxu0 %v3867
        %v4042 = vpop.f32.mrb[0].mxu0
        %v4043 = vadd.f32 0.0, %v4042
        %v4044 = vpop.f32.mrb[0].mxu0
        %v4045 = vpop.f32.mrb[0].mxu0
        %v4046 = vadd.f32 0.0, %v4045
        %v4047 = vpop.f32.mrb[0].mxu0
        %4048 = vmatprep.mubr.bf16.mxu0 0
        %4049 = vmatmul.mubr.bf16.gmra.mrb[0].mxu0 %v3868
        %v4050 = vpop.f32.mrb[0].mxu0
        %v4051 = vadd.f32 0.0, %v4050
        %v4052 = vpop.f32.mrb[0].mxu0
        %v4053 = vpop.f32.mrb[0].mxu0
        %v4054 = vadd.f32 0.0, %v4053
        %v4055 = vpop.f32.mrb[0].mxu0
        %4056 = vmatprep.mubr.bf16.mxu0 0
        %4057 = vmatmul.mubr.bf16.gmra.mrb[0].mxu0 %v3869
        %v4058 = vpop.f32.mrb[0].mxu0
        %v4059 = vadd.f32 0.0, %v4058
        %v4060 = vpop.f32.mrb[0].mxu0
        %v4061 = vpop.f32.mrb[0].mxu0
        %v4062 = vadd.f32 0.0, %v4061
        %v4063 = vpop.f32.mrb[0].mxu0
        %4064 = vmatprep.mubr.bf16.mxu0 0
        %4065 = vmatmul.mubr.bf16.gmra.mrb[0].mxu0 %v3870
        %v4066 = vpop.f32.mrb[0].mxu0
        %v4067 = vadd.f32 0.0, %v4066
        %v4068 = vpop.f32.mrb[0].mxu0
        %v4069 = vpop.f32.mrb[0].mxu0
        %v4070 = vadd.f32 0.0, %v4069
        %v4071 = vpop.f32.mrb[0].mxu0
        %4072 = vmatprep.mubr.bf16.mxu0 0
        %4073 = vmatmul.mubr.bf16.gmra.mrb[0].mxu0 %v3871
        %v4074 = vpop.f32.mrb[0].mxu0
        %v4075 = vadd.f32 0.0, %v4074
        %v4076 = vpop.f32.mrb[0].mxu0
        %v4077 = vpop.f32.mrb[0].mxu0
        %v4078 = vadd.f32 0.0, %v4077
        %v4079 = vpop.f32.mrb[0].mxu0
        %4080 = vmatprep.mubr.bf16.mxu0 0
        %4081 = vmatmul.mubr.bf16.gmra.mrb[0].mxu0 %v3872
        %v4082 = vpop.f32.mrb[0].mxu0
        %v4083 = vadd.f32 0.0, %v4082
        %v4084 = vpop.f32.mrb[0].mxu0
        %v4085 = vpop.f32.mrb[0].mxu0
        %v4086 = vadd.f32 0.0, %v4085
        %v4087 = vpop.f32.mrb[0].mxu0
        %4088 = vmatprep.mubr.bf16.mxu0 0
        %4089 = vmatmul.mubr.bf16.gmra.mrb[0].mxu0 %v3873
        %v4090 = vpop.f32.mrb[0].mxu0
        %v4091 = vadd.f32 0.0, %v4090
        %v4092 = vpop.f32.mrb[0].mxu0
        %v4093 = vpop.f32.mrb[0].mxu0
        %v4094 = vadd.f32 0.0, %v4093
        %v4095 = vpop.f32.mrb[0].mxu0
        %4096 = vmatprep.mubr.bf16.mxu0 0
        %4097 = vmatmul.mubr.bf16.gmra.mrb[0].mxu0 %v3874
        %v4098 = vpop.f32.mrb[0].mxu0
        %v4099 = vadd.f32 0.0, %v4098
        %v4100 = vpop.f32.mrb[0].mxu0
        %v4101 = vpop.f32.mrb[0].mxu0
        %v4102 = vadd.f32 0.0, %v4101
        %v4103 = vpop.f32.mrb[0].mxu0
        %4104 = vmatprep.mubr.bf16.mxu0 0
        %4105 = vmatmul.mubr.bf16.gmra.mrb[0].mxu0 %v3875
        %v4106 = vpop.f32.mrb[0].mxu0
        %v4107 = vadd.f32 0.0, %v4106
        %v4108 = vpop.f32.mrb[0].mxu0
        %v4109 = vpop.f32.mrb[0].mxu0
        %v4110 = vadd.f32 0.0, %v4109
        %v4111 = vpop.f32.mrb[0].mxu0
        %4112 = vmatprep.mubr.bf16.mxu0 0
        %4113 = vmatmul.mubr.bf16.gmra.mrb[0].mxu0 %v3876
        %v4114 = vpop.f32.mrb[0].mxu0
        %v4115 = vadd.f32 0.0, %v4114
        %v4116 = vpop.f32.mrb[0].mxu0
        %v4117 = vpop.f32.mrb[0].mxu0
        %v4118 = vadd.f32 0.0, %v4117
        %v4119 = vpop.f32.mrb[0].mxu0
        %4120 = vmatprep.mubr.bf16.mxu0 0
        %4121 = vmatmul.mubr.bf16.gmra.mrb[0].mxu0 %v3877
        %v4122 = vpop.f32.mrb[0].mxu0
        %v4123 = vadd.f32 0.0, %v4122
        %v4124 = vpop.f32.mrb[0].mxu0
        %v4125 = vpop.f32.mrb[0].mxu0
        %v4126 = vadd.f32 0.0, %v4125
        %v4127 = vpop.f32.mrb[0].mxu0
        %4128 = vmatprep.mubr.bf16.mxu0 0
        %4129 = vmatmul.mubr.bf16.gmra.mrb[0].mxu0 %v3878
        %v4130 = vpop.f32.mrb[0].mxu0
        %v4131 = vadd.f32 0.0, %v4130
        %v4132 = vpop.f32.mrb[0].mxu0
        %v4133 = vpop.f32.mrb[0].mxu0
        %v4134 = vadd.f32 0.0, %v4133
        %v4135 = vpop.f32.mrb[0].mxu0
        %4136 = vmatprep.mubr.bf16.mxu0 0
        %4137 = vmatmul.mubr.bf16.gmra.mrb[0].mxu0 %v3879
        %v4138 = vpop.f32.mrb[0].mxu0
        %v4139 = vadd.f32 0.0, %v4138
        %v4140 = vpop.f32.mrb[0].mxu0
        %v4141 = vpop.f32.mrb[0].mxu0
        %v4142 = vadd.f32 0.0, %v4141
        %v4143 = vpop.f32.mrb[0].mxu0
        %4144 = vmatprep.mubr.bf16.mxu0 0
        %4145 = vmatmul.mubr.bf16.gmra.mrb[0].mxu0 %v3880
        %v4146 = vpop.f32.mrb[0].mxu0
        %v4147 = vadd.f32 0.0, %v4146
        %v4148 = vpop.f32.mrb[0].mxu0
        %v4149 = vpop.f32.mrb[0].mxu0
        %v4150 = vadd.f32 0.0, %v4149
        %v4151 = vpop.f32.mrb[0].mxu0
        %4152 = vmatprep.mubr.bf16.mxu0 0
        %4153 = vmatmul.mubr.bf16.gmra.mrb[0].mxu0 %v3881
        %v4154 = vpop.f32.mrb[0].mxu0
        %v4155 = vadd.f32 0.0, %v4154
        %v4156 = vpop.f32.mrb[0].mxu0
        %v4157 = vpop.f32.mrb[0].mxu0
        %v4158 = vadd.f32 0.0, %v4157
        %v4159 = vpop.f32.mrb[0].mxu0
        %4160 = vmatprep.mubr.bf16.mxu0 0
        %4161 = vmatmul.mubr.bf16.gmra.mrb[0].mxu0 %v3882
        %v4162 = vpop.f32.mrb[0].mxu0
        %v4163 = vadd.f32 0.0, %v4162
        %v4164 = vpop.f32.mrb[0].mxu0
        %v4165 = vpop.f32.mrb[0].mxu0
        %v4166 = vadd.f32 0.0, %v4165
        %v4167 = vpop.f32.mrb[0].mxu0
        %4168 = vmatprep.mubr.bf16.mxu0 0
        %4169 = vmatmul.mubr.bf16.gmra.mrb[0].mxu0 %v3883
        %v4170 = vpop.f32.mrb[0].mxu0
        %v4171 = vadd.f32 0.0, %v4170
        %v4172 = vpop.f32.mrb[0].mxu0
        %v4173 = vpop.f32.mrb[0].mxu0
        %v4174 = vadd.f32 0.0, %v4173
        %v4175 = vpop.f32.mrb[0].mxu0
        %4176 = vmatprep.mubr.bf16.mxu0 0
        %4177 = vmatmul.mubr.bf16.gmra.mrb[0].mxu0 %v3884
        %v4178 = vpop.f32.mrb[0].mxu0
        %v4179 = vadd.f32 0.0, %v4178
        %v4180 = vpop.f32.mrb[0].mxu0
        %v4181 = vpop.f32.mrb[0].mxu0
        %v4182 = vadd.f32 0.0, %v4181
        %v4183 = vpop.f32.mrb[0].mxu0
        %4184 = vmatprep.mubr.bf16.mxu0 0
        %4185 = vmatmul.mubr.bf16.gmra.mrb[0].mxu0 %v3885
        %v4186 = vpop.f32.mrb[0].mxu0
        %v4187 = vadd.f32 0.0, %v4186
        %v4188 = vpop.f32.mrb[0].mxu0
        %v4189 = vpop.f32.mrb[0].mxu0
        %v4190 = vadd.f32 0.0, %v4189
        %v4191 = vpop.f32.mrb[0].mxu0
        %4192 = vmatprep.mubr.bf16.mxu0 0
        %4193 = vmatmul.mubr.bf16.gmra.mrb[0].mxu0 %v3886
        %v4194 = vpop.f32.mrb[0].mxu0
        %v4195 = vadd.f32 0.0, %v4194
        %v4196 = vpop.f32.mrb[0].mxu0
        %v4197 = vpop.f32.mrb[0].mxu0
        %v4198 = vadd.f32 0.0, %v4197
        %v4199 = vpop.f32.mrb[0].mxu0
        %4200 = vmatprep.mubr.bf16.mxu0 0
        %4201 = vmatmul.mubr.bf16.gmra.mrb[0].mxu0 %v3887
        %v4202 = vpop.f32.mrb[0].mxu0
        %v4203 = vadd.f32 0.0, %v4202
        %v4204 = vpop.f32.mrb[0].mxu0
        %v4205 = vpop.f32.mrb[0].mxu0
        %v4206 = vadd.f32 0.0, %v4205
        %v4207 = vpop.f32.mrb[0].mxu0
        %4208 = vmatprep.mubr.bf16.mxu0 0
        %4209 = vmatmul.mubr.bf16.gmra.mrb[0].mxu0 %v3888
        %v4210 = vpop.f32.mrb[0].mxu0
        %v4211 = vadd.f32 0.0, %v4210
        %v4212 = vpop.f32.mrb[0].mxu0
        %v4213 = vpop.f32.mrb[0].mxu0
        %v4214 = vadd.f32 0.0, %v4213
        %v4215 = vpop.f32.mrb[0].mxu0
        %4216 = vmatprep.mubr.bf16.mxu0 0
        %4217 = vmatmul.mubr.bf16.gmra.mrb[0].mxu0 %v3889
        %v4218 = vpop.f32.mrb[0].mxu0
        %v4219 = vadd.f32 0.0, %v4218
        %v4220 = vpop.f32.mrb[0].mxu0
        %v4221 = vpop.f32.mrb[0].mxu0
        %v4222 = vadd.f32 0.0, %v4221
        %v4223 = vpop.f32.mrb[0].mxu0
        %4224 = vmatprep.mubr.bf16.mxu0 0
        %4225 = vmatmul.mubr.bf16.gmra.mrb[0].mxu0 %v3890
        %v4226 = vpop.f32.mrb[0].mxu0
        %v4227 = vadd.f32 0.0, %v4226
        %v4228 = vpop.f32.mrb[0].mxu0
        %v4229 = vpop.f32.mrb[0].mxu0
        %v4230 = vadd.f32 0.0, %v4229
        %v4231 = vpop.f32.mrb[0].mxu0
        %4232 = vmatprep.mubr.bf16.mxu0 0
        %4233 = vmatmul.mubr.bf16.gmra.mrb[0].mxu0 %v3891
        %v4234 = vpop.f32.mrb[0].mxu0
        %v4235 = vadd.f32 0.0, %v4234
        %v4236 = vpop.f32.mrb[0].mxu0
        %v4237 = vpop.f32.mrb[0].mxu0
        %v4238 = vadd.f32 0.0, %v4237
        %v4239 = vpop.f32.mrb[0].mxu0
        %4240 = vmatprep.mubr.bf16.mxu0 0
        %4241 = vmatmul.mubr.bf16.gmra.mrb[0].mxu0 %v3892
        %v4242 = vpop.f32.mrb[0].mxu0
        %v4243 = vadd.f32 0.0, %v4242
        %v4244 = vpop.f32.mrb[0].mxu0
        %v4245 = vpop.f32.mrb[0].mxu0
        %v4246 = vadd.f32 0.0, %v4245
        %v4247 = vpop.f32.mrb[0].mxu0
        %4248 = vmatprep.mubr.bf16.mxu0 0
        %4249 = vmatmul.mubr.bf16.gmra.mrb[0].mxu0 %v3893
        %v4250 = vpop.f32.mrb[0].mxu0
        %v4251 = vadd.f32 0.0, %v4250
        %v4252 = vpop.f32.mrb[0].mxu0
        %v4253 = vpop.f32.mrb[0].mxu0
        %v4254 = vadd.f32 0.0, %v4253
        %v4255 = vpop.f32.mrb[0].mxu0
        %4256 = vmatprep.mubr.bf16.mxu0 0
        %4257 = vmatmul.mubr.bf16.gmra.mrb[0].mxu0 %v3894
        %v4258 = vpop.f32.mrb[0].mxu0
        %v4259 = vadd.f32 0.0, %v4258
        %v4260 = vpop.f32.mrb[0].mxu0
        %v4261 = vpop.f32.mrb[0].mxu0
        %v4262 = vadd.f32 0.0, %v4261
        %v4263 = vpop.f32.mrb[0].mxu0
        %4264 = vmatprep.mubr.bf16.mxu0 0
        %4265 = vmatmul.mubr.bf16.gmra.mrb[0].mxu0 %v3895
        %v4266 = vpop.f32.mrb[0].mxu0
        %v4267 = vadd.f32 0.0, %v4266
        %v4268 = vpop.f32.mrb[0].mxu0
        %v4269 = vpop.f32.mrb[0].mxu0
        %v4270 = vadd.f32 0.0, %v4269
        %v4271 = vpop.f32.mrb[0].mxu0
        %4272 = vmatprep.mubr.bf16.mxu0 0
        %4273 = vmatmul.mubr.bf16.gmra.mrb[0].mxu0 %v3896
        %v4274 = vpop.f32.mrb[0].mxu0
        %v4275 = vadd.f32 0.0, %v4274
        %v4276 = vpop.f32.mrb[0].mxu0
        %v4277 = vpop.f32.mrb[0].mxu0
        %v4278 = vadd.f32 0.0, %v4277
        %v4279 = vpop.f32.mrb[0].mxu0
        %4280 = vmatprep.mubr.bf16.mxu0 0
        %4281 = vmatmul.mubr.bf16.gmra.mrb[0].mxu0 %v3897
        %v4282 = vpop.f32.mrb[0].mxu0
        %v4283 = vadd.f32 0.0, %v4282
        %v4284 = vpop.f32.mrb[0].mxu0
        %v4285 = vpop.f32.mrb[0].mxu0
        %v4286 = vadd.f32 0.0, %v4285
        %v4287 = vpop.f32.mrb[0].mxu0
        %4288 = vmatprep.mubr.bf16.mxu0 0
        %4289 = vmatmul.mubr.bf16.gmra.mrb[0].mxu0 %v3898
        %v4290 = vpop.f32.mrb[0].mxu0
        %v4291 = vadd.f32 0.0, %v4290
        %v4292 = vpop.f32.mrb[0].mxu0
        %v4293 = vpop.f32.mrb[0].mxu0
        %v4294 = vadd.f32 0.0, %v4293
        %v4295 = vpop.f32.mrb[0].mxu0
        %4296 = vmatprep.mubr.bf16.mxu0 0
        %4297 = vmatmul.mubr.bf16.gmra.mrb[0].mxu0 %v3899
        %v4298 = vpop.f32.mrb[0].mxu0
        %v4299 = vadd.f32 0.0, %v4298
        %v4300 = vpop.f32.mrb[0].mxu0
        %v4301 = vpop.f32.mrb[0].mxu0
        %v4302 = vadd.f32 0.0, %v4301
        %v4303 = vpop.f32.mrb[0].mxu0
        %4304 = vmatprep.mubr.bf16.mxu0 0
        %4305 = vmatmul.mubr.bf16.gmra.mrb[0].mxu0 %v3900
        %v4306 = vpop.f32.mrb[0].mxu0
        %v4307 = vadd.f32 0.0, %v4306
        %v4308 = vpop.f32.mrb[0].mxu0
        %v4309 = vpop.f32.mrb[0].mxu0
        %v4310 = vadd.f32 0.0, %v4309
        %v4311 = vpop.f32.mrb[0].mxu0
        %4312 = vmatprep.mubr.bf16.mxu0 0
        %4313 = vmatmul.mubr.bf16.gmra.mrb[0].mxu0 %v3901
        %v4314 = vpop.f32.mrb[0].mxu0
        %v4315 = vadd.f32 0.0, %v4314
        %v4316 = vpop.f32.mrb[0].mxu0
        %v4317 = vpop.f32.mrb[0].mxu0
        %v4318 = vadd.f32 0.0, %v4317
        %v4319 = vpop.f32.mrb[0].mxu0
        %4320 = vmatprep.mubr.bf16.mxu0 0
        %4321 = vmatmul.mubr.bf16.gmra.mrb[0].mxu0 %v3902
        %v4322 = vpop.f32.mrb[0].mxu0
        %v4323 = vadd.f32 0.0, %v4322
        %v4324 = vpop.f32.mrb[0].mxu0
        %v4325 = vpop.f32.mrb[0].mxu0
        %v4326 = vadd.f32 0.0, %v4325
        %v4327 = vpop.f32.mrb[0].mxu0
        %4328 = vmatprep.mubr.bf16.mxu0 0
        %4329 = vmatmul.mubr.bf16.gmra.mrb[0].mxu0 %v3903
        %v4330 = vpop.f32.mrb[0].mxu0
        %v4331 = vadd.f32 0.0, %v4330
        %v4332 = vpop.f32.mrb[0].mxu0
        %v4333 = vpop.f32.mrb[0].mxu0
        %v4334 = vadd.f32 0.0, %v4333
        %v4335 = vpop.f32.mrb[0].mxu0
        %4336 = vmatprep.mubr.bf16.mxu0 0
        %4337 = vmatmul.mubr.bf16.gmra.mrb[0].mxu0 %v3904
        %v4338 = vpop.f32.mrb[0].mxu0
        %v4339 = vadd.f32 0.0, %v4338
        %v4340 = vpop.f32.mrb[0].mxu0
        %v4341 = vpop.f32.mrb[0].mxu0
        %v4342 = vadd.f32 0.0, %v4341
        %v4343 = vpop.f32.mrb[0].mxu0
        %4344 = vmatprep.mubr.bf16.mxu0 0
        %4345 = vmatmul.mubr.bf16.gmra.mrb[0].mxu0 %v3905
        %v4346 = vpop.f32.mrb[0].mxu0
        %v4347 = vadd.f32 0.0, %v4346
        %v4348 = vpop.f32.mrb[0].mxu0
        %v4349 = vpop.f32.mrb[0].mxu0
        %v4350 = vadd.f32 0.0, %v4349
        %v4351 = vpop.f32.mrb[0].mxu0
        %4352 = vmatprep.mubr.bf16.mxu0 0
        %4353 = vmatmul.mubr.bf16.gmra.mrb[0].mxu0 %v3906
        %v4354 = vpop.f32.mrb[0].mxu0
        %v4355 = vadd.f32 0.0, %v4354
        %v4356 = vpop.f32.mrb[0].mxu0
        %v4357 = vpop.f32.mrb[0].mxu0
        %v4358 = vadd.f32 0.0, %v4357
        %v4359 = vpop.f32.mrb[0].mxu0
        %4360 = vmatprep.mubr.bf16.mxu0 0
        %4361 = vmatmul.mubr.bf16.gmra.mrb[0].mxu0 %v3907
        %v4362 = vpop.f32.mrb[0].mxu0
        %v4363 = vadd.f32 0.0, %v4362
        %v4364 = vpop.f32.mrb[0].mxu0
        %v4365 = vpop.f32.mrb[0].mxu0
        %v4366 = vadd.f32 0.0, %v4365
        %v4367 = vpop.f32.mrb[0].mxu0
        %4368 = vmatprep.mubr.bf16.mxu0 0
        %4369 = vmatmul.mubr.bf16.gmra.mrb[0].mxu0 %v3908
        %v4370 = vpop.f32.mrb[0].mxu0
        %v4371 = vadd.f32 0.0, %v4370
        %v4372 = vpop.f32.mrb[0].mxu0
        %v4373 = vpop.f32.mrb[0].mxu0
        %v4374 = vadd.f32 0.0, %v4373
        %v4375 = vpop.f32.mrb[0].mxu0
        %4376 = vmatprep.mubr.bf16.mxu0 0
        %4377 = vmatmul.mubr.bf16.gmra.mrb[0].mxu0 %v3909
        %v4378 = vpop.f32.mrb[0].mxu0
        %v4379 = vadd.f32 0.0, %v4378
        %v4380 = vpop.f32.mrb[0].mxu0
        %v4381 = vpop.f32.mrb[0].mxu0
        %v4382 = vadd.f32 0.0, %v4381
        %v4383 = vpop.f32.mrb[0].mxu0
        %4384 = vmatprep.mubr.bf16.mxu0 0
        %4385 = vmatmul.mubr.bf16.gmra.mrb[0].mxu0 %v3910
        %v4386 = vpop.f32.mrb[0].mxu0
        %v4387 = vadd.f32 0.0, %v4386
        %v4388 = vpop.f32.mrb[0].mxu0
        %v4389 = vpop.f32.mrb[0].mxu0
        %v4390 = vadd.f32 0.0, %v4389
        %v4391 = vpop.f32.mrb[0].mxu0
        %4392 = vmatprep.mubr.bf16.mxu0 0
        %4393 = vmatmul.mubr.bf16.gmra.mrb[0].mxu0 %v3911
        %v4394 = vpop.f32.mrb[0].mxu0
        %v4395 = vadd.f32 0.0, %v4394
        %v4396 = vpop.f32.mrb[0].mxu0
        %v4397 = vpop.f32.mrb[0].mxu0
        %v4398 = vadd.f32 0.0, %v4397
        %v4399 = vpop.f32.mrb[0].mxu0
        %4400 = vmatprep.mubr.bf16.mxu0 0
        %4401 = vmatmul.mubr.bf16.gmra.mrb[0].mxu0 %v3912
        %v4402 = vpop.f32.mrb[0].mxu0
        %v4403 = vadd.f32 0.0, %v4402
        %v4404 = vpop.f32.mrb[0].mxu0
        %v4405 = vpop.f32.mrb[0].mxu0
        %v4406 = vadd.f32 0.0, %v4405
        %v4407 = vpop.f32.mrb[0].mxu0
        %4408 = vmatprep.mubr.bf16.mxu0 0
        %4409 = vmatmul.mubr.bf16.gmra.mrb[0].mxu0 %v3913
        %v4410 = vpop.f32.mrb[0].mxu0
        %v4411 = vadd.f32 0.0, %v4410
        %v4412 = vpop.f32.mrb[0].mxu0
        %v4413 = vpop.f32.mrb[0].mxu0
        %v4414 = vadd.f32 0.0, %v4413
        %v4415 = vpop.f32.mrb[0].mxu0
        %4416 = vmatprep.mubr.bf16.mxu0 0
        %4417 = vmatmul.mubr.bf16.gmra.mrb[0].mxu0 %v3914
        %v4418 = vpop.f32.mrb[0].mxu0
        %v4419 = vadd.f32 0.0, %v4418
        %v4420 = vpop.f32.mrb[0].mxu0
        %v4421 = vpop.f32.mrb[0].mxu0
        %v4422 = vadd.f32 0.0, %v4421
        %v4423 = vpop.f32.mrb[0].mxu0
        %4424 = vmatprep.mubr.bf16.mxu0 0
        %4425 = vmatmul.mubr.bf16.gmra.mrb[0].mxu0 %v3915
        %v4426 = vpop.f32.mrb[0].mxu0
        %v4427 = vadd.f32 0.0, %v4426
        %v4428 = vpop.f32.mrb[0].mxu0
        %v4429 = vpop.f32.mrb[0].mxu0
        %v4430 = vadd.f32 0.0, %v4429
        %v4431 = vpop.f32.mrb[0].mxu0
        %4432 = vmatprep.mubr.bf16.mxu0 0
        %4433 = vmatmul.mubr.bf16.gmra.mrb[0].mxu0 %v3916
        %v4434 = vpop.f32.mrb[0].mxu0
        %v4435 = vadd.f32 0.0, %v4434
        %v4436 = vpop.f32.mrb[0].mxu0
        %v4437 = vpop.f32.mrb[0].mxu0
        %v4438 = vadd.f32 0.0, %v4437
        %v4439 = vpop.f32.mrb[0].mxu0
        %4440 = vmatprep.mubr.bf16.mxu0 0
        %4441 = vmatmul.mubr.bf16.gmra.mrb[0].mxu0 %v3917
        %v4442 = vpop.f32.mrb[0].mxu0
        %v4443 = vadd.f32 0.0, %v4442
        %v4444 = vpop.f32.mrb[0].mxu0
        %v4445 = vpop.f32.mrb[0].mxu0
        %v4446 = vadd.f32 0.0, %v4445
        %v4447 = vpop.f32.mrb[0].mxu0
        %4448 = vmatprep.mubr.bf16.mxu0 0
        %4449 = vmatmul.mubr.bf16.gmra.mrb[0].mxu0 %v3918
        %v4450 = vpop.f32.mrb[0].mxu0
        %v4451 = vadd.f32 0.0, %v4450
        %v4452 = vpop.f32.mrb[0].mxu0
        %v4453 = vpop.f32.mrb[0].mxu0
        %v4454 = vadd.f32 0.0, %v4453
        %v4455 = vpop.f32.mrb[0].mxu0
        %4456 = vmatprep.mubr.bf16.mxu0 0
        %4457 = vmatmul.mubr.bf16.gmra.mrb[0].mxu0 %v3919
        %v4458 = vpop.f32.mrb[0].mxu0
        %v4459 = vadd.f32 0.0, %v4458
        %v4460 = vpop.f32.mrb[0].mxu0
        %v4461 = vpop.f32.mrb[0].mxu0
        %v4462 = vadd.f32 0.0, %v4461
        %v4463 = vpop.f32.mrb[0].mxu0
        %4464 = vdwg.mxu0
        %v4465 = vmul.f32 %v3955, %v456
        %v4466 = vmul.f32 %v3958, %v457
        %v4467 = vmul.f32 %v3963, %v458
        %v4468 = vmul.f32 %v3966, %v459
        %v4469 = vmul.f32 %v3971, %v460
        %v4470 = vmul.f32 %v3974, %v461
        %v4471 = vmul.f32 %v3979, %v462
        %v4472 = vmul.f32 %v3982, %v463
        %v4473 = vmul.f32 %v3987, %v464
        %v4474 = vmul.f32 %v3990, %v465
        %v4475 = vmul.f32 %v3995, %v466
        %v4476 = vmul.f32 %v3998, %v467
        %v4477 = vmul.f32 %v4003, %v468
        %v4478 = vmul.f32 %v4006, %v469
        %v4479 = vmul.f32 %v4011, %v470
        %v4480 = vmul.f32 %v4014, %v471
        %v4481 = vmul.f32 %v4019, %v456
        %v4482 = vmul.f32 %v4022, %v457
        %v4483 = vmul.f32 %v4027, %v458
        %v4484 = vmul.f32 %v4030, %v459
        %v4485 = vmul.f32 %v4035, %v460
        %v4486 = vmul.f32 %v4038, %v461
        %v4487 = vmul.f32 %v4043, %v462
        %v4488 = vmul.f32 %v4046, %v463
        %v4489 = vmul.f32 %v4051, %v464
        %v4490 = vmul.f32 %v4054, %v465
        %v4491 = vmul.f32 %v4059, %v466
        %v4492 = vmul.f32 %v4062, %v467
        %v4493 = vmul.f32 %v4067, %v468
        %v4494 = vmul.f32 %v4070, %v469
        %v4495 = vmul.f32 %v4075, %v470
        %v4496 = vmul.f32 %v4078, %v471
        %v4497 = vmul.f32 %v4083, %v456
        %v4498 = vmul.f32 %v4086, %v457
        %v4499 = vmul.f32 %v4091, %v458
        %v4500 = vmul.f32 %v4094, %v459
        %v4501 = vmul.f32 %v4099, %v460
        %v4502 = vmul.f32 %v4102, %v461
        %v4503 = vmul.f32 %v4107, %v462
        %v4504 = vmul.f32 %v4110, %v463
        %v4505 = vmul.f32 %v4115, %v464
        %v4506 = vmul.f32 %v4118, %v465
        %v4507 = vmul.f32 %v4123, %v466
        %v4508 = vmul.f32 %v4126, %v467
        %v4509 = vmul.f32 %v4131, %v468
        %v4510 = vmul.f32 %v4134, %v469
        %v4511 = vmul.f32 %v4139, %v470
        %v4512 = vmul.f32 %v4142, %v471
        %v4513 = vmul.f32 %v4147, %v456
        %v4514 = vmul.f32 %v4150, %v457
        %v4515 = vmul.f32 %v4155, %v458
        %v4516 = vmul.f32 %v4158, %v459
        %v4517 = vmul.f32 %v4163, %v460
        %v4518 = vmul.f32 %v4166, %v461
        %v4519 = vmul.f32 %v4171, %v462
        %v4520 = vmul.f32 %v4174, %v463
        %v4521 = vmul.f32 %v4179, %v464
        %v4522 = vmul.f32 %v4182, %v465
        %v4523 = vmul.f32 %v4187, %v466
        %v4524 = vmul.f32 %v4190, %v467
        %v4525 = vmul.f32 %v4195, %v468
        %v4526 = vmul.f32 %v4198, %v469
        %v4527 = vmul.f32 %v4203, %v470
        %v4528 = vmul.f32 %v4206, %v471
        %v4529 = vmul.f32 %v4211, %v456
        %v4530 = vmul.f32 %v4214, %v457
        %v4531 = vmul.f32 %v4219, %v458
        %v4532 = vmul.f32 %v4222, %v459
        %v4533 = vmul.f32 %v4227, %v460
        %v4534 = vmul.f32 %v4230, %v461
        %v4535 = vmul.f32 %v4235, %v462
        %v4536 = vmul.f32 %v4238, %v463
        %v4537 = vmul.f32 %v4243, %v464
        %v4538 = vmul.f32 %v4246, %v465
        %v4539 = vmul.f32 %v4251, %v466
        %v4540 = vmul.f32 %v4254, %v467
        %v4541 = vmul.f32 %v4259, %v468
        %v4542 = vmul.f32 %v4262, %v469
        %v4543 = vmul.f32 %v4267, %v470
        %v4544 = vmul.f32 %v4270, %v471
        %v4545 = vmul.f32 %v4275, %v456
        %v4546 = vmul.f32 %v4278, %v457
        %v4547 = vmul.f32 %v4283, %v458
        %v4548 = vmul.f32 %v4286, %v459
        %v4549 = vmul.f32 %v4291, %v460
        %v4550 = vmul.f32 %v4294, %v461
        %v4551 = vmul.f32 %v4299, %v462
        %v4552 = vmul.f32 %v4302, %v463
        %v4553 = vmul.f32 %v4307, %v464
        %v4554 = vmul.f32 %v4310, %v465
        %v4555 = vmul.f32 %v4315, %v466
        %v4556 = vmul.f32 %v4318, %v467
        %v4557 = vmul.f32 %v4323, %v468
        %v4558 = vmul.f32 %v4326, %v469
        %v4559 = vmul.f32 %v4331, %v470
        %v4560 = vmul.f32 %v4334, %v471
        %v4561 = vmul.f32 %v4339, %v456
        %v4562 = vmul.f32 %v4342, %v457
        %v4563 = vmul.f32 %v4347, %v458
        %v4564 = vmul.f32 %v4350, %v459
        %v4565 = vmul.f32 %v4355, %v460
        %v4566 = vmul.f32 %v4358, %v461
        %v4567 = vmul.f32 %v4363, %v462
        %v4568 = vmul.f32 %v4366, %v463
        %v4569 = vmul.f32 %v4371, %v464
        %v4570 = vmul.f32 %v4374, %v465
        %v4571 = vmul.f32 %v4379, %v466
        %v4572 = vmul.f32 %v4382, %v467
        %v4573 = vmul.f32 %v4387, %v468
        %v4574 = vmul.f32 %v4390, %v469
        %v4575 = vmul.f32 %v4395, %v470
        %v4576 = vmul.f32 %v4398, %v471
        %v4577 = vmul.f32 %v4403, %v456
        %v4578 = vmul.f32 %v4406, %v457
        %v4579 = vmul.f32 %v4411, %v458
        %v4580 = vmul.f32 %v4414, %v459
        %v4581 = vmul.f32 %v4419, %v460
        %v4582 = vmul.f32 %v4422, %v461
        %v4583 = vmul.f32 %v4427, %v462
        %v4584 = vmul.f32 %v4430, %v463
        %v4585 = vmul.f32 %v4435, %v464
        %v4586 = vmul.f32 %v4438, %v465
        %v4587 = vmul.f32 %v4443, %v466
        %v4588 = vmul.f32 %v4446, %v467
        %v4589 = vmul.f32 %v4451, %v468
        %v4590 = vmul.f32 %v4454, %v469
        %v4591 = vmul.f32 %v4459, %v470
        %v4592 = vmul.f32 %v4462, %v471
        %v4593 = vsel %vm527, %v4465, 0.0
        %v4594 = vsel %vm527, %v4466, 0.0
        %v4595 = vadd.f32 %v4593, %v4594
        %v4596 = vsel %vm527, %v4467, 0.0
        %v4597 = vadd.f32 %v4595, %v4596
        %v4598 = vsel %vm527, %v4468, 0.0
        %v4599 = vadd.f32 %v4597, %v4598
        %v4600 = vsel %vm527, %v4469, 0.0
        %v4601 = vadd.f32 %v4599, %v4600
        %v4602 = vsel %vm527, %v4470, 0.0
        %v4603 = vadd.f32 %v4601, %v4602
        %v4604 = vsel %vm527, %v4471, 0.0
        %v4605 = vadd.f32 %v4603, %v4604
        %v4606 = vsel %vm527, %v4472, 0.0
        %v4607 = vadd.f32 %v4605, %v4606
        %v4608 = vsel %vm527, %v4473, 0.0
        %v4609 = vadd.f32 %v4607, %v4608
        %v4610 = vsel %vm527, %v4474, 0.0
        %v4611 = vadd.f32 %v4609, %v4610
        %v4612 = vsel %vm527, %v4475, 0.0
        %v4613 = vadd.f32 %v4611, %v4612
        %v4614 = vsel %vm527, %v4476, 0.0
        %v4615 = vadd.f32 %v4613, %v4614
        %v4616 = vsel %vm527, %v4477, 0.0
        %v4617 = vadd.f32 %v4615, %v4616
        %v4618 = vsel %vm527, %v4478, 0.0
        %v4619 = vadd.f32 %v4617, %v4618
        %v4620 = vsel %vm527, %v4479, 0.0
        %v4621 = vadd.f32 %v4619, %v4620
        %v4622 = vsel %vm527, %v4480, 0.0
        %v4623 = vadd.f32 %v4621, %v4622
        %v4624 = vrot.slane %v4623, 4
        %v4625 = vadd.f32 %v4623, %v4624
        %v4626 = vrot.slane %v4625, 2
        %v4627 = vadd.f32 %v4625, %v4626
        %v4628 = vrot.slane %v4627, 1
        %v4629 = vadd.f32 %v4627, %v4628
        %v4630 = vsel %vm527, %v4481, 0.0
        %v4631 = vsel %vm527, %v4482, 0.0
        %v4632 = vadd.f32 %v4630, %v4631
        %v4633 = vsel %vm527, %v4483, 0.0
        %v4634 = vadd.f32 %v4632, %v4633
        %v4635 = vsel %vm527, %v4484, 0.0
        %v4636 = vadd.f32 %v4634, %v4635
        %v4637 = vsel %vm527, %v4485, 0.0
        %v4638 = vadd.f32 %v4636, %v4637
        %v4639 = vsel %vm527, %v4486, 0.0
        %v4640 = vadd.f32 %v4638, %v4639
        %v4641 = vsel %vm527, %v4487, 0.0
        %v4642 = vadd.f32 %v4640, %v4641
        %v4643 = vsel %vm527, %v4488, 0.0
        %v4644 = vadd.f32 %v4642, %v4643
        %v4645 = vsel %vm527, %v4489, 0.0
        %v4646 = vadd.f32 %v4644, %v4645
        %v4647 = vsel %vm527, %v4490, 0.0
        %v4648 = vadd.f32 %v4646, %v4647
        %v4649 = vsel %vm527, %v4491, 0.0
        %v4650 = vadd.f32 %v4648, %v4649
        %v4651 = vsel %vm527, %v4492, 0.0
        %v4652 = vadd.f32 %v4650, %v4651
        %v4653 = vsel %vm527, %v4493, 0.0
        %v4654 = vadd.f32 %v4652, %v4653
        %v4655 = vsel %vm527, %v4494, 0.0
        %v4656 = vadd.f32 %v4654, %v4655
        %v4657 = vsel %vm527, %v4495, 0.0
        %v4658 = vadd.f32 %v4656, %v4657
        %v4659 = vsel %vm527, %v4496, 0.0
        %v4660 = vadd.f32 %v4658, %v4659
        %v4661 = vrot.slane %v4660, 4
        %v4662 = vadd.f32 %v4660, %v4661
        %v4663 = vrot.slane %v4662, 2
        %v4664 = vadd.f32 %v4662, %v4663
        %v4665 = vrot.slane %v4664, 1
        %v4666 = vadd.f32 %v4664, %v4665
        %v4667 = vsel %vm527, %v4497, 0.0
        %v4668 = vsel %vm527, %v4498, 0.0
        %v4669 = vadd.f32 %v4667, %v4668
        %v4670 = vsel %vm527, %v4499, 0.0
        %v4671 = vadd.f32 %v4669, %v4670
        %v4672 = vsel %vm527, %v4500, 0.0
        %v4673 = vadd.f32 %v4671, %v4672
        %v4674 = vsel %vm527, %v4501, 0.0
        %v4675 = vadd.f32 %v4673, %v4674
        %v4676 = vsel %vm527, %v4502, 0.0
        %v4677 = vadd.f32 %v4675, %v4676
        %v4678 = vsel %vm527, %v4503, 0.0
        %v4679 = vadd.f32 %v4677, %v4678
        %v4680 = vsel %vm527, %v4504, 0.0
        %v4681 = vadd.f32 %v4679, %v4680
        %v4682 = vsel %vm527, %v4505, 0.0
        %v4683 = vadd.f32 %v4681, %v4682
        %v4684 = vsel %vm527, %v4506, 0.0
        %v4685 = vadd.f32 %v4683, %v4684
        %v4686 = vsel %vm527, %v4507, 0.0
        %v4687 = vadd.f32 %v4685, %v4686
        %v4688 = vsel %vm527, %v4508, 0.0
        %v4689 = vadd.f32 %v4687, %v4688
        %v4690 = vsel %vm527, %v4509, 0.0
        %v4691 = vadd.f32 %v4689, %v4690
        %v4692 = vsel %vm527, %v4510, 0.0
        %v4693 = vadd.f32 %v4691, %v4692
        %v4694 = vsel %vm527, %v4511, 0.0
        %v4695 = vadd.f32 %v4693, %v4694
        %v4696 = vsel %vm527, %v4512, 0.0
        %v4697 = vadd.f32 %v4695, %v4696
        %v4698 = vrot.slane %v4697, 4
        %v4699 = vadd.f32 %v4697, %v4698
        %v4700 = vrot.slane %v4699, 2
        %v4701 = vadd.f32 %v4699, %v4700
        %v4702 = vrot.slane %v4701, 1
        %v4703 = vadd.f32 %v4701, %v4702
        %v4704 = vsel %vm527, %v4513, 0.0
        %v4705 = vsel %vm527, %v4514, 0.0
        %v4706 = vadd.f32 %v4704, %v4705
        %v4707 = vsel %vm527, %v4515, 0.0
        %v4708 = vadd.f32 %v4706, %v4707
        %v4709 = vsel %vm527, %v4516, 0.0
        %v4710 = vadd.f32 %v4708, %v4709
        %v4711 = vsel %vm527, %v4517, 0.0
        %v4712 = vadd.f32 %v4710, %v4711
        %v4713 = vsel %vm527, %v4518, 0.0
        %v4714 = vadd.f32 %v4712, %v4713
        %v4715 = vsel %vm527, %v4519, 0.0
        %v4716 = vadd.f32 %v4714, %v4715
        %v4717 = vsel %vm527, %v4520, 0.0
        %v4718 = vadd.f32 %v4716, %v4717
        %v4719 = vsel %vm527, %v4521, 0.0
        %v4720 = vadd.f32 %v4718, %v4719
        %v4721 = vsel %vm527, %v4522, 0.0
        %v4722 = vadd.f32 %v4720, %v4721
        %v4723 = vsel %vm527, %v4523, 0.0
        %v4724 = vadd.f32 %v4722, %v4723
        %v4725 = vsel %vm527, %v4524, 0.0
        %v4726 = vadd.f32 %v4724, %v4725
        %v4727 = vsel %vm527, %v4525, 0.0
        %v4728 = vadd.f32 %v4726, %v4727
        %v4729 = vsel %vm527, %v4526, 0.0
        %v4730 = vadd.f32 %v4728, %v4729
        %v4731 = vsel %vm527, %v4527, 0.0
        %v4732 = vadd.f32 %v4730, %v4731
        %v4733 = vsel %vm527, %v4528, 0.0
        %v4734 = vadd.f32 %v4732, %v4733
        %v4735 = vrot.slane %v4734, 4
        %v4736 = vadd.f32 %v4734, %v4735
        %v4737 = vrot.slane %v4736, 2
        %v4738 = vadd.f32 %v4736, %v4737
        %v4739 = vrot.slane %v4738, 1
        %v4740 = vadd.f32 %v4738, %v4739
        %v4741 = vsel %vm527, %v4529, 0.0
        %v4742 = vsel %vm527, %v4530, 0.0
        %v4743 = vadd.f32 %v4741, %v4742
        %v4744 = vsel %vm527, %v4531, 0.0
        %v4745 = vadd.f32 %v4743, %v4744
        %v4746 = vsel %vm527, %v4532, 0.0
        %v4747 = vadd.f32 %v4745, %v4746
        %v4748 = vsel %vm527, %v4533, 0.0
        %v4749 = vadd.f32 %v4747, %v4748
        %v4750 = vsel %vm527, %v4534, 0.0
        %v4751 = vadd.f32 %v4749, %v4750
        %v4752 = vsel %vm527, %v4535, 0.0
        %v4753 = vadd.f32 %v4751, %v4752
        %v4754 = vsel %vm527, %v4536, 0.0
        %v4755 = vadd.f32 %v4753, %v4754
        %v4756 = vsel %vm527, %v4537, 0.0
        %v4757 = vadd.f32 %v4755, %v4756
        %v4758 = vsel %vm527, %v4538, 0.0
        %v4759 = vadd.f32 %v4757, %v4758
        %v4760 = vsel %vm527, %v4539, 0.0
        %v4761 = vadd.f32 %v4759, %v4760
        %v4762 = vsel %vm527, %v4540, 0.0
        %v4763 = vadd.f32 %v4761, %v4762
        %v4764 = vsel %vm527, %v4541, 0.0
        %v4765 = vadd.f32 %v4763, %v4764
        %v4766 = vsel %vm527, %v4542, 0.0
        %v4767 = vadd.f32 %v4765, %v4766
        %v4768 = vsel %vm527, %v4543, 0.0
        %v4769 = vadd.f32 %v4767, %v4768
        %v4770 = vsel %vm527, %v4544, 0.0
        %v4771 = vadd.f32 %v4769, %v4770
        %v4772 = vrot.slane %v4771, 4
        %v4773 = vadd.f32 %v4771, %v4772
        %v4774 = vrot.slane %v4773, 2
        %v4775 = vadd.f32 %v4773, %v4774
        %v4776 = vrot.slane %v4775, 1
        %v4777 = vadd.f32 %v4775, %v4776
        %v4778 = vsel %vm527, %v4545, 0.0
        %v4779 = vsel %vm527, %v4546, 0.0
        %v4780 = vadd.f32 %v4778, %v4779
        %v4781 = vsel %vm527, %v4547, 0.0
        %v4782 = vadd.f32 %v4780, %v4781
        %v4783 = vsel %vm527, %v4548, 0.0
        %v4784 = vadd.f32 %v4782, %v4783
        %v4785 = vsel %vm527, %v4549, 0.0
        %v4786 = vadd.f32 %v4784, %v4785
        %v4787 = vsel %vm527, %v4550, 0.0
        %v4788 = vadd.f32 %v4786, %v4787
        %v4789 = vsel %vm527, %v4551, 0.0
        %v4790 = vadd.f32 %v4788, %v4789
        %v4791 = vsel %vm527, %v4552, 0.0
        %v4792 = vadd.f32 %v4790, %v4791
        %v4793 = vsel %vm527, %v4553, 0.0
        %v4794 = vadd.f32 %v4792, %v4793
        %v4795 = vsel %vm527, %v4554, 0.0
        %v4796 = vadd.f32 %v4794, %v4795
        %v4797 = vsel %vm527, %v4555, 0.0
        %v4798 = vadd.f32 %v4796, %v4797
        %v4799 = vsel %vm527, %v4556, 0.0
        %v4800 = vadd.f32 %v4798, %v4799
        %v4801 = vsel %vm527, %v4557, 0.0
        %v4802 = vadd.f32 %v4800, %v4801
        %v4803 = vsel %vm527, %v4558, 0.0
        %v4804 = vadd.f32 %v4802, %v4803
        %v4805 = vsel %vm527, %v4559, 0.0
        %v4806 = vadd.f32 %v4804, %v4805
        %v4807 = vsel %vm527, %v4560, 0.0
        %v4808 = vadd.f32 %v4806, %v4807
        %v4809 = vrot.slane %v4808, 4
        %v4810 = vadd.f32 %v4808, %v4809
        %v4811 = vrot.slane %v4810, 2
        %v4812 = vadd.f32 %v4810, %v4811
        %v4813 = vrot.slane %v4812, 1
        %v4814 = vadd.f32 %v4812, %v4813
        %v4815 = vsel %vm527, %v4561, 0.0
        %v4816 = vsel %vm527, %v4562, 0.0
        %v4817 = vadd.f32 %v4815, %v4816
        %v4818 = vsel %vm527, %v4563, 0.0
        %v4819 = vadd.f32 %v4817, %v4818
        %v4820 = vsel %vm527, %v4564, 0.0
        %v4821 = vadd.f32 %v4819, %v4820
        %v4822 = vsel %vm527, %v4565, 0.0
        %v4823 = vadd.f32 %v4821, %v4822
        %v4824 = vsel %vm527, %v4566, 0.0
        %v4825 = vadd.f32 %v4823, %v4824
        %v4826 = vsel %vm527, %v4567, 0.0
        %v4827 = vadd.f32 %v4825, %v4826
        %v4828 = vsel %vm527, %v4568, 0.0
        %v4829 = vadd.f32 %v4827, %v4828
        %v4830 = vsel %vm527, %v4569, 0.0
        %v4831 = vadd.f32 %v4829, %v4830
        %v4832 = vsel %vm527, %v4570, 0.0
        %v4833 = vadd.f32 %v4831, %v4832
        %v4834 = vsel %vm527, %v4571, 0.0
        %v4835 = vadd.f32 %v4833, %v4834
        %v4836 = vsel %vm527, %v4572, 0.0
        %v4837 = vadd.f32 %v4835, %v4836
        %v4838 = vsel %vm527, %v4573, 0.0
        %v4839 = vadd.f32 %v4837, %v4838
        %v4840 = vsel %vm527, %v4574, 0.0
        %v4841 = vadd.f32 %v4839, %v4840
        %v4842 = vsel %vm527, %v4575, 0.0
        %v4843 = vadd.f32 %v4841, %v4842
        %v4844 = vsel %vm527, %v4576, 0.0
        %v4845 = vadd.f32 %v4843, %v4844
        %v4846 = vrot.slane %v4845, 4
        %v4847 = vadd.f32 %v4845, %v4846
        %v4848 = vrot.slane %v4847, 2
        %v4849 = vadd.f32 %v4847, %v4848
        %v4850 = vrot.slane %v4849, 1
        %v4851 = vadd.f32 %v4849, %v4850
        %v4852 = vsel %vm527, %v4577, 0.0
        %v4853 = vsel %vm527, %v4578, 0.0
        %v4854 = vadd.f32 %v4852, %v4853
        %v4855 = vsel %vm527, %v4579, 0.0
        %v4856 = vadd.f32 %v4854, %v4855
        %v4857 = vsel %vm527, %v4580, 0.0
        %v4858 = vadd.f32 %v4856, %v4857
        %v4859 = vsel %vm527, %v4581, 0.0
        %v4860 = vadd.f32 %v4858, %v4859
        %v4861 = vsel %vm527, %v4582, 0.0
        %v4862 = vadd.f32 %v4860, %v4861
        %v4863 = vsel %vm527, %v4583, 0.0
        %v4864 = vadd.f32 %v4862, %v4863
        %v4865 = vsel %vm527, %v4584, 0.0
        %v4866 = vadd.f32 %v4864, %v4865
        %v4867 = vsel %vm527, %v4585, 0.0
        %v4868 = vadd.f32 %v4866, %v4867
        %v4869 = vsel %vm527, %v4586, 0.0
        %v4870 = vadd.f32 %v4868, %v4869
        %v4871 = vsel %vm527, %v4587, 0.0
        %v4872 = vadd.f32 %v4870, %v4871
        %v4873 = vsel %vm527, %v4588, 0.0
        %v4874 = vadd.f32 %v4872, %v4873
        %v4875 = vsel %vm527, %v4589, 0.0
        %v4876 = vadd.f32 %v4874, %v4875
        %v4877 = vsel %vm527, %v4590, 0.0
        %v4878 = vadd.f32 %v4876, %v4877
        %v4879 = vsel %vm527, %v4591, 0.0
        %v4880 = vadd.f32 %v4878, %v4879
        %v4881 = vsel %vm527, %v4592, 0.0
        %v4882 = vadd.f32 %v4880, %v4881
        %v4883 = vrot.slane %v4882, 4
        %v4884 = vadd.f32 %v4882, %v4883
        %v4885 = vrot.slane %v4884, 2
        %v4886 = vadd.f32 %v4884, %v4885
        %v4887 = vrot.slane %v4886, 1
        %v4888 = vadd.f32 %v4886, %v4887
        %v4889 = vlaneseq
        %v4890 = vshrl.u32 %v4889, 7
        %v4891 = vsub.s32 0, %v4890
        %v4892 = vrot.slane %v394, %v4891
        %vm4901 = vcmask 1041409
        %v4902 = vsel %vm4901, %v4666, %v4629
        %vm4903 = vcmask 1042434
        %v4904 = vsel %vm4903, %v4703, %v4902
        %vm4905 = vcmask 1043459
        %v4906 = vsel %vm4905, %v4740, %v4904
        %vm4907 = vcmask 1044484
        %v4908 = vsel %vm4907, %v4777, %v4906
        %vm4909 = vcmask 1045509
        %v4910 = vsel %vm4909, %v4814, %v4908
        %vm4911 = vcmask 1046534
        %v4912 = vsel %vm4911, %v4851, %v4910
        %vm4913 = vcmask 1047559
        %v4914 = vsel %vm4913, %v4888, %v4912
        %v4915 = vsel %vm527, %v4914, 0
        %4917 = vmatprep.subr.mxu0 0.0
        %4918 = vmatpush1.msra.mxu0 %v365
        %4919 = vmatprep.subr.mxu0 0.0
        %4920 = vmatpush1.msra.mxu0 %v366
        %4921 = vmatprep.subr.mxu0 0.0
        %4922 = vmatpush1.msra.mxu0 %v367
        %4923 = vmatprep.subr.mxu0 0.0
        %4924 = vmatpush1.msra.mxu0 %v368
        %4925 = vmatprep.subr.mxu0 0.0
        %4926 = vmatpush1.msra.mxu0 0.0
        %4927 = vmatprep.subr.mxu0 0.0
        %4928 = vmatpush1.msra.mxu0 0.0
        %4929 = vmatprep.subr.mxu0 0.0
        %4930 = vmatpush1.msra.mxu0 0.0
        %4931 = vmatprep.subr.mxu0 0.0
        %4932 = vmatpush1.msra.mxu0 0.0
        %4933 = vmatprep.subr.mxu0 0.0
        %4934 = vmatpush1.msra.mxu0 0.0
        %4935 = vmatprep.subr.mxu0 0.0
        %4936 = vmatpush1.msra.mxu0 0.0
        %4937 = vmatprep.subr.mxu0 0.0
        %4938 = vmatpush1.msra.mxu0 0.0
        %4939 = vmatprep.subr.mxu0 0.0
        %4940 = vmatpush1.msra.mxu0 0.0
        %4941 = vmatprep.subr.mxu0 0.0
        %4942 = vmatpush1.msra.mxu0 0.0
        %4943 = vmatprep.subr.mxu0 0.0
        %4944 = vmatpush1.msra.mxu0 0.0
        %4945 = vmatprep.subr.mxu0 0.0
        %4946 = vmatpush1.msra.mxu0 0.0
        %4947 = vmatprep.subr.mxu0 0.0
        %4948 = vmatpush1.msra.mxu0 0.0
        %4949 = vmatprep.subr.mxu0 0.0
        %4950 = vmatpush1.msra.mxu0 0.0
        %4951 = vmatprep.subr.mxu0 0.0
        %4952 = vmatpush1.msra.mxu0 0.0
        %4953 = vmatprep.subr.mxu0 0.0
        %4954 = vmatpush1.msra.mxu0 0.0
        %4955 = vmatprep.subr.mxu0 0.0
        %4956 = vmatpush1.msra.mxu0 0.0
        %4957 = vmatprep.subr.mxu0 0.0
        %4958 = vmatpush1.msra.mxu0 0.0
        %4959 = vmatprep.subr.mxu0 0.0
        %4960 = vmatpush1.msra.mxu0 0.0
        %4961 = vmatprep.subr.mxu0 0.0
        %4962 = vmatpush1.msra.mxu0 0.0
        %4963 = vmatprep.subr.mxu0 0.0
        %4964 = vmatpush1.msra.mxu0 0.0
        %4965 = vmatprep.subr.mxu0 0.0
        %4966 = vmatpush1.msra.mxu0 0.0
        %4967 = vmatprep.subr.mxu0 0.0
        %4968 = vmatpush1.msra.mxu0 0.0
        %4969 = vmatprep.subr.mxu0 0.0
        %4970 = vmatpush1.msra.mxu0 0.0
        %4971 = vmatprep.subr.mxu0 0.0
        %4972 = vmatpush1.msra.mxu0 0.0
        %4973 = vmatprep.subr.mxu0 0.0
        %4974 = vmatpush1.msra.mxu0 0.0
        %4975 = vmatprep.subr.mxu0 0.0
        %4976 = vmatpush1.msra.mxu0 0.0
        %4977 = vmatprep.subr.mxu0 0.0
        %4978 = vmatpush1.msra.mxu0 0.0
        %4979 = vmatprep.subr.mxu0 0.0
        %4980 = vmatpush1.msra.mxu0 0.0
        %4981 = vmatprep.mubr.f32.mxu0 0.0
        %4982 = vmatmul.mubr.f32.gmra.mrb[0].mxu0 %v4915
        %v4983 = vpop.f32.mrb[0].mxu0
        %v4984 = vadd.f32 %v4892, %v4983
        %v4985 = vpop.f32.mrb[0].mxu0
        %4986 = vdwg.mxu0
        %v4987 = vadd.f32 %v405, %v4984
        %v4988 = vsel %vm527, %v4987, 0.0
        %4989 = vadd.xlane.f32.xlu0 %v4988
        %v4990 = vpop.xlane.xlu0 %4989
        %v4991 = vrcp.pop 32.0
        %v4992 = vmul.f32 %v4990, %v4991
        %v4993 = vsub.f32 %v4987, %v4992
        %v4994 = vmul.f32 %v4993, %v4993
        %v4995 = vsel %vm527, %v4994, 0.0
        %4996 = vadd.xlane.f32.xlu0 %v4995
        %v4997 = vpop.xlane.xlu0 %4996
        %v4998 = vmul.f32 %v4997, %v4991
        %v4999 = vadd.f32 %v4998, 1e-05
        %v5000 = vrsqrt.pop %v4999
        %v5001 = vmul.f32 %v4993, %v5000
        %v5002 = vlaneseq
        %v5003 = vshrl.u32 %v5002, 7
        %v5004 = vsub.s32 0, %v5003
        %v5005 = vrot.slane %v395, %v5004
        %v5006 = vmul.f32 %v5001, %v5005
        %v5007 = vlaneseq
        %v5008 = vshrl.u32 %v5007, 7
        %v5009 = vsub.s32 0, %v5008
        %v5010 = vrot.slane %v396, %v5009
        %v5011 = vadd.f32 %v5006, %v5010
        %v5012 = vsel %vm527, %v5011, %v405
        %v5013 = vlaneseq
        %v5014 = vshrl.u32 %v5013, 7
        %v5015 = vsub.s32 0, %v5014
        %v5016 = vrot.slane %v397, %v5015
        %vm5017 = vcmask 523264
        %v5019 = vsel %vm5017, %v5012, 0
        %5021 = vmatprep.subr.mxu0 0.0
        %5022 = vmatpush1.msra.mxu0 %v369
        %5023 = vmatprep.subr.mxu0 0.0
        %5024 = vmatpush1.msra.mxu0 %v370
        %5025 = vmatprep.subr.mxu0 0.0
        %5026 = vmatpush1.msra.mxu0 %v371
        %5027 = vmatprep.subr.mxu0 0.0
        %5028 = vmatpush1.msra.mxu0 %v372
        %5029 = vmatprep.subr.mxu0 0.0
        %5030 = vmatpush1.msra.mxu0 %v373
        %5031 = vmatprep.subr.mxu0 0.0
        %5032 = vmatpush1.msra.mxu0 %v374
        %5033 = vmatprep.subr.mxu0 0.0
        %5034 = vmatpush1.msra.mxu0 %v375
        %5035 = vmatprep.subr.mxu0 0.0
        %5036 = vmatpush1.msra.mxu0 %v376
        %5037 = vmatprep.subr.mxu0 0.0
        %5038 = vmatpush1.msra.mxu0 0.0
        %5039 = vmatprep.subr.mxu0 0.0
        %5040 = vmatpush1.msra.mxu0 0.0
        %5041 = vmatprep.subr.mxu0 0.0
        %5042 = vmatpush1.msra.mxu0 0.0
        %5043 = vmatprep.subr.mxu0 0.0
        %5044 = vmatpush1.msra.mxu0 0.0
        %5045 = vmatprep.subr.mxu0 0.0
        %5046 = vmatpush1.msra.mxu0 0.0
        %5047 = vmatprep.subr.mxu0 0.0
        %5048 = vmatpush1.msra.mxu0 0.0
        %5049 = vmatprep.subr.mxu0 0.0
        %5050 = vmatpush1.msra.mxu0 0.0
        %5051 = vmatprep.subr.mxu0 0.0
        %5052 = vmatpush1.msra.mxu0 0.0
        %5053 = vmatprep.subr.mxu0 0.0
        %5054 = vmatpush1.msra.mxu0 0.0
        %5055 = vmatprep.subr.mxu0 0.0
        %5056 = vmatpush1.msra.mxu0 0.0
        %5057 = vmatprep.subr.mxu0 0.0
        %5058 = vmatpush1.msra.mxu0 0.0
        %5059 = vmatprep.subr.mxu0 0.0
        %5060 = vmatpush1.msra.mxu0 0.0
        %5061 = vmatprep.subr.mxu0 0.0
        %5062 = vmatpush1.msra.mxu0 0.0
        %5063 = vmatprep.subr.mxu0 0.0
        %5064 = vmatpush1.msra.mxu0 0.0
        %5065 = vmatprep.subr.mxu0 0.0
        %5066 = vmatpush1.msra.mxu0 0.0
        %5067 = vmatprep.subr.mxu0 0.0
        %5068 = vmatpush1.msra.mxu0 0.0
        %5069 = vmatprep.subr.mxu0 0.0
        %5070 = vmatpush1.msra.mxu0 0.0
        %5071 = vmatprep.subr.mxu0 0.0
        %5072 = vmatpush1.msra.mxu0 0.0
        %5073 = vmatprep.subr.mxu0 0.0
        %5074 = vmatpush1.msra.mxu0 0.0
        %5075 = vmatprep.subr.mxu0 0.0
        %5076 = vmatpush1.msra.mxu0 0.0
        %5077 = vmatprep.subr.mxu0 0.0
        %5078 = vmatpush1.msra.mxu0 0.0
        %5079 = vmatprep.subr.mxu0 0.0
        %5080 = vmatpush1.msra.mxu0 0.0
        %5081 = vmatprep.subr.mxu0 0.0
        %5082 = vmatpush1.msra.mxu0 0.0
        %5083 = vmatprep.subr.mxu0 0.0
        %5084 = vmatpush1.msra.mxu0 0.0
        %5085 = vmatprep.mubr.f32.mxu0 0.0
        %5086 = vmatmul.mubr.f32.gmra.mrb[0].mxu0 %v5019
        %v5087 = vpop.f32.mrb[0].mxu0
        %v5088 = vadd.f32 %v5016, %v5087
        %v5089 = vpop.f32.mrb[0].mxu0
        %5090 = vdwg.mxu0
        %v5091 = vmul.f32 %v5088, 0.5
        %5100 = vrot.lane.b32.xlu0 %v472, 32
        %v5101 = vpop.permute.xlu0 %5100
        %5102 = vrot.lane.b32.xlu0 %v473, 32
        %v5103 = vpop.permute.xlu0 %5102
        %5104 = vrot.lane.b32.xlu0 %v474, 32
        %v5105 = vpop.permute.xlu0 %5104
        %5106 = vrot.lane.b32.xlu0 %v475, 32
        %v5107 = vpop.permute.xlu0 %5106
        %5108 = vrot.lane.b32.xlu0 %v476, 32
        %v5109 = vpop.permute.xlu0 %5108
        %5110 = vrot.lane.b32.xlu0 %v477, 32
        %v5111 = vpop.permute.xlu0 %5110
        %5112 = vrot.lane.b32.xlu0 %v478, 32
        %v5113 = vpop.permute.xlu0 %5112
        %5114 = vrot.lane.b32.xlu0 %v479, 32
        %v5115 = vpop.permute.xlu0 %5114
        %v5124 = vmul.f32 %v5088, %v5101
        %v5125 = vmul.f32 %v5088, %v5103
        %v5126 = vmul.f32 %v5088, %v5105
        %v5127 = vmul.f32 %v5088, %v5107
        %v5128 = vmul.f32 %v5088, %v5109
        %v5129 = vmul.f32 %v5088, %v5111
        %v5130 = vmul.f32 %v5088, %v5113
        %v5131 = vmul.f32 %v5088, %v5115
        %5132 = vrot.lane.b32.xlu0 %v472, 64
        %v5133 = vpop.permute.xlu0 %5132
        %5134 = vrot.lane.b32.xlu0 %v473, 64
        %v5135 = vpop.permute.xlu0 %5134
        %5136 = vrot.lane.b32.xlu0 %v474, 64
        %v5137 = vpop.permute.xlu0 %5136
        %5138 = vrot.lane.b32.xlu0 %v475, 64
        %v5139 = vpop.permute.xlu0 %5138
        %5140 = vrot.lane.b32.xlu0 %v476, 64
        %v5141 = vpop.permute.xlu0 %5140
        %5142 = vrot.lane.b32.xlu0 %v477, 64
        %v5143 = vpop.permute.xlu0 %5142
        %5144 = vrot.lane.b32.xlu0 %v478, 64
        %v5145 = vpop.permute.xlu0 %5144
        %5146 = vrot.lane.b32.xlu0 %v479, 64
        %v5147 = vpop.permute.xlu0 %5146
        %v5156 = vmul.f32 %v5088, %v5133
        %v5157 = vmul.f32 %v5088, %v5135
        %v5158 = vmul.f32 %v5088, %v5137
        %v5159 = vmul.f32 %v5088, %v5139
        %v5160 = vmul.f32 %v5088, %v5141
        %v5161 = vmul.f32 %v5088, %v5143
        %v5162 = vmul.f32 %v5088, %v5145
        %v5163 = vmul.f32 %v5088, %v5147
        %5172 = vrot.lane.b32.xlu0 %v5124, 96
        %v5173 = vpop.permute.xlu0 %5172
        %5174 = vrot.lane.b32.xlu0 %v5125, 96
        %v5175 = vpop.permute.xlu0 %5174
        %5176 = vrot.lane.b32.xlu0 %v5126, 96
        %v5177 = vpop.permute.xlu0 %5176
        %5178 = vrot.lane.b32.xlu0 %v5127, 96
        %v5179 = vpop.permute.xlu0 %5178
        %5180 = vrot.lane.b32.xlu0 %v5128, 96
        %v5181 = vpop.permute.xlu0 %5180
        %5182 = vrot.lane.b32.xlu0 %v5129, 96
        %v5183 = vpop.permute.xlu0 %5182
        %5184 = vrot.lane.b32.xlu0 %v5130, 96
        %v5185 = vpop.permute.xlu0 %5184
        %5186 = vrot.lane.b32.xlu0 %v5131, 96
        %v5187 = vpop.permute.xlu0 %5186
        %v5189 = vsel %vm527, %v5091, 0
        %v5191 = vsel %vm527, %v5173, 0
        %v5193 = vsel %vm527, %v5175, 0
        %v5195 = vsel %vm527, %v5177, 0
        %v5197 = vsel %vm527, %v5179, 0
        %v5199 = vsel %vm527, %v5181, 0
        %v5201 = vsel %vm527, %v5183, 0
        %v5203 = vsel %vm527, %v5185, 0
        %v5205 = vsel %vm527, %v5187, 0
        %5207 = vmatprep.subr.mxu0 0.0
        %5208 = vmatpush1.xpose.msra.mxu0 %v5191
        %5209 = vmatprep.subr.mxu0 0.0
        %5210 = vmatpush1.xpose.msra.mxu0 %v5193
        %5211 = vmatprep.subr.mxu0 0.0
        %5212 = vmatpush1.xpose.msra.mxu0 %v5195
        %5213 = vmatprep.subr.mxu0 0.0
        %5214 = vmatpush1.xpose.msra.mxu0 %v5197
        %5215 = vmatprep.subr.mxu0 0.0
        %5216 = vmatpush1.xpose.msra.mxu0 %v5199
        %5217 = vmatprep.subr.mxu0 0.0
        %5218 = vmatpush1.xpose.msra.mxu0 %v5201
        %5219 = vmatprep.subr.mxu0 0.0
        %5220 = vmatpush1.xpose.msra.mxu0 %v5203
        %5221 = vmatprep.subr.mxu0 0.0
        %5222 = vmatpush1.xpose.msra.mxu0 %v5205
        %5223 = vmatprep.subr.mxu0 0.0
        %5224 = vmatpush1.xpose.msra.mxu0 0.0
        %5225 = vmatprep.subr.mxu0 0.0
        %5226 = vmatpush1.xpose.msra.mxu0 0.0
        %5227 = vmatprep.subr.mxu0 0.0
        %5228 = vmatpush1.xpose.msra.mxu0 0.0
        %5229 = vmatprep.subr.mxu0 0.0
        %5230 = vmatpush1.xpose.msra.mxu0 0.0
        %5231 = vmatprep.subr.mxu0 0.0
        %5232 = vmatpush1.xpose.msra.mxu0 0.0
        %5233 = vmatprep.subr.mxu0 0.0
        %5234 = vmatpush1.xpose.msra.mxu0 0.0
        %5235 = vmatprep.subr.mxu0 0.0
        %5236 = vmatpush1.xpose.msra.mxu0 0.0
        %5237 = vmatprep.subr.mxu0 0.0
        %5238 = vmatpush1.xpose.msra.mxu0 0.0
        %5239 = vmatprep.subr.mxu0 0.0
        %5240 = vmatpush1.xpose.msra.mxu0 0.0
        %5241 = vmatprep.subr.mxu0 0.0
        %5242 = vmatpush1.xpose.msra.mxu0 0.0
        %5243 = vmatprep.subr.mxu0 0.0
        %5244 = vmatpush1.xpose.msra.mxu0 0.0
        %5245 = vmatprep.subr.mxu0 0.0
        %5246 = vmatpush1.xpose.msra.mxu0 0.0
        %5247 = vmatprep.subr.mxu0 0.0
        %5248 = vmatpush1.xpose.msra.mxu0 0.0
        %5249 = vmatprep.subr.mxu0 0.0
        %5250 = vmatpush1.xpose.msra.mxu0 0.0
        %5251 = vmatprep.subr.mxu0 0.0
        %5252 = vmatpush1.xpose.msra.mxu0 0.0
        %5253 = vmatprep.subr.mxu0 0.0
        %5254 = vmatpush1.xpose.msra.mxu0 0.0
        %5255 = vmatprep.subr.mxu0 0.0
        %5256 = vmatpush1.xpose.msra.mxu0 0.0
        %5257 = vmatprep.subr.mxu0 0.0
        %5258 = vmatpush1.xpose.msra.mxu0 0.0
        %5259 = vmatprep.subr.mxu0 0.0
        %5260 = vmatpush1.xpose.msra.mxu0 0.0
        %5261 = vmatprep.subr.mxu0 0.0
        %5262 = vmatpush1.xpose.msra.mxu0 0.0
        %5263 = vmatprep.subr.mxu0 0.0
        %5264 = vmatpush1.xpose.msra.mxu0 0.0
        %5265 = vmatprep.subr.mxu0 0.0
        %5266 = vmatpush1.xpose.msra.mxu0 0.0
        %5267 = vmatprep.subr.mxu0 0.0
        %5268 = vmatpush1.xpose.msra.mxu0 0.0
        %5269 = vmatprep.subr.mxu0 0.0
        %5270 = vmatpush1.xpose.msra.mxu0 0.0
        %5271 = vmatprep.mubr.f32.mxu0 0.0
        %5272 = vmatmul.mubr.f32.gmra.mrb[0].mxu0 %v5189
        %v5273 = vpop.f32.mrb[0].mxu0
        %v5274 = vadd.f32 0.0, %v5273
        %v5275 = vpop.f32.mrb[0].mxu0
        %5276 = vdwg.mxu0
        %v5277 = vsel %vm5017, %v5274, -inf
        %5278 = vmax.xlane.f32.xlu0 %v5277
        %v5279 = vpop.xlane.xlu0 %5278
        %v5280 = vsub.f32 %v5274, %v5279
        %v5281 = vmul.f32 %v5280, 1.442695
        %v5282 = vpow.pop %v5281
        %v5284 = vsel %vm5017, %v5282, 0
        %5286 = vmatprep.subr.mxu0 0.0
        %5287 = vmatpush1.msra.mxu0 %v480
        %5288 = vmatprep.subr.mxu0 0.0
        %5289 = vmatpush1.msra.mxu0 %v481
        %5290 = vmatprep.subr.mxu0 0.0
        %5291 = vmatpush1.msra.mxu0 %v482
        %5292 = vmatprep.subr.mxu0 0.0
        %5293 = vmatpush1.msra.mxu0 %v483
        %5294 = vmatprep.subr.mxu0 0.0
        %5295 = vmatpush1.msra.mxu0 %v484
        %5296 = vmatprep.subr.mxu0 0.0
        %5297 = vmatpush1.msra.mxu0 %v485
        %5298 = vmatprep.subr.mxu0 0.0
        %5299 = vmatpush1.msra.mxu0 %v486
        %5300 = vmatprep.subr.mxu0 0.0
        %5301 = vmatpush1.msra.mxu0 %v487
        %5302 = vmatprep.subr.mxu0 0.0
        %5303 = vmatpush1.msra.mxu0 0.0
        %5304 = vmatprep.subr.mxu0 0.0
        %5305 = vmatpush1.msra.mxu0 0.0
        %5306 = vmatprep.subr.mxu0 0.0
        %5307 = vmatpush1.msra.mxu0 0.0
        %5308 = vmatprep.subr.mxu0 0.0
        %5309 = vmatpush1.msra.mxu0 0.0
        %5310 = vmatprep.subr.mxu0 0.0
        %5311 = vmatpush1.msra.mxu0 0.0
        %5312 = vmatprep.subr.mxu0 0.0
        %5313 = vmatpush1.msra.mxu0 0.0
        %5314 = vmatprep.subr.mxu0 0.0
        %5315 = vmatpush1.msra.mxu0 0.0
        %5316 = vmatprep.subr.mxu0 0.0
        %5317 = vmatpush1.msra.mxu0 0.0
        %5318 = vmatprep.subr.mxu0 0.0
        %5319 = vmatpush1.msra.mxu0 0.0
        %5320 = vmatprep.subr.mxu0 0.0
        %5321 = vmatpush1.msra.mxu0 0.0
        %5322 = vmatprep.subr.mxu0 0.0
        %5323 = vmatpush1.msra.mxu0 0.0
        %5324 = vmatprep.subr.mxu0 0.0
        %5325 = vmatpush1.msra.mxu0 0.0
        %5326 = vmatprep.subr.mxu0 0.0
        %5327 = vmatpush1.msra.mxu0 0.0
        %5328 = vmatprep.subr.mxu0 0.0
        %5329 = vmatpush1.msra.mxu0 0.0
        %5330 = vmatprep.subr.mxu0 0.0
        %5331 = vmatpush1.msra.mxu0 0.0
        %5332 = vmatprep.subr.mxu0 0.0
        %5333 = vmatpush1.msra.mxu0 0.0
        %5334 = vmatprep.subr.mxu0 0.0
        %5335 = vmatpush1.msra.mxu0 0.0
        %5336 = vmatprep.subr.mxu0 0.0
        %5337 = vmatpush1.msra.mxu0 0.0
        %5338 = vmatprep.subr.mxu0 0.0
        %5339 = vmatpush1.msra.mxu0 0.0
        %5340 = vmatprep.subr.mxu0 0.0
        %5341 = vmatpush1.msra.mxu0 0.0
        %5342 = vmatprep.subr.mxu0 0.0
        %5343 = vmatpush1.msra.mxu0 0.0
        %5344 = vmatprep.subr.mxu0 0.0
        %5345 = vmatpush1.msra.mxu0 0.0
        %5346 = vmatprep.subr.mxu0 0.0
        %5347 = vmatpush1.msra.mxu0 0.0
        %5348 = vmatprep.subr.mxu0 0.0
        %5349 = vmatpush1.msra.mxu0 0.0
        %5350 = vmatprep.mubr.f32.mxu0 0.0
        %5351 = vmatmul.mubr.f32.gmra.mrb[0].mxu0 %v5284
        %v5352 = vpop.f32.mrb[0].mxu0
        %v5353 = vadd.f32 0.0, %v5352
        %v5354 = vpop.f32.mrb[0].mxu0
        %5355 = vdwg.mxu0
        %v5356 = vrcp.pop %v5353
        %v5357 = vmul.f32 %v5282, %v5356
        %5366 = vrot.lane.b32.xlu0 %v5156, 64
        %v5367 = vpop.permute.xlu0 %5366
        %5368 = vrot.lane.b32.xlu0 %v5157, 64
        %v5369 = vpop.permute.xlu0 %5368
        %5370 = vrot.lane.b32.xlu0 %v5158, 64
        %v5371 = vpop.permute.xlu0 %5370
        %5372 = vrot.lane.b32.xlu0 %v5159, 64
        %v5373 = vpop.permute.xlu0 %5372
        %5374 = vrot.lane.b32.xlu0 %v5160, 64
        %v5375 = vpop.permute.xlu0 %5374
        %5376 = vrot.lane.b32.xlu0 %v5161, 64
        %v5377 = vpop.permute.xlu0 %5376
        %5378 = vrot.lane.b32.xlu0 %v5162, 64
        %v5379 = vpop.permute.xlu0 %5378
        %5380 = vrot.lane.b32.xlu0 %v5163, 64
        %v5381 = vpop.permute.xlu0 %5380
        %v5391 = vsel %vm5017, %v5357, 0
        %5393 = vmatprep.subr.mxu0 0.0
        %5394 = vmatpush1.msra.mxu0 %v5367
        %5395 = vmatprep.subr.mxu0 0.0
        %5396 = vmatpush1.msra.mxu0 %v5369
        %5397 = vmatprep.subr.mxu0 0.0
        %5398 = vmatpush1.msra.mxu0 %v5371
        %5399 = vmatprep.subr.mxu0 0.0
        %5400 = vmatpush1.msra.mxu0 %v5373
        %5401 = vmatprep.subr.mxu0 0.0
        %5402 = vmatpush1.msra.mxu0 %v5375
        %5403 = vmatprep.subr.mxu0 0.0
        %5404 = vmatpush1.msra.mxu0 %v5377
        %5405 = vmatprep.subr.mxu0 0.0
        %5406 = vmatpush1.msra.mxu0 %v5379
        %5407 = vmatprep.subr.mxu0 0.0
        %5408 = vmatpush1.msra.mxu0 %v5381
        %5409 = vmatprep.subr.mxu0 0.0
        %5410 = vmatpush1.msra.mxu0 0.0
        %5411 = vmatprep.subr.mxu0 0.0
        %5412 = vmatpush1.msra.mxu0 0.0
        %5413 = vmatprep.subr.mxu0 0.0
        %5414 = vmatpush1.msra.mxu0 0.0
        %5415 = vmatprep.subr.mxu0 0.0
        %5416 = vmatpush1.msra.mxu0 0.0
        %5417 = vmatprep.subr.mxu0 0.0
        %5418 = vmatpush1.msra.mxu0 0.0
        %5419 = vmatprep.subr.mxu0 0.0
        %5420 = vmatpush1.msra.mxu0 0.0
        %5421 = vmatprep.subr.mxu0 0.0
        %5422 = vmatpush1.msra.mxu0 0.0
        %5423 = vmatprep.subr.mxu0 0.0
        %5424 = vmatpush1.msra.mxu0 0.0
        %5425 = vmatprep.subr.mxu0 0.0
        %5426 = vmatpush1.msra.mxu0 0.0
        %5427 = vmatprep.subr.mxu0 0.0
        %5428 = vmatpush1.msra.mxu0 0.0
        %5429 = vmatprep.subr.mxu0 0.0
        %5430 = vmatpush1.msra.mxu0 0.0
        %5431 = vmatprep.subr.mxu0 0.0
        %5432 = vmatpush1.msra.mxu0 0.0
        %5433 = vmatprep.subr.mxu0 0.0
        %5434 = vmatpush1.msra.mxu0 0.0
        %5435 = vmatprep.subr.mxu0 0.0
        %5436 = vmatpush1.msra.mxu0 0.0
        %5437 = vmatprep.subr.mxu0 0.0
        %5438 = vmatpush1.msra.mxu0 0.0
        %5439 = vmatprep.subr.mxu0 0.0
        %5440 = vmatpush1.msra.mxu0 0.0
        %5441 = vmatprep.subr.mxu0 0.0
        %5442 = vmatpush1.msra.mxu0 0.0
        %5443 = vmatprep.subr.mxu0 0.0
        %5444 = vmatpush1.msra.mxu0 0.0
        %5445 = vmatprep.subr.mxu0 0.0
        %5446 = vmatpush1.msra.mxu0 0.0
        %5447 = vmatprep.subr.mxu0 0.0
        %5448 = vmatpush1.msra.mxu0 0.0
        %5449 = vmatprep.subr.mxu0 0.0
        %5450 = vmatpush1.msra.mxu0 0.0
        %5451 = vmatprep.subr.mxu0 0.0
        %5452 = vmatpush1.msra.mxu0 0.0
        %5453 = vmatprep.subr.mxu0 0.0
        %5454 = vmatpush1.msra.mxu0 0.0
        %5455 = vmatprep.subr.mxu0 0.0
        %5456 = vmatpush1.msra.mxu0 0.0
        %5457 = vmatprep.mubr.f32.mxu0 0.0
        %5458 = vmatmul.mubr.f32.gmra.mrb[0].mxu0 %v5391
        %v5459 = vpop.f32.mrb[0].mxu0
        %v5460 = vadd.f32 0.0, %v5459
        %v5461 = vpop.f32.mrb[0].mxu0
        %5462 = vdwg.mxu0
        %v5463 = vlaneseq
        %v5464 = vshrl.u32 %v5463, 7
        %v5465 = vsub.s32 0, %v5464
        %v5466 = vrot.slane %v398, %v5465
        %v5468 = vsel %vm527, %v5460, 0
        %5470 = vmatprep.subr.mxu0 0.0
        %5471 = vmatpush1.msra.mxu0 %v377
        %5472 = vmatprep.subr.mxu0 0.0
        %5473 = vmatpush1.msra.mxu0 %v378
        %5474 = vmatprep.subr.mxu0 0.0
        %5475 = vmatpush1.msra.mxu0 %v379
        %5476 = vmatprep.subr.mxu0 0.0
        %5477 = vmatpush1.msra.mxu0 %v380
        %5478 = vmatprep.subr.mxu0 0.0
        %5479 = vmatpush1.msra.mxu0 0.0
        %5480 = vmatprep.subr.mxu0 0.0
        %5481 = vmatpush1.msra.mxu0 0.0
        %5482 = vmatprep.subr.mxu0 0.0
        %5483 = vmatpush1.msra.mxu0 0.0
        %5484 = vmatprep.subr.mxu0 0.0
        %5485 = vmatpush1.msra.mxu0 0.0
        %5486 = vmatprep.subr.mxu0 0.0
        %5487 = vmatpush1.msra.mxu0 0.0
        %5488 = vmatprep.subr.mxu0 0.0
        %5489 = vmatpush1.msra.mxu0 0.0
        %5490 = vmatprep.subr.mxu0 0.0
        %5491 = vmatpush1.msra.mxu0 0.0
        %5492 = vmatprep.subr.mxu0 0.0
        %5493 = vmatpush1.msra.mxu0 0.0
        %5494 = vmatprep.subr.mxu0 0.0
        %5495 = vmatpush1.msra.mxu0 0.0
        %5496 = vmatprep.subr.mxu0 0.0
        %5497 = vmatpush1.msra.mxu0 0.0
        %5498 = vmatprep.subr.mxu0 0.0
        %5499 = vmatpush1.msra.mxu0 0.0
        %5500 = vmatprep.subr.mxu0 0.0
        %5501 = vmatpush1.msra.mxu0 0.0
        %5502 = vmatprep.subr.mxu0 0.0
        %5503 = vmatpush1.msra.mxu0 0.0
        %5504 = vmatprep.subr.mxu0 0.0
        %5505 = vmatpush1.msra.mxu0 0.0
        %5506 = vmatprep.subr.mxu0 0.0
        %5507 = vmatpush1.msra.mxu0 0.0
        %5508 = vmatprep.subr.mxu0 0.0
        %5509 = vmatpush1.msra.mxu0 0.0
        %5510 = vmatprep.subr.mxu0 0.0
        %5511 = vmatpush1.msra.mxu0 0.0
        %5512 = vmatprep.subr.mxu0 0.0
        %5513 = vmatpush1.msra.mxu0 0.0
        %5514 = vmatprep.subr.mxu0 0.0
        %5515 = vmatpush1.msra.mxu0 0.0
        %5516 = vmatprep.subr.mxu0 0.0
        %5517 = vmatpush1.msra.mxu0 0.0
        %5518 = vmatprep.subr.mxu0 0.0
        %5519 = vmatpush1.msra.mxu0 0.0
        %5520 = vmatprep.subr.mxu0 0.0
        %5521 = vmatpush1.msra.mxu0 0.0
        %5522 = vmatprep.subr.mxu0 0.0
        %5523 = vmatpush1.msra.mxu0 0.0
        %5524 = vmatprep.subr.mxu0 0.0
        %5525 = vmatpush1.msra.mxu0 0.0
        %5526 = vmatprep.subr.mxu0 0.0
        %5527 = vmatpush1.msra.mxu0 0.0
        %5528 = vmatprep.subr.mxu0 0.0
        %5529 = vmatpush1.msra.mxu0 0.0
        %5530 = vmatprep.subr.mxu0 0.0
        %5531 = vmatpush1.msra.mxu0 0.0
        %5532 = vmatprep.subr.mxu0 0.0
        %5533 = vmatpush1.msra.mxu0 0.0
        %5534 = vmatprep.mubr.f32.mxu0 0.0
        %5535 = vmatmul.mubr.f32.gmra.mrb[0].mxu0 %v5468
        %v5536 = vpop.f32.mrb[0].mxu0
        %v5537 = vadd.f32 %v5466, %v5536
        %v5538 = vpop.f32.mrb[0].mxu0
        %5539 = vdwg.mxu0
        %v5540 = vadd.f32 %v5011, %v5537
        %v5541 = vsel %vm527, %v5540, 0.0
        %5542 = vadd.xlane.f32.xlu0 %v5541
        %v5543 = vpop.xlane.xlu0 %5542
        %v5544 = vmul.f32 %v5543, %v4991
        %v5545 = vsub.f32 %v5540, %v5544
        %v5546 = vmul.f32 %v5545, %v5545
        %v5547 = vsel %vm527, %v5546, 0.0
        %5548 = vadd.xlane.f32.xlu0 %v5547
        %v5549 = vpop.xlane.xlu0 %5548
        %v5550 = vmul.f32 %v5549, %v4991
        %v5551 = vadd.f32 %v5550, 1e-05
        %v5552 = vrsqrt.pop %v5551
        %v5553 = vmul.f32 %v5545, %v5552
        %v5554 = vlaneseq
        %v5555 = vshrl.u32 %v5554, 7
        %v5556 = vsub.s32 0, %v5555
        %v5557 = vrot.slane %v399, %v5556
        %v5558 = vmul.f32 %v5553, %v5557
        %v5559 = vlaneseq
        %v5560 = vshrl.u32 %v5559, 7
        %v5561 = vsub.s32 0, %v5560
        %v5562 = vrot.slane %v400, %v5561
        %v5563 = vadd.f32 %v5558, %v5562
        %v5564 = vlaneseq
        %v5565 = vshrl.u32 %v5564, 7
        %v5566 = vsub.s32 0, %v5565
        %v5567 = vrot.slane %v401, %v5566
        %v5569 = vsel %vm527, %v5563, 0
        %5571 = vmatprep.subr.mxu0 0.0
        %5572 = vmatpush1.msra.mxu0 %v381
        %5573 = vmatprep.subr.mxu0 0.0
        %5574 = vmatpush1.msra.mxu0 %v382
        %5575 = vmatprep.subr.mxu0 0.0
        %5576 = vmatpush1.msra.mxu0 %v383
        %5577 = vmatprep.subr.mxu0 0.0
        %5578 = vmatpush1.msra.mxu0 %v384
        %5579 = vmatprep.subr.mxu0 0.0
        %5580 = vmatpush1.msra.mxu0 0.0
        %5581 = vmatprep.subr.mxu0 0.0
        %5582 = vmatpush1.msra.mxu0 0.0
        %5583 = vmatprep.subr.mxu0 0.0
        %5584 = vmatpush1.msra.mxu0 0.0
        %5585 = vmatprep.subr.mxu0 0.0
        %5586 = vmatpush1.msra.mxu0 0.0
        %5587 = vmatprep.subr.mxu0 0.0
        %5588 = vmatpush1.msra.mxu0 0.0
        %5589 = vmatprep.subr.mxu0 0.0
        %5590 = vmatpush1.msra.mxu0 0.0
        %5591 = vmatprep.subr.mxu0 0.0
        %5592 = vmatpush1.msra.mxu0 0.0
        %5593 = vmatprep.subr.mxu0 0.0
        %5594 = vmatpush1.msra.mxu0 0.0
        %5595 = vmatprep.subr.mxu0 0.0
        %5596 = vmatpush1.msra.mxu0 0.0
        %5597 = vmatprep.subr.mxu0 0.0
        %5598 = vmatpush1.msra.mxu0 0.0
        %5599 = vmatprep.subr.mxu0 0.0
        %5600 = vmatpush1.msra.mxu0 0.0
        %5601 = vmatprep.subr.mxu0 0.0
        %5602 = vmatpush1.msra.mxu0 0.0
        %5603 = vmatprep.subr.mxu0 0.0
        %5604 = vmatpush1.msra.mxu0 0.0
        %5605 = vmatprep.subr.mxu0 0.0
        %5606 = vmatpush1.msra.mxu0 0.0
        %5607 = vmatprep.subr.mxu0 0.0
        %5608 = vmatpush1.msra.mxu0 0.0
        %5609 = vmatprep.subr.mxu0 0.0
        %5610 = vmatpush1.msra.mxu0 0.0
        %5611 = vmatprep.subr.mxu0 0.0
        %5612 = vmatpush1.msra.mxu0 0.0
        %5613 = vmatprep.subr.mxu0 0.0
        %5614 = vmatpush1.msra.mxu0 0.0
        %5615 = vmatprep.subr.mxu0 0.0
        %5616 = vmatpush1.msra.mxu0 0.0
        %5617 = vmatprep.subr.mxu0 0.0
        %5618 = vmatpush1.msra.mxu0 0.0
        %5619 = vmatprep.subr.mxu0 0.0
        %5620 = vmatpush1.msra.mxu0 0.0
        %5621 = vmatprep.subr.mxu0 0.0
        %5622 = vmatpush1.msra.mxu0 0.0
        %5623 = vmatprep.subr.mxu0 0.0
        %5624 = vmatpush1.msra.mxu0 0.0
        %5625 = vmatprep.subr.mxu0 0.0
        %5626 = vmatpush1.msra.mxu0 0.0
        %5627 = vmatprep.subr.mxu0 0.0
        %5628 = vmatpush1.msra.mxu0 0.0
        %5629 = vmatprep.subr.mxu0 0.0
        %5630 = vmatpush1.msra.mxu0 0.0
        %5631 = vmatprep.subr.mxu0 0.0
        %5632 = vmatpush1.msra.mxu0 0.0
        %5633 = vmatprep.subr.mxu0 0.0
        %5634 = vmatpush1.msra.mxu0 0.0
        %5635 = vmatprep.mubr.f32.mxu0 0.0
        %5636 = vmatmul.mubr.f32.gmra.mrb[0].mxu0 %v5569
        %v5637 = vpop.f32.mrb[0].mxu0
        %v5638 = vadd.f32 %v5567, %v5637
        %v5639 = vpop.f32.mrb[0].mxu0
        %5640 = vdwg.mxu0
        %v5641 = vmax.f32 %v5638, 0.0
        %v5642 = vlaneseq
        %v5643 = vshrl.u32 %v5642, 7
        %v5644 = vsub.s32 0, %v5643
        %v5645 = vrot.slane %v402, %v5644
        %v5647 = vsel %vm5017, %v5641, 0
        %5649 = vmatprep.subr.mxu0 0.0
        %5650 = vmatpush1.msra.mxu0 %v385
        %5651 = vmatprep.subr.mxu0 0.0
        %5652 = vmatpush1.msra.mxu0 %v386
        %5653 = vmatprep.subr.mxu0 0.0
        %5654 = vmatpush1.msra.mxu0 %v387
        %5655 = vmatprep.subr.mxu0 0.0
        %5656 = vmatpush1.msra.mxu0 %v388
        %5657 = vmatprep.subr.mxu0 0.0
        %5658 = vmatpush1.msra.mxu0 %v389
        %5659 = vmatprep.subr.mxu0 0.0
        %5660 = vmatpush1.msra.mxu0 %v390
        %5661 = vmatprep.subr.mxu0 0.0
        %5662 = vmatpush1.msra.mxu0 %v391
        %5663 = vmatprep.subr.mxu0 0.0
        %5664 = vmatpush1.msra.mxu0 %v392
        %5665 = vmatprep.subr.mxu0 0.0
        %5666 = vmatpush1.msra.mxu0 0.0
        %5667 = vmatprep.subr.mxu0 0.0
        %5668 = vmatpush1.msra.mxu0 0.0
        %5669 = vmatprep.subr.mxu0 0.0
        %5670 = vmatpush1.msra.mxu0 0.0
        %5671 = vmatprep.subr.mxu0 0.0
        %5672 = vmatpush1.msra.mxu0 0.0
        %5673 = vmatprep.subr.mxu0 0.0
        %5674 = vmatpush1.msra.mxu0 0.0
        %5675 = vmatprep.subr.mxu0 0.0
        %5676 = vmatpush1.msra.mxu0 0.0
        %5677 = vmatprep.subr.mxu0 0.0
        %5678 = vmatpush1.msra.mxu0 0.0
        %5679 = vmatprep.subr.mxu0 0.0
        %5680 = vmatpush1.msra.mxu0 0.0
        %5681 = vmatprep.subr.mxu0 0.0
        %5682 = vmatpush1.msra.mxu0 0.0
        %5683 = vmatprep.subr.mxu0 0.0
        %5684 = vmatpush1.msra.mxu0 0.0
        %5685 = vmatprep.subr.mxu0 0.0
        %5686 = vmatpush1.msra.mxu0 0.0
        %5687 = vmatprep.subr.mxu0 0.0
        %5688 = vmatpush1.msra.mxu0 0.0
        %5689 = vmatprep.subr.mxu0 0.0
        %5690 = vmatpush1.msra.mxu0 0.0
        %5691 = vmatprep.subr.mxu0 0.0
        %5692 = vmatpush1.msra.mxu0 0.0
        %5693 = vmatprep.subr.mxu0 0.0
        %5694 = vmatpush1.msra.mxu0 0.0
        %5695 = vmatprep.subr.mxu0 0.0
        %5696 = vmatpush1.msra.mxu0 0.0
        %5697 = vmatprep.subr.mxu0 0.0
        %5698 = vmatpush1.msra.mxu0 0.0
        %5699 = vmatprep.subr.mxu0 0.0
        %5700 = vmatpush1.msra.mxu0 0.0
        %5701 = vmatprep.subr.mxu0 0.0
        %5702 = vmatpush1.msra.mxu0 0.0
        %5703 = vmatprep.subr.mxu0 0.0
        %5704 = vmatpush1.msra.mxu0 0.0
        %5705 = vmatprep.subr.mxu0 0.0
        %5706 = vmatpush1.msra.mxu0 0.0
        %5707 = vmatprep.subr.mxu0 0.0
        %5708 = vmatpush1.msra.mxu0 0.0
        %5709 = vmatprep.subr.mxu0 0.0
        %5710 = vmatpush1.msra.mxu0 0.0
        %5711 = vmatprep.subr.mxu0 0.0
        %5712 = vmatpush1.msra.mxu0 0.0
        %5713 = vmatprep.mubr.f32.mxu0 0.0
        %5714 = vmatmul.mubr.f32.gmra.mrb[0].mxu0 %v5647
        %v5715 = vpop.f32.mrb[0].mxu0
        %v5716 = vadd.f32 %v5645, %v5715
        %v5717 = vpop.f32.mrb[0].mxu0
        %5718 = vdwg.mxu0
        %v5719 = vadd.f32 %v5563, %v5716
        %v5720 = vsel %vm527, %v5719, 0.0
        %5721 = vadd.xlane.f32.xlu0 %v5720
        %v5722 = vpop.xlane.xlu0 %5721
        %v5723 = vmul.f32 %v5722, %v4991
        %v5724 = vsub.f32 %v5719, %v5723
        %v5725 = vmul.f32 %v5724, %v5724
        %v5726 = vsel %vm527, %v5725, 0.0
        %5727 = vadd.xlane.f32.xlu0 %v5726
        %v5728 = vpop.xlane.xlu0 %5727
        %v5729 = vmul.f32 %v5728, %v4991
        %v5730 = vadd.f32 %v5729, 1e-05
        %v5731 = vrsqrt.pop %v5730
        %v5732 = vmul.f32 %v5724, %v5731
        %v5733 = vlaneseq
        %v5734 = vshrl.u32 %v5733, 7
        %v5735 = vsub.s32 0, %v5734
        %v5736 = vrot.slane %v403, %v5735
        %v5737 = vmul.f32 %v5732, %v5736
        %v5738 = vlaneseq
        %v5739 = vshrl.u32 %v5738, 7
        %v5740 = vsub.s32 0, %v5739
        %v5741 = vrot.slane %v404, %v5740
        %v5742 = vadd.f32 %v5737, %v5741
        %5743 = vst.msk [vmem:[%s344] sm:$0xff] %vm527, %v5742
        %s5744 = sand.u32 %s193, 1
        %s5745 = scalar_lea.sflag [#allocation4], %s5744
        %s5746 = sand.u32 %s193, 1
        %s5747 = smul.addr %s5746, 8
        %s5748 = scalar_lea.vmem [#allocation8], %s5747
        // Predicated region
        $region61: #{tpu_custom_call.1} parent=47 // pred_check
          %p5749 = pneg %p203
        $region62: #{tpu_custom_call.1} parent=47 // pred_check_branch
          %5751 = sbr.rel (%p5749) target = $region64
        $region63: #{tpu_custom_call.1} parent=47 // pred_region
          %s5753 = ssub.s32 128, 128
          %5754 = vsyncadd %s5745, %s5753
          %s5755 = smul.addr %s23, 128
          %s5756 = scalar_lea.hbm %s7, %s5755
          %s5758 = sshll.u32 %s5748, 4
          %s5759 = int_to_ptr.vmem [resolvable:$true] %s5758
          %5761 = dma.vmem_to_hbm [thread:$0]  %s5759, 128, %s5756, %s5745
        $region64: #{tpu_custom_call.1} parent=47 // pred_fallthru
          _
      $region48: #{tpu_custom_call.1} parent=5 // pred_fallthru
        _
      %p5762 = scmp.le.s32.totalorder 2, %s18
      // Predicated region
      $region65: #{tpu_custom_call.1} parent=5 // pred_check
        %p5763 = pneg %p5762
      $region66: #{tpu_custom_call.1} parent=5 // pred_check_branch
        %5765 = sbr.rel (%p5763) target = $region68
      $region67: #{tpu_custom_call.1} parent=5 // pred_region
        %s5766 = ssub.s32 %s18, 2
        // Predicated region
        $region69: #{tpu_custom_call.1} parent=67 // pred_check
          %p5767 = pneg %p209
        $region70: #{tpu_custom_call.1} parent=67 // pred_check_branch
          %5769 = sbr.rel (%p5767) target = $region72
        $region71: #{tpu_custom_call.1} parent=67 // pred_region
          %s5770 = sand.u32 %s194, 1
          %s5771 = scalar_lea.sflag [#allocation4], %s5770
          %s5772 = sand.u32 %s194, 1
          %s5773 = smul.addr %s5772, 8
          %s5774 = scalar_lea.vmem [#allocation8], %s5773
          %5775 = dma.done %s5771, 128
        $region72: #{tpu_custom_call.1} parent=67 // pred_fallthru
          _
      $region68: #{tpu_custom_call.1} parent=5 // pred_fallthru
        _
    $region6: #{tpu_custom_call.1} parent=1 // loop_footer
      %s22 = sadd.s32 1, %s18
    $region7: #{tpu_custom_call.1} parent=1 // loop_footer_branch
      %17 = sbr.rel target = $region3
    $region8: #{tpu_custom_call.1} parent=1 // loop_exit
      _
    %5776 = vsyncpa [#allocation3], 1
    %s5777 = scalar_lea.sflag [#allocation3], 1
    %5778 = vsyncpa %s5777, 1
    %5779 = vsyncpa [#allocation6], 1
    %5780 = vsyncpa [#allocation4], 1
    %s5781 = scalar_lea.sflag [#allocation4], 1
    %5782 = vsyncpa %s5781, 1

</llo_original>
